<compile_context>
chip_gen: v7x
topology: tpu7x:2x2x1
jax: 0.10.0
libtpu: 0.0.40
codegen_flags: <defaults>
</compile_context>

<pallas_src>
import functools

import jax
import jax.numpy as jnp
from jax import lax
from jax.experimental import pallas as pl
from jax.experimental.pallas import tpu as pltpu

IGNORE_INDEX = -100
RMS_EPS = 1e-6
NEG_INF = -1e30
LANE = 128


def _round_up(x, m):
    return (x + m - 1) // m * m


# ----------------------------------------------------------------------------
# Fused Pallas kernel: input_proj -> n_layers x (RMSNorm + RoPE causal attn
# + SwiGLU MLP) -> output_proj + log_softmax, one batch row per grid step.
# ----------------------------------------------------------------------------
def _fused_ctc_decoder_kernel(
        # scalar prefetch
        seq_lens_ref,                     # SMEM (B,) int32
        # inputs
        hid_ref,                          # (1, T, H)  f32
        in_w_ref, in_b_ref,               # (H, D) bf16, (1, D) f32
        cs_ref,                           # (2, T, D) f32: [cos; sin], head-tiled
        ln_ref,                           # (L, 2, D) f32: [ln1; ln2]
        wqkv_ref,                         # (L, D, 5D) bf16: [Wq|Wq_rot|Wk|Wk_rot|Wv]
        wo_ref,                           # (L, D, D)  bf16
        wgu_ref,                          # (L, D, 2I) bf16: [Wgate|Wup]
        wd_ref,                           # (L, I, D)  bf16
        out_w_ref, out_b_ref,             # (D, Vp) bf16, (1, Vp) f32
        # output
        o_ref,                            # (1, T, Vp) f32
        *, n_heads, head_dim, n_layers, eps):
    b = pl.program_id(0)
    T = hid_ref.shape[1]
    D = in_w_ref.shape[1]
    I = wd_ref.shape[1]
    hd = head_dim

    # ---- input projection ----
    x = (jnp.dot(hid_ref[0].astype(jnp.bfloat16), in_w_ref[...],
                 preferred_element_type=jnp.float32)
         + in_b_ref[...])                                        # (T, D) f32

    # ---- additive causal + key-padding bias, built ONCE, reused per layer ----
    seq_len = seq_lens_ref[b]
    row = lax.broadcasted_iota(jnp.int32, (T, T), 0)
    col = lax.broadcasted_iota(jnp.int32, (T, T), 1)
    bias = jnp.where((col <= row) & (col < seq_len),
                     jnp.float32(0.0), jnp.float32(NEG_INF))     # (T, T)

    cos = cs_ref[0]                                              # (T, D)
    sin = cs_ref[1]

    def layer_body(l, x):
        lw = ln_ref[l]                                           # (2, D)

        # ---- attention block (pre-RMSNorm) ----
        var = jnp.mean(x * x, axis=-1, keepdims=True)
        xn = (x * lax.rsqrt(var + eps) * lw[0:1, :]).astype(jnp.bfloat16)

        # one fused (T, D) x (D, 5D) MXU matmul for q/q_rot/k/k_rot/v
        qkv = jnp.dot(xn, wqkv_ref[l],
                      preferred_element_type=jnp.float32)        # (T, 5D)
        # lane-dense RoPE: rotate_half is pre-baked into the *_rot columns,
        # so this is two full-width mul-adds (1/sqrt(hd) folded into Wq).
        q = (qkv[:, 0 * D:1 * D] * cos
             + qkv[:, 1 * D:2 * D] * sin).astype(jnp.bfloat16)   # (T, D)
        k = (qkv[:, 2 * D:3 * D] * cos
             + qkv[:, 3 * D:4 * D] * sin).astype(jnp.bfloat16)
        v = qkv[:, 4 * D:5 * D].astype(jnp.bfloat16)

        # per-head scores (heads are lane-contiguous hd-wide slices; the
        # score/PV contraction is inherently per head).
        # TODO(synk): for long T (upsampled speech) switch to key-block tiling
        # with online softmax instead of materializing (h, T, T) scores.
        s = jnp.stack(
            [lax.dot_general(q[:, h * hd:(h + 1) * hd],
                             k[:, h * hd:(h + 1) * hd],
                             (((1,), (1,)), ((), ())),
                             preferred_element_type=jnp.float32)
             for h in range(n_heads)], axis=0)                   # (h, T, T)
        s = s + bias[None, :, :]
        m = jnp.max(s, axis=-1, keepdims=True)
        p = jnp.exp(s - m)
        p = p / jnp.sum(p, axis=-1, keepdims=True)               # exact softmax
        p = p.astype(jnp.bfloat16)

        # PV per head, concat heads along lanes, single (T,D)x(D,D) Wo matmul
        attn = jnp.concatenate(
            [jnp.dot(p[h], v[:, h * hd:(h + 1) * hd],
                     preferred_element_type=jnp.float32)
             for h in range(n_heads)], axis=-1)                  # (T, D)
        h1 = x + jnp.dot(attn.astype(jnp.bfloat16), wo_ref[l],
                         preferred_element_type=jnp.float32)

        # ---- MLP block (pre-RMSNorm, SwiGLU) with fused gate+up matmul ----
        var2 = jnp.mean(h1 * h1, axis=-1, keepdims=True)
        xn2 = (h1 * lax.rsqrt(var2 + eps) * lw[1:2, :]).astype(jnp.bfloat16)
        gu = jnp.dot(xn2, wgu_ref[l],
                     preferred_element_type=jnp.float32)         # (T, 2I)
        g = gu[:, :I]
        u = gu[:, I:]
        act = (g * jax.nn.sigmoid(g) * u).astype(jnp.bfloat16)   # SiLU(g) * u
        return h1 + jnp.dot(act, wd_ref[l],
                            preferred_element_type=jnp.float32)

    x = lax.fori_loop(0, n_layers, layer_body, x, unroll=True)

    # ---- output projection + log_softmax (vocab lane-padded to Vp) ----
    logits = (jnp.dot(x.astype(jnp.bfloat16), out_w_ref[...],
                      preferred_element_type=jnp.float32)
              + out_b_ref[...])            # pad columns carry a -1e30 bias
    mx = jnp.max(logits, axis=-1, keepdims=True)
    lse = jnp.log(jnp.sum(jnp.exp(logits - mx), axis=-1, keepdims=True)) + mx
    o_ref[0] = logits - lse


def fused_ctc_decoder(hidden, seq_lens, cos_sin, pp, *, n_heads, n_layers):
    B, T, H = hidden.shape
    D = pp["in_w"].shape[1]
    hd = D // n_heads
    I = pp["wd_s"].shape[1]
    Vp = pp["out_w"].shape[1]
    L = n_layers

    kernel = functools.partial(_fused_ctc_decoder_kernel,
                               n_heads=n_heads, head_dim=hd,
                               n_layers=n_layers, eps=RMS_EPS)

    # Weight / table streams use constant index_maps, so the pipeline fetches
    # them once and never re-issues the DMA across the batch grid axis.
    grid_spec = pltpu.PrefetchScalarGridSpec(
        num_scalar_prefetch=1,
        grid=(B,),
        in_specs=[
            pl.BlockSpec((1, T, H), lambda b, sl: (b, 0, 0)),         # hidden
            pl.BlockSpec((H, D), lambda b, sl: (0, 0)),               # in_w
            pl.BlockSpec((1, D), lambda b, sl: (0, 0)),               # in_b
            pl.BlockSpec((2, T, D), lambda b, sl: (0, 0, 0)),         # cos/sin
            pl.BlockSpec((L, 2, D), lambda b, sl: (0, 0, 0)),         # ln1/ln2
            pl.BlockSpec((L, D, 5 * D), lambda b, sl: (0, 0, 0)),     # wqkv(+rot)
            pl.BlockSpec((L, D, D), lambda b, sl: (0, 0, 0)),         # wo
            pl.BlockSpec((L, D, 2 * I), lambda b, sl: (0, 0, 0)),     # wgate|wup
            pl.BlockSpec((L, I, D), lambda b, sl: (0, 0, 0)),         # wd
            pl.BlockSpec((D, Vp), lambda b, sl: (0, 0)),              # out_w
            pl.BlockSpec((1, Vp), lambda b, sl: (0, 0)),              # out_b
        ],
        out_specs=pl.BlockSpec((1, T, Vp), lambda b, sl: (b, 0, 0)),
    )
    return pl.pallas_call(
        kernel,
        out_shape=jax.ShapeDtypeStruct((B, T, Vp), jnp.float32),
        grid_spec=grid_spec,
        compiler_params=pltpu.CompilerParams(
            dimension_semantics=("parallel",),
            # well under v7x's 64 MiB physical VMEM; plenty for v5e/v6e too
            vmem_limit_bytes=48 * 1024 * 1024),
    )(seq_lens, hidden, pp["in_w"], pp["in_b"], cos_sin,
      pp["ln_s"], pp["wqkv_s"], pp["wo_s"], pp["wgu_s"], pp["wd_s"],
      pp["out_w"], pp["out_b"])


# ----------------------------------------------------------------------------
# Parameter packing: stack layers, fuse QKV (+ pre-baked rotate-half columns),
# fuse gate+up, fold 1/sqrt(hd) into Wq, cast to bf16, pad output proj to 128.
# ----------------------------------------------------------------------------
def pack_params(params, *, n_heads, unit_vocab_size):
    D = params["in_w"].shape[1]
    hd = D // n_heads
    half = hd // 2
    V = unit_vocab_size + 1
    Vp = _round_up(V, LANE)
    scale = 1.0 / (hd ** 0.5)
    bf16 = jnp.bfloat16

    def rot_half_cols(w):
        # (D, D) -> (D, D) column-space rotate-half per head, so that
        #   x @ rot_half_cols(W) == rotate_half(x @ W)
        w4 = w.reshape(D, n_heads, 2, half)
        return jnp.stack([-w4[:, :, 1, :], w4[:, :, 0, :]], axis=2).reshape(D, D)

    ln, wqkv, wo, wgu, wd = [], [], [], [], []
    for lp in params["layers"]:
        ln.append(jnp.stack([lp["ln1"][0], lp["ln2"][0]], axis=0))    # (2, D)
        wq = lp["wq"] * scale                       # fold 1/sqrt(hd) into Wq
        wqkv.append(jnp.concatenate(
            [wq, rot_half_cols(wq), lp["wk"], rot_half_cols(lp["wk"]), lp["wv"]],
            axis=1))                                                  # (D, 5D)
        wo.append(lp["wo"])                                           # (D, D)
        wgu.append(jnp.concatenate([lp["wg"], lp["wu"]], axis=1))     # (D, 2I)
        wd.append(lp["wd"])                                           # (I, D)

    out_w = jnp.zeros((D, Vp), jnp.float32).at[:, :V].set(params["out_w"])
    out_b = jnp.full((1, Vp), NEG_INF, jnp.float32).at[:, :V].set(params["out_b"])

    return {
        "in_w": params["in_w"].astype(bf16),
        "in_b": params["in_b"].astype(jnp.float32),
        "out_w": out_w.astype(bf16),
        "out_b": out_b,
        "ln_s": jnp.stack(ln).astype(jnp.float32),    # (L, 2, D)
        "wqkv_s": jnp.stack(wqkv).astype(bf16),       # (L, D, 5D)
        "wo_s": jnp.stack(wo).astype(bf16),           # (L, D, D)
        "wgu_s": jnp.stack(wgu).astype(bf16),         # (L, D, 2I)
        "wd_s": jnp.stack(wd).astype(bf16),           # (L, I, D)
    }


# ----------------------------------------------------------------------------
# CTC loss (log-space forward DP, reduction='sum', zero_infinity=True).
# TODO(synk): CTC forward DP is a sequential per-timestep recurrence with no
# clean Pallas equivalent; kept as a plain JAX lax.scan.
# ----------------------------------------------------------------------------
def ctc_loss_sum_zero_inf(lprobs, input_lens, targets, target_lens, blank):
    B, T, C = lprobs.shape
    U = targets.shape[1]
    S = 2 * U + 1
    neg_inf = -1e30

    valid_t = jnp.arange(U)[None, :] < target_lens[:, None]
    tgts = jnp.where(valid_t, targets, blank).astype(jnp.int32)
    ext = jnp.full((B, S), blank, jnp.int32).at[:, 1::2].set(tgts)

    s_idx = jnp.arange(S)
    ext_m2 = jnp.pad(ext, ((0, 0), (2, 0)), constant_values=blank)[:, :S]
    skip_ok = (s_idx[None, :] % 2 == 1) & (s_idx[None, :] >= 2) & (ext != ext_m2)

    lp0 = jnp.take_along_axis(lprobs[:, 0, :], ext, axis=1)      # (B, S)
    alpha0 = jnp.full((B, S), neg_inf, jnp.float32)
    alpha0 = alpha0.at[:, 0].set(lp0[:, 0])
    alpha0 = alpha0.at[:, 1].set(jnp.where(target_lens > 0, lp0[:, 1], neg_inf))

    def step(alpha, lp_t):
        lp_e = jnp.take_along_axis(lp_t, ext, axis=1)
        a0 = alpha
        a1 = jnp.concatenate([jnp.full((B, 1), neg_inf), alpha[:, :-1]], axis=1)
        a2 = jnp.concatenate([jnp.full((B, 2), neg_inf), alpha[:, :-2]], axis=1)
        a2 = jnp.where(skip_ok, a2, neg_inf)
        m = jnp.maximum(jnp.maximum(a0, a1), a2)
        new = m + jnp.log(jnp.exp(a0 - m) + jnp.exp(a1 - m) + jnp.exp(a2 - m)) + lp_e
        return new, new

    lps_tbc = jnp.transpose(lprobs, (1, 0, 2))                   # (T, B, C)
    _, alphas = lax.scan(step, alpha0, lps_tbc[1:])
    alphas_all = jnp.concatenate([alpha0[None], alphas], axis=0)  # (T, B, S)

    alpha_final = alphas_all[input_lens - 1, jnp.arange(B), :]    # (B, S)
    i1 = (2 * target_lens)[:, None]
    i2 = jnp.maximum(2 * target_lens - 1, 0)[:, None]
    e1 = jnp.take_along_axis(alpha_final, i1, axis=1)[:, 0]
    e2 = jnp.take_along_axis(alpha_final, i2, axis=1)[:, 0]
    e2 = jnp.where(target_lens > 0, e2, neg_inf)                  # no double-count
    m = jnp.maximum(e1, e2)
    ll = m + jnp.log(jnp.exp(e1 - m) + jnp.exp(e2 - m))
    loss_b = jnp.where(jnp.isfinite(ll) & (ll > -1e29), -ll, 0.0)  # zero_infinity
    return jnp.sum(loss_b) / jnp.sum(target_lens).astype(jnp.float32)


# ----------------------------------------------------------------------------
# SpeechGeneratorCTC forward
# ----------------------------------------------------------------------------
def speech_generator_ctc_forward(packed, tgt_reps, labels, tgt_units, *,
                                 upsample_factor, n_heads, n_layers,
                                 unit_vocab_size):
    B, S, H = tgt_reps.shape
    D = packed["in_w"].shape[1]
    hd = D // n_heads
    T = S * upsample_factor
    # TODO(synk): T is a static upper bound; targets longer than S*upsample
    # would be clamped (the dynamic max(up_lens) cannot be a traced shape).

    # --- keep positions where label != IGNORE_INDEX, compacted to the front ---
    valid = labels != IGNORE_INDEX
    src_lens = valid.sum(-1).astype(jnp.int32)
    src_safe = jnp.maximum(src_lens, 1)                 # guard all-ignored rows
    pos = jnp.where(valid, jnp.arange(S)[None, :], S + jnp.arange(S)[None, :])
    order = jnp.argsort(pos, axis=1)
    reps = jnp.take_along_axis(tgt_reps, order[:, :, None], axis=1)
    reps = jnp.where((jnp.arange(S)[None, :] < src_lens[:, None])[:, :, None],
                     reps, 0.0)

    # --- uniform upsampling ---
    tgt_lens = (tgt_units != IGNORE_INDEX).sum(-1).astype(jnp.int32)
    up_lens = jnp.minimum(jnp.maximum(src_lens * upsample_factor, tgt_lens), T)
    t_idx = jnp.arange(T)[None, :]
    ratio = up_lens.astype(jnp.float32) / src_safe.astype(jnp.float32)
    mapped = (t_idx.astype(jnp.float32) / ratio[:, None]).astype(jnp.int32)
    pad_mask = t_idx >= up_lens[:, None]
    mapped = jnp.clip(jnp.where(pad_mask, 0, mapped), 0, S - 1)
    hidden = jnp.take_along_axis(reps, mapped[:, :, None], axis=1)
    hidden = jnp.where(pad_mask[:, :, None], 0.0, hidden).astype(jnp.float32)

    # --- head-tiled lane-dense RoPE tables, packed as (2, T, D) ---
    inv_freq = 1.0 / (10000.0 ** (jnp.arange(0, hd, 2, dtype=jnp.float32) / hd))
    freqs = jnp.arange(T, dtype=jnp.float32)[:, None] * inv_freq[None, :]
    emb = jnp.concatenate([freqs, freqs], axis=-1)                 # (T, hd)
    cos_d = jnp.tile(jnp.cos(emb), (1, n_heads))                   # (T, D)
    sin_d = jnp.tile(jnp.sin(emb), (1, n_heads))
    cos_sin = jnp.stack([cos_d, sin_d], axis=0).astype(jnp.float32)

    # --- fused Pallas decoder stack ---
    lprobs_pad = fused_ctc_decoder(hidden, up_lens, cos_sin, packed,
                                   n_heads=n_heads, n_layers=n_layers)
    C = unit_vocab_size + 1
    ctc_lprobs = lprobs_pad[:, :, :C]                   # drop lane padding

    return ctc_loss_sum_zero_inf(ctc_lprobs, up_lens, tgt_units, tgt_lens,
                                 blank=unit_vocab_size)


def init_params(key, hidden, n_dims, n_heads, n_inter, n_layers, vocab):
    scale = 0.05
    keys = jax.random.split(key, 4 + n_layers)
    p = {
        "in_w": jax.random.normal(keys[0], (hidden, n_dims), jnp.float32) * scale,
        "in_b": jax.random.normal(keys[1], (1, n_dims), jnp.float32) * scale,
        "out_w": jax.random.normal(keys[2], (n_dims, vocab + 1), jnp.float32) * scale,
        "out_b": jax.random.normal(keys[3], (1, vocab + 1), jnp.float32) * scale,
        "layers": [],
    }
    for i in range(n_layers):
        lk = jax.random.split(keys[4 + i], 7)
        p["layers"].append({
            "ln1": jnp.ones((1, n_dims), jnp.float32),
            "wq": jax.random.normal(lk[0], (n_dims, n_dims), jnp.float32) * scale,
            "wk": jax.random.normal(lk[1], (n_dims, n_dims), jnp.float32) * scale,
            "wv": jax.random.normal(lk[2], (n_dims, n_dims), jnp.float32) * scale,
            "wo": jax.random.normal(lk[3], (n_dims, n_dims), jnp.float32) * scale,
            "ln2": jnp.ones((1, n_dims), jnp.float32),
            "wg": jax.random.normal(lk[4], (n_dims, n_inter), jnp.float32) * scale,
            "wu": jax.random.normal(lk[5], (n_dims, n_inter), jnp.float32) * scale,
            "wd": jax.random.normal(lk[6], (n_inter, n_dims), jnp.float32) * scale,
        })
    return p


if __name__ == "__main__":
    # config: ctc_decoder_config="(2,64,4,128)", hidden_size=32,
    #         unit_vocab_size=31, ctc_upsample_factor=2
    B, S, HIDDEN = 2, 8, 32
    N_LAYERS, N_DIMS, N_HEADS, N_INTER = 2, 64, 4, 128
    UNIT_VOCAB = 31
    UPSAMPLE = 2
    U = 10

    key = jax.random.PRNGKey(0)
    k_reps, k_params = jax.random.split(key)

    tgt_reps = jax.random.normal(k_reps, (B, S, HIDDEN), jnp.float32)
    labels = jnp.array(
        [[1, 2, 3, 4, 5, 6, 7, 8],
         [1, 2, 3, 4, 5, 6, IGNORE_INDEX, IGNORE_INDEX]], jnp.int32)
    row0 = (jnp.arange(U) * 3) % UNIT_VOCAB
    row1 = jnp.concatenate([(jnp.arange(8) * 5 + 1) % UNIT_VOCAB,
                            jnp.full((2,), IGNORE_INDEX)])
    tgt_units = jnp.stack([row0, row1]).astype(jnp.int32)

    params = init_params(k_params, HIDDEN, N_DIMS, N_HEADS, N_INTER,
                         N_LAYERS, UNIT_VOCAB)
    packed = pack_params(params, n_heads=N_HEADS, unit_vocab_size=UNIT_VOCAB)

    loss = speech_generator_ctc_forward(
        packed, tgt_reps, labels, tgt_units,
        upsample_factor=UPSAMPLE, n_heads=N_HEADS, n_layers=N_LAYERS,
        unit_vocab_size=UNIT_VOCAB)
    loss = jax.block_until_ready(loss)
    assert jnp.isfinite(loss), f"non-finite loss: {loss}"
    print("KERNEL_OK")
</pallas_src>

<mosaic_0001>
module attributes {stable_mosaic.version = 11 : i64} {
  func.func @_fused_ctc_decoder_kernel(%arg0: i32, %arg1: memref<2xi32, #tpu.memory_space<smem>>, %arg2: memref<1x16x32xf32, #tpu.memory_space<vmem>>, %arg3: memref<32x64xbf16, #tpu.memory_space<vmem>>, %arg4: memref<1x64xf32, #tpu.memory_space<vmem>>, %arg5: memref<2x16x64xf32, #tpu.memory_space<vmem>>, %arg6: memref<2x2x64xf32, #tpu.memory_space<vmem>>, %arg7: memref<2x64x320xbf16, #tpu.memory_space<vmem>>, %arg8: memref<2x64x64xbf16, #tpu.memory_space<vmem>>, %arg9: memref<2x64x256xbf16, #tpu.memory_space<vmem>>, %arg10: memref<2x128x64xbf16, #tpu.memory_space<vmem>>, %arg11: memref<64x128xbf16, #tpu.memory_space<vmem>>, %arg12: memref<1x128xf32, #tpu.memory_space<vmem>>, %arg13: memref<1x16x128xf32, #tpu.memory_space<vmem>>) attributes {dimension_semantics = [#tpu.dimension_semantics<parallel>], iteration_bounds = array<i64: 2>, scalar_prefetch = 1 : i64, scratch_operands = 0 : i64, tpu.core_type = #tpu.core_type<tc>, window_params = [{transform_indices = @transform_0, window_bounds = array<i64: 1, 16, 32>}, {pipeline_mode = #tpu.pipeline_mode<synchronous>, transform_indices = @transform_1, window_bounds = array<i64: 32, 64>}, {pipeline_mode = #tpu.pipeline_mode<synchronous>, transform_indices = @transform_2, window_bounds = array<i64: 1, 64>}, {pipeline_mode = #tpu.pipeline_mode<synchronous>, transform_indices = @transform_3, window_bounds = array<i64: 2, 16, 64>}, {pipeline_mode = #tpu.pipeline_mode<synchronous>, transform_indices = @transform_4, window_bounds = array<i64: 2, 2, 64>}, {pipeline_mode = #tpu.pipeline_mode<synchronous>, transform_indices = @transform_5, window_bounds = array<i64: 2, 64, 320>}, {pipeline_mode = #tpu.pipeline_mode<synchronous>, transform_indices = @transform_6, window_bounds = array<i64: 2, 64, 64>}, {pipeline_mode = #tpu.pipeline_mode<synchronous>, transform_indices = @transform_7, window_bounds = array<i64: 2, 64, 256>}, {pipeline_mode = #tpu.pipeline_mode<synchronous>, transform_indices = @transform_8, window_bounds = array<i64: 2, 128, 64>}, {pipeline_mode = #tpu.pipeline_mode<synchronous>, transform_indices = @transform_9, window_bounds = array<i64: 64, 128>}, {pipeline_mode = #tpu.pipeline_mode<synchronous>, transform_indices = @transform_10, window_bounds = array<i64: 1, 128>}, {transform_indices = @transform_11, window_bounds = array<i64: 1, 16, 128>}]} {
    %c0 = arith.constant 0 : index
    %c0_0 = arith.constant 0 : index
    %c0_1 = arith.constant 0 : index
    %0 = vector.load %arg2[%c0, %c0_0, %c0_1] : memref<1x16x32xf32, #tpu.memory_space<vmem>>, vector<1x16x32xf32>
    %1 = vector.shape_cast %0 : vector<1x16x32xf32> to vector<16x32xf32>
    %2 = arith.truncf %1 : vector<16x32xf32> to vector<16x32xbf16>
    %c0_2 = arith.constant 0 : index
    %c0_3 = arith.constant 0 : index
    %3 = vector.load %arg3[%c0_2, %c0_3] : memref<32x64xbf16, #tpu.memory_space<vmem>>, vector<32x64xbf16>
    %cst = arith.constant dense<0.000000e+00> : vector<16x64xf32>
    %4 = tpu.matmul %2, %3, %cst {dimension_numbers = #tpu.dot_dimension_numbers<[1], [0], [0], [1], [0, 0, 1, 1], [], []>} : vector<16x32xbf16>, vector<32x64xbf16>, vector<16x64xf32> -> vector<16x64xf32>
    %c0_4 = arith.constant 0 : index
    %c0_5 = arith.constant 0 : index
    %5 = vector.load %arg4[%c0_4, %c0_5] : memref<1x64xf32, #tpu.memory_space<vmem>>, vector<1x64xf32>
    %6 = vector.broadcast %5 : vector<1x64xf32> to vector<16x64xf32>
    %7 = arith.addf %4, %6 : vector<16x64xf32>
    %8 = arith.index_cast %arg0 : i32 to index
    %9 = memref.load %arg1[%8] : memref<2xi32, #tpu.memory_space<smem>>
    %10 = tpu.iota {dimensions = array<i32: 0>} : vector<16x16xi32>
    %11 = tpu.iota {dimensions = array<i32: 1>} : vector<16x16xi32>
    %12 = arith.cmpi sle, %11, %10 : vector<16x16xi32>
    %13 = vector.broadcast %9 : i32 to vector<16x16xi32>
    %14 = arith.cmpi slt, %11, %13 : vector<16x16xi32>
    %15 = arith.andi %12, %14 : vector<16x16xi1>
    %cst_6 = arith.constant 0.000000e+00 : f32
    %cst_7 = arith.constant -1.000000e+30 : f32
    %16 = vector.broadcast %cst_6 : f32 to vector<16x16xf32>
    %17 = vector.broadcast %cst_7 : f32 to vector<16x16xf32>
    %18 = arith.select %15, %16, %17 : vector<16x16xi1>, vector<16x16xf32>
    %c0_8 = arith.constant 0 : index
    %c0_9 = arith.constant 0 : index
    %c0_10 = arith.constant 0 : index
    %19 = vector.load %arg5[%c0_8, %c0_9, %c0_10] : memref<2x16x64xf32, #tpu.memory_space<vmem>>, vector<1x16x64xf32>
    %20 = vector.shape_cast %19 : vector<1x16x64xf32> to vector<16x64xf32>
    %c1 = arith.constant 1 : index
    %c0_11 = arith.constant 0 : index
    %c0_12 = arith.constant 0 : index
    %21 = vector.load %arg5[%c1, %c0_11, %c0_12] : memref<2x16x64xf32, #tpu.memory_space<vmem>>, vector<1x16x64xf32>
    %22 = vector.shape_cast %21 : vector<1x16x64xf32> to vector<16x64xf32>
    %c0_i32 = arith.constant 0 : i32
    %23 = arith.index_cast %c0_i32 : i32 to index
    %c0_13 = arith.constant 0 : index
    %c0_14 = arith.constant 0 : index
    %24 = vector.load %arg6[%23, %c0_13, %c0_14] : memref<2x2x64xf32, #tpu.memory_space<vmem>>, vector<1x2x64xf32>
    %25 = vector.shape_cast %24 : vector<1x2x64xf32> to vector<2x64xf32>
    %26 = arith.mulf %7, %7 : vector<16x64xf32>
    %cst_15 = arith.constant dense<0.000000e+00> : vector<16xf32>
    %27 = vector.multi_reduction <add>, %26, %cst_15 [1] : vector<16x64xf32> to vector<16xf32>
    %28 = vector.shape_cast %27 : vector<16xf32> to vector<16x1xf32>
    %cst_16 = arith.constant 6.400000e+01 : f32
    %29 = vector.broadcast %cst_16 : f32 to vector<16x1xf32>
    %30 = arith.divf %28, %29 : vector<16x1xf32>
    %cst_17 = arith.constant 9.99999997E-7 : f32
    %31 = vector.broadcast %cst_17 : f32 to vector<16x1xf32>
    %32 = arith.addf %30, %31 : vector<16x1xf32>
    %33 = math.rsqrt %32 : vector<16x1xf32>
    %34 = vector.broadcast %33 : vector<16x1xf32> to vector<16x64xf32>
    %35 = arith.mulf %7, %34 : vector<16x64xf32>
    %36 = vector.extract_strided_slice %25 {offsets = [0, 0], sizes = [1, 64], strides = [1, 1]} : vector<2x64xf32> to vector<1x64xf32>
    %37 = vector.broadcast %36 : vector<1x64xf32> to vector<16x64xf32>
    %38 = arith.mulf %35, %37 : vector<16x64xf32>
    %39 = arith.truncf %38 : vector<16x64xf32> to vector<16x64xbf16>
    %40 = arith.index_cast %c0_i32 : i32 to index
    %c0_18 = arith.constant 0 : index
    %c0_19 = arith.constant 0 : index
    %41 = vector.load %arg7[%40, %c0_18, %c0_19] : memref<2x64x320xbf16, #tpu.memory_space<vmem>>, vector<1x64x320xbf16>
    %42 = vector.shape_cast %41 : vector<1x64x320xbf16> to vector<64x320xbf16>
    %cst_20 = arith.constant dense<0.000000e+00> : vector<16x320xf32>
    %43 = tpu.matmul %39, %42, %cst_20 {dimension_numbers = #tpu.dot_dimension_numbers<[1], [0], [0], [1], [0, 0, 1, 1], [], []>} : vector<16x64xbf16>, vector<64x320xbf16>, vector<16x320xf32> -> vector<16x320xf32>
    %44 = vector.extract_strided_slice %43 {offsets = [0, 0], sizes = [16, 64], strides = [1, 1]} : vector<16x320xf32> to vector<16x64xf32>
    %45 = arith.mulf %44, %20 : vector<16x64xf32>
    %46 = vector.extract_strided_slice %43 {offsets = [0, 64], sizes = [16, 64], strides = [1, 1]} : vector<16x320xf32> to vector<16x64xf32>
    %47 = arith.mulf %46, %22 : vector<16x64xf32>
    %48 = arith.addf %45, %47 : vector<16x64xf32>
    %49 = arith.truncf %48 : vector<16x64xf32> to vector<16x64xbf16>
    %50 = vector.extract_strided_slice %43 {offsets = [0, 128], sizes = [16, 64], strides = [1, 1]} : vector<16x320xf32> to vector<16x64xf32>
    %51 = arith.mulf %50, %20 : vector<16x64xf32>
    %52 = vector.extract_strided_slice %43 {offsets = [0, 192], sizes = [16, 64], strides = [1, 1]} : vector<16x320xf32> to vector<16x64xf32>
    %53 = arith.mulf %52, %22 : vector<16x64xf32>
    %54 = arith.addf %51, %53 : vector<16x64xf32>
    %55 = arith.truncf %54 : vector<16x64xf32> to vector<16x64xbf16>
    %56 = vector.extract_strided_slice %43 {offsets = [0, 256], sizes = [16, 64], strides = [1, 1]} : vector<16x320xf32> to vector<16x64xf32>
    %57 = arith.truncf %56 : vector<16x64xf32> to vector<16x64xbf16>
    %58 = vector.extract_strided_slice %49 {offsets = [0, 0], sizes = [16, 16], strides = [1, 1]} : vector<16x64xbf16> to vector<16x16xbf16>
    %59 = vector.extract_strided_slice %55 {offsets = [0, 0], sizes = [16, 16], strides = [1, 1]} : vector<16x64xbf16> to vector<16x16xbf16>
    %cst_21 = arith.constant dense<0.000000e+00> : vector<16x16xf32>
    %60 = tpu.matmul %58, %59, %cst_21 {dimension_numbers = #tpu.dot_dimension_numbers<[1], [1], [0], [0], [0, 0, 1, 0], [], []>} : vector<16x16xbf16>, vector<16x16xbf16>, vector<16x16xf32> -> vector<16x16xf32>
    %61 = vector.extract_strided_slice %49 {offsets = [0, 16], sizes = [16, 16], strides = [1, 1]} : vector<16x64xbf16> to vector<16x16xbf16>
    %62 = vector.extract_strided_slice %55 {offsets = [0, 16], sizes = [16, 16], strides = [1, 1]} : vector<16x64xbf16> to vector<16x16xbf16>
    %cst_22 = arith.constant dense<0.000000e+00> : vector<16x16xf32>
    %63 = tpu.matmul %61, %62, %cst_22 {dimension_numbers = #tpu.dot_dimension_numbers<[1], [1], [0], [0], [0, 0, 1, 0], [], []>} : vector<16x16xbf16>, vector<16x16xbf16>, vector<16x16xf32> -> vector<16x16xf32>
    %64 = vector.extract_strided_slice %49 {offsets = [0, 32], sizes = [16, 16], strides = [1, 1]} : vector<16x64xbf16> to vector<16x16xbf16>
    %65 = vector.extract_strided_slice %55 {offsets = [0, 32], sizes = [16, 16], strides = [1, 1]} : vector<16x64xbf16> to vector<16x16xbf16>
    %cst_23 = arith.constant dense<0.000000e+00> : vector<16x16xf32>
    %66 = tpu.matmul %64, %65, %cst_23 {dimension_numbers = #tpu.dot_dimension_numbers<[1], [1], [0], [0], [0, 0, 1, 0], [], []>} : vector<16x16xbf16>, vector<16x16xbf16>, vector<16x16xf32> -> vector<16x16xf32>
    %67 = vector.extract_strided_slice %49 {offsets = [0, 48], sizes = [16, 16], strides = [1, 1]} : vector<16x64xbf16> to vector<16x16xbf16>
    %68 = vector.extract_strided_slice %55 {offsets = [0, 48], sizes = [16, 16], strides = [1, 1]} : vector<16x64xbf16> to vector<16x16xbf16>
    %cst_24 = arith.constant dense<0.000000e+00> : vector<16x16xf32>
    %69 = tpu.matmul %67, %68, %cst_24 {dimension_numbers = #tpu.dot_dimension_numbers<[1], [1], [0], [0], [0, 0, 1, 0], [], []>} : vector<16x16xbf16>, vector<16x16xbf16>, vector<16x16xf32> -> vector<16x16xf32>
    %70 = vector.shape_cast %60 : vector<16x16xf32> to vector<1x16x16xf32>
    %71 = vector.shape_cast %63 : vector<16x16xf32> to vector<1x16x16xf32>
    %72 = vector.shape_cast %66 : vector<16x16xf32> to vector<1x16x16xf32>
    %73 = vector.shape_cast %69 : vector<16x16xf32> to vector<1x16x16xf32>
    %74 = tpu.concatenate %70, %71, %72, %73 in 0 : vector<1x16x16xf32>, vector<1x16x16xf32>, vector<1x16x16xf32>, vector<1x16x16xf32> -> vector<4x16x16xf32>
    %75 = vector.shape_cast %18 : vector<16x16xf32> to vector<1x16x16xf32>
    %76 = vector.broadcast %75 : vector<1x16x16xf32> to vector<4x16x16xf32>
    %77 = arith.addf %74, %76 : vector<4x16x16xf32>
    %cst_25 = arith.constant dense<0xFF800000> : vector<4x16xf32>
    %78 = vector.multi_reduction <maximumf>, %77, %cst_25 [2] : vector<4x16x16xf32> to vector<4x16xf32>
    %79 = vector.shape_cast %78 : vector<4x16xf32> to vector<4x16x1xf32>
    %80 = vector.broadcast %79 : vector<4x16x1xf32> to vector<4x16x16xf32>
    %81 = arith.subf %77, %80 : vector<4x16x16xf32>
    %82 = math.exp %81 : vector<4x16x16xf32>
    %cst_26 = arith.constant dense<0.000000e+00> : vector<4x16xf32>
    %83 = vector.multi_reduction <add>, %82, %cst_26 [2] : vector<4x16x16xf32> to vector<4x16xf32>
    %84 = vector.shape_cast %83 : vector<4x16xf32> to vector<4x16x1xf32>
    %85 = vector.broadcast %84 : vector<4x16x1xf32> to vector<4x16x16xf32>
    %86 = arith.divf %82, %85 : vector<4x16x16xf32>
    %87 = arith.truncf %86 : vector<4x16x16xf32> to vector<4x16x16xbf16>
    %88 = vector.extract_strided_slice %87 {offsets = [0, 0, 0], sizes = [1, 16, 16], strides = [1, 1, 1]} : vector<4x16x16xbf16> to vector<1x16x16xbf16>
    %89 = vector.shape_cast %88 : vector<1x16x16xbf16> to vector<16x16xbf16>
    %90 = vector.extract_strided_slice %57 {offsets = [0, 0], sizes = [16, 16], strides = [1, 1]} : vector<16x64xbf16> to vector<16x16xbf16>
    %cst_27 = arith.constant dense<0.000000e+00> : vector<16x16xf32>
    %91 = tpu.matmul %89, %90, %cst_27 {dimension_numbers = #tpu.dot_dimension_numbers<[1], [0], [0], [1], [0, 0, 1, 1], [], []>} : vector<16x16xbf16>, vector<16x16xbf16>, vector<16x16xf32> -> vector<16x16xf32>
    %92 = vector.extract_strided_slice %87 {offsets = [1, 0, 0], sizes = [1, 16, 16], strides = [1, 1, 1]} : vector<4x16x16xbf16> to vector<1x16x16xbf16>
    %93 = vector.shape_cast %92 : vector<1x16x16xbf16> to vector<16x16xbf16>
    %94 = vector.extract_strided_slice %57 {offsets = [0, 16], sizes = [16, 16], strides = [1, 1]} : vector<16x64xbf16> to vector<16x16xbf16>
    %cst_28 = arith.constant dense<0.000000e+00> : vector<16x16xf32>
    %95 = tpu.matmul %93, %94, %cst_28 {dimension_numbers = #tpu.dot_dimension_numbers<[1], [0], [0], [1], [0, 0, 1, 1], [], []>} : vector<16x16xbf16>, vector<16x16xbf16>, vector<16x16xf32> -> vector<16x16xf32>
    %96 = vector.extract_strided_slice %87 {offsets = [2, 0, 0], sizes = [1, 16, 16], strides = [1, 1, 1]} : vector<4x16x16xbf16> to vector<1x16x16xbf16>
    %97 = vector.shape_cast %96 : vector<1x16x16xbf16> to vector<16x16xbf16>
    %98 = vector.extract_strided_slice %57 {offsets = [0, 32], sizes = [16, 16], strides = [1, 1]} : vector<16x64xbf16> to vector<16x16xbf16>
    %cst_29 = arith.constant dense<0.000000e+00> : vector<16x16xf32>
    %99 = tpu.matmul %97, %98, %cst_29 {dimension_numbers = #tpu.dot_dimension_numbers<[1], [0], [0], [1], [0, 0, 1, 1], [], []>} : vector<16x16xbf16>, vector<16x16xbf16>, vector<16x16xf32> -> vector<16x16xf32>
    %100 = vector.extract_strided_slice %87 {offsets = [3, 0, 0], sizes = [1, 16, 16], strides = [1, 1, 1]} : vector<4x16x16xbf16> to vector<1x16x16xbf16>
    %101 = vector.shape_cast %100 : vector<1x16x16xbf16> to vector<16x16xbf16>
    %102 = vector.extract_strided_slice %57 {offsets = [0, 48], sizes = [16, 16], strides = [1, 1]} : vector<16x64xbf16> to vector<16x16xbf16>
    %cst_30 = arith.constant dense<0.000000e+00> : vector<16x16xf32>
    %103 = tpu.matmul %101, %102, %cst_30 {dimension_numbers = #tpu.dot_dimension_numbers<[1], [0], [0], [1], [0, 0, 1, 1], [], []>} : vector<16x16xbf16>, vector<16x16xbf16>, vector<16x16xf32> -> vector<16x16xf32>
    %104 = tpu.concatenate %91, %95, %99, %103 in 1 : vector<16x16xf32>, vector<16x16xf32>, vector<16x16xf32>, vector<16x16xf32> -> vector<16x64xf32>
    %105 = arith.truncf %104 : vector<16x64xf32> to vector<16x64xbf16>
    %106 = arith.index_cast %c0_i32 : i32 to index
    %c0_31 = arith.constant 0 : index
    %c0_32 = arith.constant 0 : index
    %107 = vector.load %arg8[%106, %c0_31, %c0_32] : memref<2x64x64xbf16, #tpu.memory_space<vmem>>, vector<1x64x64xbf16>
    %108 = vector.shape_cast %107 : vector<1x64x64xbf16> to vector<64x64xbf16>
    %cst_33 = arith.constant dense<0.000000e+00> : vector<16x64xf32>
    %109 = tpu.matmul %105, %108, %cst_33 {dimension_numbers = #tpu.dot_dimension_numbers<[1], [0], [0], [1], [0, 0, 1, 1], [], []>} : vector<16x64xbf16>, vector<64x64xbf16>, vector<16x64xf32> -> vector<16x64xf32>
    %110 = arith.addf %7, %109 : vector<16x64xf32>
    %111 = arith.mulf %110, %110 : vector<16x64xf32>
    %cst_34 = arith.constant dense<0.000000e+00> : vector<16xf32>
    %112 = vector.multi_reduction <add>, %111, %cst_34 [1] : vector<16x64xf32> to vector<16xf32>
    %113 = vector.shape_cast %112 : vector<16xf32> to vector<16x1xf32>
    %cst_35 = arith.constant 6.400000e+01 : f32
    %114 = vector.broadcast %cst_35 : f32 to vector<16x1xf32>
    %115 = arith.divf %113, %114 : vector<16x1xf32>
    %cst_36 = arith.constant 9.99999997E-7 : f32
    %116 = vector.broadcast %cst_36 : f32 to vector<16x1xf32>
    %117 = arith.addf %115, %116 : vector<16x1xf32>
    %118 = math.rsqrt %117 : vector<16x1xf32>
    %119 = vector.broadcast %118 : vector<16x1xf32> to vector<16x64xf32>
    %120 = arith.mulf %110, %119 : vector<16x64xf32>
    %121 = vector.extract_strided_slice %25 {offsets = [1, 0], sizes = [1, 64], strides = [1, 1]} : vector<2x64xf32> to vector<1x64xf32>
    %122 = vector.broadcast %121 : vector<1x64xf32> to vector<16x64xf32>
    %123 = arith.mulf %120, %122 : vector<16x64xf32>
    %124 = arith.truncf %123 : vector<16x64xf32> to vector<16x64xbf16>
    %125 = arith.index_cast %c0_i32 : i32 to index
    %c0_37 = arith.constant 0 : index
    %c0_38 = arith.constant 0 : index
    %126 = vector.load %arg9[%125, %c0_37, %c0_38] : memref<2x64x256xbf16, #tpu.memory_space<vmem>>, vector<1x64x256xbf16>
    %127 = vector.shape_cast %126 : vector<1x64x256xbf16> to vector<64x256xbf16>
    %cst_39 = arith.constant dense<0.000000e+00> : vector<16x256xf32>
    %128 = tpu.matmul %124, %127, %cst_39 {dimension_numbers = #tpu.dot_dimension_numbers<[1], [0], [0], [1], [0, 0, 1, 1], [], []>} : vector<16x64xbf16>, vector<64x256xbf16>, vector<16x256xf32> -> vector<16x256xf32>
    %129 = vector.extract_strided_slice %128 {offsets = [0, 0], sizes = [16, 128], strides = [1, 1]} : vector<16x256xf32> to vector<16x128xf32>
    %130 = vector.extract_strided_slice %128 {offsets = [0, 128], sizes = [16, 128], strides = [1, 1]} : vector<16x256xf32> to vector<16x128xf32>
    %131 = arith.negf %129 : vector<16x128xf32>
    %132 = math.exp %131 : vector<16x128xf32>
    %cst_40 = arith.constant 1.000000e+00 : f32
    %133 = vector.broadcast %cst_40 : f32 to vector<16x128xf32>
    %134 = arith.addf %133, %132 : vector<16x128xf32>
    %135 = arith.divf %133, %134 : vector<16x128xf32>
    %136 = arith.mulf %129, %135 : vector<16x128xf32>
    %137 = arith.mulf %136, %130 : vector<16x128xf32>
    %138 = arith.truncf %137 : vector<16x128xf32> to vector<16x128xbf16>
    %139 = arith.index_cast %c0_i32 : i32 to index
    %c0_41 = arith.constant 0 : index
    %c0_42 = arith.constant 0 : index
    %140 = vector.load %arg10[%139, %c0_41, %c0_42] : memref<2x128x64xbf16, #tpu.memory_space<vmem>>, vector<1x128x64xbf16>
    %141 = vector.shape_cast %140 : vector<1x128x64xbf16> to vector<128x64xbf16>
    %cst_43 = arith.constant dense<0.000000e+00> : vector<16x64xf32>
    %142 = tpu.matmul %138, %141, %cst_43 {dimension_numbers = #tpu.dot_dimension_numbers<[1], [0], [0], [1], [0, 0, 1, 1], [], []>} : vector<16x128xbf16>, vector<128x64xbf16>, vector<16x64xf32> -> vector<16x64xf32>
    %143 = arith.addf %110, %142 : vector<16x64xf32>
    %c1_i32 = arith.constant 1 : i32
    %144 = arith.index_cast %c1_i32 : i32 to index
    %c0_44 = arith.constant 0 : index
    %c0_45 = arith.constant 0 : index
    %145 = vector.load %arg6[%144, %c0_44, %c0_45] : memref<2x2x64xf32, #tpu.memory_space<vmem>>, vector<1x2x64xf32>
    %146 = vector.shape_cast %145 : vector<1x2x64xf32> to vector<2x64xf32>
    %147 = arith.mulf %143, %143 : vector<16x64xf32>
    %cst_46 = arith.constant dense<0.000000e+00> : vector<16xf32>
    %148 = vector.multi_reduction <add>, %147, %cst_46 [1] : vector<16x64xf32> to vector<16xf32>
    %149 = vector.shape_cast %148 : vector<16xf32> to vector<16x1xf32>
    %cst_47 = arith.constant 6.400000e+01 : f32
    %150 = vector.broadcast %cst_47 : f32 to vector<16x1xf32>
    %151 = arith.divf %149, %150 : vector<16x1xf32>
    %cst_48 = arith.constant 9.99999997E-7 : f32
    %152 = vector.broadcast %cst_48 : f32 to vector<16x1xf32>
    %153 = arith.addf %151, %152 : vector<16x1xf32>
    %154 = math.rsqrt %153 : vector<16x1xf32>
    %155 = vector.broadcast %154 : vector<16x1xf32> to vector<16x64xf32>
    %156 = arith.mulf %143, %155 : vector<16x64xf32>
    %157 = vector.extract_strided_slice %146 {offsets = [0, 0], sizes = [1, 64], strides = [1, 1]} : vector<2x64xf32> to vector<1x64xf32>
    %158 = vector.broadcast %157 : vector<1x64xf32> to vector<16x64xf32>
    %159 = arith.mulf %156, %158 : vector<16x64xf32>
    %160 = arith.truncf %159 : vector<16x64xf32> to vector<16x64xbf16>
    %161 = arith.index_cast %c1_i32 : i32 to index
    %c0_49 = arith.constant 0 : index
    %c0_50 = arith.constant 0 : index
    %162 = vector.load %arg7[%161, %c0_49, %c0_50] : memref<2x64x320xbf16, #tpu.memory_space<vmem>>, vector<1x64x320xbf16>
    %163 = vector.shape_cast %162 : vector<1x64x320xbf16> to vector<64x320xbf16>
    %cst_51 = arith.constant dense<0.000000e+00> : vector<16x320xf32>
    %164 = tpu.matmul %160, %163, %cst_51 {dimension_numbers = #tpu.dot_dimension_numbers<[1], [0], [0], [1], [0, 0, 1, 1], [], []>} : vector<16x64xbf16>, vector<64x320xbf16>, vector<16x320xf32> -> vector<16x320xf32>
    %165 = vector.extract_strided_slice %164 {offsets = [0, 0], sizes = [16, 64], strides = [1, 1]} : vector<16x320xf32> to vector<16x64xf32>
    %166 = arith.mulf %165, %20 : vector<16x64xf32>
    %167 = vector.extract_strided_slice %164 {offsets = [0, 64], sizes = [16, 64], strides = [1, 1]} : vector<16x320xf32> to vector<16x64xf32>
    %168 = arith.mulf %167, %22 : vector<16x64xf32>
    %169 = arith.addf %166, %168 : vector<16x64xf32>
    %170 = arith.truncf %169 : vector<16x64xf32> to vector<16x64xbf16>
    %171 = vector.extract_strided_slice %164 {offsets = [0, 128], sizes = [16, 64], strides = [1, 1]} : vector<16x320xf32> to vector<16x64xf32>
    %172 = arith.mulf %171, %20 : vector<16x64xf32>
    %173 = vector.extract_strided_slice %164 {offsets = [0, 192], sizes = [16, 64], strides = [1, 1]} : vector<16x320xf32> to vector<16x64xf32>
    %174 = arith.mulf %173, %22 : vector<16x64xf32>
    %175 = arith.addf %172, %174 : vector<16x64xf32>
    %176 = arith.truncf %175 : vector<16x64xf32> to vector<16x64xbf16>
    %177 = vector.extract_strided_slice %164 {offsets = [0, 256], sizes = [16, 64], strides = [1, 1]} : vector<16x320xf32> to vector<16x64xf32>
    %178 = arith.truncf %177 : vector<16x64xf32> to vector<16x64xbf16>
    %179 = vector.extract_strided_slice %170 {offsets = [0, 0], sizes = [16, 16], strides = [1, 1]} : vector<16x64xbf16> to vector<16x16xbf16>
    %180 = vector.extract_strided_slice %176 {offsets = [0, 0], sizes = [16, 16], strides = [1, 1]} : vector<16x64xbf16> to vector<16x16xbf16>
    %cst_52 = arith.constant dense<0.000000e+00> : vector<16x16xf32>
    %181 = tpu.matmul %179, %180, %cst_52 {dimension_numbers = #tpu.dot_dimension_numbers<[1], [1], [0], [0], [0, 0, 1, 0], [], []>} : vector<16x16xbf16>, vector<16x16xbf16>, vector<16x16xf32> -> vector<16x16xf32>
    %182 = vector.extract_strided_slice %170 {offsets = [0, 16], sizes = [16, 16], strides = [1, 1]} : vector<16x64xbf16> to vector<16x16xbf16>
    %183 = vector.extract_strided_slice %176 {offsets = [0, 16], sizes = [16, 16], strides = [1, 1]} : vector<16x64xbf16> to vector<16x16xbf16>
    %cst_53 = arith.constant dense<0.000000e+00> : vector<16x16xf32>
    %184 = tpu.matmul %182, %183, %cst_53 {dimension_numbers = #tpu.dot_dimension_numbers<[1], [1], [0], [0], [0, 0, 1, 0], [], []>} : vector<16x16xbf16>, vector<16x16xbf16>, vector<16x16xf32> -> vector<16x16xf32>
    %185 = vector.extract_strided_slice %170 {offsets = [0, 32], sizes = [16, 16], strides = [1, 1]} : vector<16x64xbf16> to vector<16x16xbf16>
    %186 = vector.extract_strided_slice %176 {offsets = [0, 32], sizes = [16, 16], strides = [1, 1]} : vector<16x64xbf16> to vector<16x16xbf16>
    %cst_54 = arith.constant dense<0.000000e+00> : vector<16x16xf32>
    %187 = tpu.matmul %185, %186, %cst_54 {dimension_numbers = #tpu.dot_dimension_numbers<[1], [1], [0], [0], [0, 0, 1, 0], [], []>} : vector<16x16xbf16>, vector<16x16xbf16>, vector<16x16xf32> -> vector<16x16xf32>
    %188 = vector.extract_strided_slice %170 {offsets = [0, 48], sizes = [16, 16], strides = [1, 1]} : vector<16x64xbf16> to vector<16x16xbf16>
    %189 = vector.extract_strided_slice %176 {offsets = [0, 48], sizes = [16, 16], strides = [1, 1]} : vector<16x64xbf16> to vector<16x16xbf16>
    %cst_55 = arith.constant dense<0.000000e+00> : vector<16x16xf32>
    %190 = tpu.matmul %188, %189, %cst_55 {dimension_numbers = #tpu.dot_dimension_numbers<[1], [1], [0], [0], [0, 0, 1, 0], [], []>} : vector<16x16xbf16>, vector<16x16xbf16>, vector<16x16xf32> -> vector<16x16xf32>
    %191 = vector.shape_cast %181 : vector<16x16xf32> to vector<1x16x16xf32>
    %192 = vector.shape_cast %184 : vector<16x16xf32> to vector<1x16x16xf32>
    %193 = vector.shape_cast %187 : vector<16x16xf32> to vector<1x16x16xf32>
    %194 = vector.shape_cast %190 : vector<16x16xf32> to vector<1x16x16xf32>
    %195 = tpu.concatenate %191, %192, %193, %194 in 0 : vector<1x16x16xf32>, vector<1x16x16xf32>, vector<1x16x16xf32>, vector<1x16x16xf32> -> vector<4x16x16xf32>
    %196 = vector.shape_cast %18 : vector<16x16xf32> to vector<1x16x16xf32>
    %197 = vector.broadcast %196 : vector<1x16x16xf32> to vector<4x16x16xf32>
    %198 = arith.addf %195, %197 : vector<4x16x16xf32>
    %cst_56 = arith.constant dense<0xFF800000> : vector<4x16xf32>
    %199 = vector.multi_reduction <maximumf>, %198, %cst_56 [2] : vector<4x16x16xf32> to vector<4x16xf32>
    %200 = vector.shape_cast %199 : vector<4x16xf32> to vector<4x16x1xf32>
    %201 = vector.broadcast %200 : vector<4x16x1xf32> to vector<4x16x16xf32>
    %202 = arith.subf %198, %201 : vector<4x16x16xf32>
    %203 = math.exp %202 : vector<4x16x16xf32>
    %cst_57 = arith.constant dense<0.000000e+00> : vector<4x16xf32>
    %204 = vector.multi_reduction <add>, %203, %cst_57 [2] : vector<4x16x16xf32> to vector<4x16xf32>
    %205 = vector.shape_cast %204 : vector<4x16xf32> to vector<4x16x1xf32>
    %206 = vector.broadcast %205 : vector<4x16x1xf32> to vector<4x16x16xf32>
    %207 = arith.divf %203, %206 : vector<4x16x16xf32>
    %208 = arith.truncf %207 : vector<4x16x16xf32> to vector<4x16x16xbf16>
    %209 = vector.extract_strided_slice %208 {offsets = [0, 0, 0], sizes = [1, 16, 16], strides = [1, 1, 1]} : vector<4x16x16xbf16> to vector<1x16x16xbf16>
    %210 = vector.shape_cast %209 : vector<1x16x16xbf16> to vector<16x16xbf16>
    %211 = vector.extract_strided_slice %178 {offsets = [0, 0], sizes = [16, 16], strides = [1, 1]} : vector<16x64xbf16> to vector<16x16xbf16>
    %cst_58 = arith.constant dense<0.000000e+00> : vector<16x16xf32>
    %212 = tpu.matmul %210, %211, %cst_58 {dimension_numbers = #tpu.dot_dimension_numbers<[1], [0], [0], [1], [0, 0, 1, 1], [], []>} : vector<16x16xbf16>, vector<16x16xbf16>, vector<16x16xf32> -> vector<16x16xf32>
    %213 = vector.extract_strided_slice %208 {offsets = [1, 0, 0], sizes = [1, 16, 16], strides = [1, 1, 1]} : vector<4x16x16xbf16> to vector<1x16x16xbf16>
    %214 = vector.shape_cast %213 : vector<1x16x16xbf16> to vector<16x16xbf16>
    %215 = vector.extract_strided_slice %178 {offsets = [0, 16], sizes = [16, 16], strides = [1, 1]} : vector<16x64xbf16> to vector<16x16xbf16>
    %cst_59 = arith.constant dense<0.000000e+00> : vector<16x16xf32>
    %216 = tpu.matmul %214, %215, %cst_59 {dimension_numbers = #tpu.dot_dimension_numbers<[1], [0], [0], [1], [0, 0, 1, 1], [], []>} : vector<16x16xbf16>, vector<16x16xbf16>, vector<16x16xf32> -> vector<16x16xf32>
    %217 = vector.extract_strided_slice %208 {offsets = [2, 0, 0], sizes = [1, 16, 16], strides = [1, 1, 1]} : vector<4x16x16xbf16> to vector<1x16x16xbf16>
    %218 = vector.shape_cast %217 : vector<1x16x16xbf16> to vector<16x16xbf16>
    %219 = vector.extract_strided_slice %178 {offsets = [0, 32], sizes = [16, 16], strides = [1, 1]} : vector<16x64xbf16> to vector<16x16xbf16>
    %cst_60 = arith.constant dense<0.000000e+00> : vector<16x16xf32>
    %220 = tpu.matmul %218, %219, %cst_60 {dimension_numbers = #tpu.dot_dimension_numbers<[1], [0], [0], [1], [0, 0, 1, 1], [], []>} : vector<16x16xbf16>, vector<16x16xbf16>, vector<16x16xf32> -> vector<16x16xf32>
    %221 = vector.extract_strided_slice %208 {offsets = [3, 0, 0], sizes = [1, 16, 16], strides = [1, 1, 1]} : vector<4x16x16xbf16> to vector<1x16x16xbf16>
    %222 = vector.shape_cast %221 : vector<1x16x16xbf16> to vector<16x16xbf16>
    %223 = vector.extract_strided_slice %178 {offsets = [0, 48], sizes = [16, 16], strides = [1, 1]} : vector<16x64xbf16> to vector<16x16xbf16>
    %cst_61 = arith.constant dense<0.000000e+00> : vector<16x16xf32>
    %224 = tpu.matmul %222, %223, %cst_61 {dimension_numbers = #tpu.dot_dimension_numbers<[1], [0], [0], [1], [0, 0, 1, 1], [], []>} : vector<16x16xbf16>, vector<16x16xbf16>, vector<16x16xf32> -> vector<16x16xf32>
    %225 = tpu.concatenate %212, %216, %220, %224 in 1 : vector<16x16xf32>, vector<16x16xf32>, vector<16x16xf32>, vector<16x16xf32> -> vector<16x64xf32>
    %226 = arith.truncf %225 : vector<16x64xf32> to vector<16x64xbf16>
    %227 = arith.index_cast %c1_i32 : i32 to index
    %c0_62 = arith.constant 0 : index
    %c0_63 = arith.constant 0 : index
    %228 = vector.load %arg8[%227, %c0_62, %c0_63] : memref<2x64x64xbf16, #tpu.memory_space<vmem>>, vector<1x64x64xbf16>
    %229 = vector.shape_cast %228 : vector<1x64x64xbf16> to vector<64x64xbf16>
    %cst_64 = arith.constant dense<0.000000e+00> : vector<16x64xf32>
    %230 = tpu.matmul %226, %229, %cst_64 {dimension_numbers = #tpu.dot_dimension_numbers<[1], [0], [0], [1], [0, 0, 1, 1], [], []>} : vector<16x64xbf16>, vector<64x64xbf16>, vector<16x64xf32> -> vector<16x64xf32>
    %231 = arith.addf %143, %230 : vector<16x64xf32>
    %232 = arith.mulf %231, %231 : vector<16x64xf32>
    %cst_65 = arith.constant dense<0.000000e+00> : vector<16xf32>
    %233 = vector.multi_reduction <add>, %232, %cst_65 [1] : vector<16x64xf32> to vector<16xf32>
    %234 = vector.shape_cast %233 : vector<16xf32> to vector<16x1xf32>
    %cst_66 = arith.constant 6.400000e+01 : f32
    %235 = vector.broadcast %cst_66 : f32 to vector<16x1xf32>
    %236 = arith.divf %234, %235 : vector<16x1xf32>
    %cst_67 = arith.constant 9.99999997E-7 : f32
    %237 = vector.broadcast %cst_67 : f32 to vector<16x1xf32>
    %238 = arith.addf %236, %237 : vector<16x1xf32>
    %239 = math.rsqrt %238 : vector<16x1xf32>
    %240 = vector.broadcast %239 : vector<16x1xf32> to vector<16x64xf32>
    %241 = arith.mulf %231, %240 : vector<16x64xf32>
    %242 = vector.extract_strided_slice %146 {offsets = [1, 0], sizes = [1, 64], strides = [1, 1]} : vector<2x64xf32> to vector<1x64xf32>
    %243 = vector.broadcast %242 : vector<1x64xf32> to vector<16x64xf32>
    %244 = arith.mulf %241, %243 : vector<16x64xf32>
    %245 = arith.truncf %244 : vector<16x64xf32> to vector<16x64xbf16>
    %246 = arith.index_cast %c1_i32 : i32 to index
    %c0_68 = arith.constant 0 : index
    %c0_69 = arith.constant 0 : index
    %247 = vector.load %arg9[%246, %c0_68, %c0_69] : memref<2x64x256xbf16, #tpu.memory_space<vmem>>, vector<1x64x256xbf16>
    %248 = vector.shape_cast %247 : vector<1x64x256xbf16> to vector<64x256xbf16>
    %cst_70 = arith.constant dense<0.000000e+00> : vector<16x256xf32>
    %249 = tpu.matmul %245, %248, %cst_70 {dimension_numbers = #tpu.dot_dimension_numbers<[1], [0], [0], [1], [0, 0, 1, 1], [], []>} : vector<16x64xbf16>, vector<64x256xbf16>, vector<16x256xf32> -> vector<16x256xf32>
    %250 = vector.extract_strided_slice %249 {offsets = [0, 0], sizes = [16, 128], strides = [1, 1]} : vector<16x256xf32> to vector<16x128xf32>
    %251 = vector.extract_strided_slice %249 {offsets = [0, 128], sizes = [16, 128], strides = [1, 1]} : vector<16x256xf32> to vector<16x128xf32>
    %252 = arith.negf %250 : vector<16x128xf32>
    %253 = math.exp %252 : vector<16x128xf32>
    %cst_71 = arith.constant 1.000000e+00 : f32
    %254 = vector.broadcast %cst_71 : f32 to vector<16x128xf32>
    %255 = arith.addf %254, %253 : vector<16x128xf32>
    %256 = arith.divf %254, %255 : vector<16x128xf32>
    %257 = arith.mulf %250, %256 : vector<16x128xf32>
    %258 = arith.mulf %257, %251 : vector<16x128xf32>
    %259 = arith.truncf %258 : vector<16x128xf32> to vector<16x128xbf16>
    %260 = arith.index_cast %c1_i32 : i32 to index
    %c0_72 = arith.constant 0 : index
    %c0_73 = arith.constant 0 : index
    %261 = vector.load %arg10[%260, %c0_72, %c0_73] : memref<2x128x64xbf16, #tpu.memory_space<vmem>>, vector<1x128x64xbf16>
    %262 = vector.shape_cast %261 : vector<1x128x64xbf16> to vector<128x64xbf16>
    %cst_74 = arith.constant dense<0.000000e+00> : vector<16x64xf32>
    %263 = tpu.matmul %259, %262, %cst_74 {dimension_numbers = #tpu.dot_dimension_numbers<[1], [0], [0], [1], [0, 0, 1, 1], [], []>} : vector<16x128xbf16>, vector<128x64xbf16>, vector<16x64xf32> -> vector<16x64xf32>
    %264 = arith.addf %231, %263 : vector<16x64xf32>
    %c2_i32 = arith.constant 2 : i32
    %265 = arith.truncf %264 : vector<16x64xf32> to vector<16x64xbf16>
    %c0_75 = arith.constant 0 : index
    %c0_76 = arith.constant 0 : index
    %266 = vector.load %arg11[%c0_75, %c0_76] : memref<64x128xbf16, #tpu.memory_space<vmem>>, vector<64x128xbf16>
    %cst_77 = arith.constant dense<0.000000e+00> : vector<16x128xf32>
    %267 = tpu.matmul %265, %266, %cst_77 {dimension_numbers = #tpu.dot_dimension_numbers<[1], [0], [0], [1], [0, 0, 1, 1], [], []>} : vector<16x64xbf16>, vector<64x128xbf16>, vector<16x128xf32> -> vector<16x128xf32>
    %c0_78 = arith.constant 0 : index
    %c0_79 = arith.constant 0 : index
    %268 = vector.load %arg12[%c0_78, %c0_79] : memref<1x128xf32, #tpu.memory_space<vmem>>, vector<1x128xf32>
    %269 = vector.broadcast %268 : vector<1x128xf32> to vector<16x128xf32>
    %270 = arith.addf %267, %269 : vector<16x128xf32>
    %cst_80 = arith.constant dense<0xFF800000> : vector<16xf32>
    %271 = vector.multi_reduction <maximumf>, %270, %cst_80 [1] : vector<16x128xf32> to vector<16xf32>
    %272 = vector.shape_cast %271 : vector<16xf32> to vector<16x1xf32>
    %273 = vector.broadcast %272 : vector<16x1xf32> to vector<16x128xf32>
    %274 = arith.subf %270, %273 : vector<16x128xf32>
    %275 = math.exp %274 : vector<16x128xf32>
    %cst_81 = arith.constant dense<0.000000e+00> : vector<16xf32>
    %276 = vector.multi_reduction <add>, %275, %cst_81 [1] : vector<16x128xf32> to vector<16xf32>
    %277 = vector.shape_cast %276 : vector<16xf32> to vector<16x1xf32>
    %278 = math.log %277 : vector<16x1xf32>
    %279 = arith.addf %278, %272 : vector<16x1xf32>
    %280 = vector.broadcast %279 : vector<16x1xf32> to vector<16x128xf32>
    %281 = arith.subf %270, %280 : vector<16x128xf32>
    %c0_82 = arith.constant 0 : index
    %c0_83 = arith.constant 0 : index
    %c0_84 = arith.constant 0 : index
    %282 = vector.load %arg13[%c0_82, %c0_83, %c0_84] : memref<1x16x128xf32, #tpu.memory_space<vmem>>, vector<1x16x128xf32>
    %283 = vector.shape_cast %282 : vector<1x16x128xf32> to vector<16x128xf32>
    %284 = vector.shape_cast %281 : vector<16x128xf32> to vector<1x16x128xf32>
    tpu.vector_store %arg13[%c0_82, %c0_83, %c0_84], %284 {strides = array<i32>} : memref<1x16x128xf32, #tpu.memory_space<vmem>>, vector<1x16x128xf32>,
    return
  }
  func.func @transform_0(%arg0: i32, %arg1: memref<2xi32, #tpu.memory_space<smem>>) -> (i32, i32, i32) {
    %c0_i32 = arith.constant 0 : i32
    %c0_i32_0 = arith.constant 0 : i32
    %c0_i32_1 = arith.constant 0 : i32
    return %arg0, %c0_i32, %c0_i32_0 : i32, i32, i32
  }
  func.func @transform_1(%arg0: i32, %arg1: memref<2xi32, #tpu.memory_space<smem>>) -> (i32, i32) {
    %c0_i32 = arith.constant 0 : i32
    %c0_i32_0 = arith.constant 0 : i32
    %c0_i32_1 = arith.constant 0 : i32
    return %c0_i32, %c0_i32_0 : i32, i32
  }
  func.func @transform_2(%arg0: i32, %arg1: memref<2xi32, #tpu.memory_space<smem>>) -> (i32, i32) {
    %c0_i32 = arith.constant 0 : i32
    %c0_i32_0 = arith.constant 0 : i32
    %c0_i32_1 = arith.constant 0 : i32
    return %c0_i32, %c0_i32_0 : i32, i32
  }
  func.func @transform_3(%arg0: i32, %arg1: memref<2xi32, #tpu.memory_space<smem>>) -> (i32, i32, i32) {
    %c0_i32 = arith.constant 0 : i32
    %c0_i32_0 = arith.constant 0 : i32
    %c0_i32_1 = arith.constant 0 : i32
    %c0_i32_2 = arith.constant 0 : i32
    return %c0_i32, %c0_i32_0, %c0_i32_1 : i32, i32, i32
  }
  func.func @transform_4(%arg0: i32, %arg1: memref<2xi32, #tpu.memory_space<smem>>) -> (i32, i32, i32) {
    %c0_i32 = arith.constant 0 : i32
    %c0_i32_0 = arith.constant 0 : i32
    %c0_i32_1 = arith.constant 0 : i32
    %c0_i32_2 = arith.constant 0 : i32
    return %c0_i32, %c0_i32_0, %c0_i32_1 : i32, i32, i32
  }
  func.func @transform_5(%arg0: i32, %arg1: memref<2xi32, #tpu.memory_space<smem>>) -> (i32, i32, i32) {
    %c0_i32 = arith.constant 0 : i32
    %c0_i32_0 = arith.constant 0 : i32
    %c0_i32_1 = arith.constant 0 : i32
    %c0_i32_2 = arith.constant 0 : i32
    return %c0_i32, %c0_i32_0, %c0_i32_1 : i32, i32, i32
  }
  func.func @transform_6(%arg0: i32, %arg1: memref<2xi32, #tpu.memory_space<smem>>) -> (i32, i32, i32) {
    %c0_i32 = arith.constant 0 : i32
    %c0_i32_0 = arith.constant 0 : i32
    %c0_i32_1 = arith.constant 0 : i32
    %c0_i32_2 = arith.constant 0 : i32
    return %c0_i32, %c0_i32_0, %c0_i32_1 : i32, i32, i32
  }
  func.func @transform_7(%arg0: i32, %arg1: memref<2xi32, #tpu.memory_space<smem>>) -> (i32, i32, i32) {
    %c0_i32 = arith.constant 0 : i32
    %c0_i32_0 = arith.constant 0 : i32
    %c0_i32_1 = arith.constant 0 : i32
    %c0_i32_2 = arith.constant 0 : i32
    return %c0_i32, %c0_i32_0, %c0_i32_1 : i32, i32, i32
  }
  func.func @transform_8(%arg0: i32, %arg1: memref<2xi32, #tpu.memory_space<smem>>) -> (i32, i32, i32) {
    %c0_i32 = arith.constant 0 : i32
    %c0_i32_0 = arith.constant 0 : i32
    %c0_i32_1 = arith.constant 0 : i32
    %c0_i32_2 = arith.constant 0 : i32
    return %c0_i32, %c0_i32_0, %c0_i32_1 : i32, i32, i32
  }
  func.func @transform_9(%arg0: i32, %arg1: memref<2xi32, #tpu.memory_space<smem>>) -> (i32, i32) {
    %c0_i32 = arith.constant 0 : i32
    %c0_i32_0 = arith.constant 0 : i32
    %c0_i32_1 = arith.constant 0 : i32
    return %c0_i32, %c0_i32_0 : i32, i32
  }
  func.func @transform_10(%arg0: i32, %arg1: memref<2xi32, #tpu.memory_space<smem>>) -> (i32, i32) {
    %c0_i32 = arith.constant 0 : i32
    %c0_i32_0 = arith.constant 0 : i32
    %c0_i32_1 = arith.constant 0 : i32
    return %c0_i32, %c0_i32_0 : i32, i32
  }
  func.func @transform_11(%arg0: i32, %arg1: memref<2xi32, #tpu.memory_space<smem>>) -> (i32, i32, i32) {
    %c0_i32 = arith.constant 0 : i32
    %c0_i32_0 = arith.constant 0 : i32
    %c0_i32_1 = arith.constant 0 : i32
    return %arg0, %c0_i32, %c0_i32_0 : i32, i32, i32
  }
}

</mosaic_0001>

<llo_original>
// kernel: tpu_custom_call.1
$region0: #{tpu_custom_call.1}
  #allocation0 [shape = 'u32[]', space=smem, size = 0x4, offset = 0x4, fixed_abs, tag = 'smem constant byte address 0x4 - core index']
  #allocation1 [shape = 'u32[144,128]{1,0:T(1,128)}', space=vmem, size = 0x12000, scoped, tag = 'internal scratch']
  #allocation2 [shape = 's32[1]{0}', space=sflag, size = 0x4, scoped, tag = 'scoped memory for tpu_custom_call.1']
  #allocation3 [shape = 'u8[512]{0}', space=smem, size = 0x200, scoped, tag = 'prefetched SMEM operand 0']
  %s0 = inlined_call_operand.vmem [shape: s32[2], index: 0, kind: input, shape index: {}]
  %s1 = inlined_call_operand.hbm [shape: f32[2,16,32], index: 1, kind: input, shape index: {}]
  %s2 = inlined_call_operand.hbm [shape: bf16[32,64], index: 2, kind: input, shape index: {}]
  %s3 = inlined_call_operand.vmem [shape: f32[1,64], index: 3, kind: input, shape index: {}]
  %s4 = inlined_call_operand.hbm [shape: f32[2,16,64], index: 4, kind: input, shape index: {}]
  %s5 = inlined_call_operand.hbm [shape: f32[2,2,64], index: 5, kind: input, shape index: {}]
  %s6 = inlined_call_operand.vmem [shape: bf16[2,64,320], index: 6, kind: input, shape index: {}]
  %s7 = inlined_call_operand.hbm [shape: bf16[2,64,64], index: 7, kind: input, shape index: {}]
  %s8 = inlined_call_operand.hbm [shape: bf16[2,64,256], index: 8, kind: input, shape index: {}]
  %s9 = inlined_call_operand.vmem [shape: bf16[2,128,64], index: 9, kind: input, shape index: {}]
  %s10 = inlined_call_operand.vmem [shape: bf16[64,128], index: 10, kind: input, shape index: {}]
  %s11 = inlined_call_operand.vmem [shape: f32[1,128], index: 11, kind: input, shape index: {}]
  %s12 = inlined_call_operand.hbm [shape: f32[2,16,128], index: 12, kind: output, shape index: {}]
  %s13 = sld [smem:[#allocation0]]
  $region101: #{tpu_custom_call.1} parent=0
    _
  %s15 = ssub.s32 1, %s13
  %s16 = scalar_select 0, %s15, %s13
  %s17 = sshll.u32 %s0, 4
  %s18 = int_to_ptr.vmem [resolvable:$true] %s17
  %20 = dma.vmem_to_smem %s18, 16, [#allocation3], [#allocation2]
  %21 = dma.done [#allocation2], 16
  %22 = sfence
  $region1: #{tpu_custom_call.1} parent=0
    #allocation4 [shape = 'u8[16384]{0}', space=vmem, size = 0x4000, scoped, tag = 'input window, operand 1']
    #allocation5 [shape = 's32[2]{0}', space=sflag, size = 0x8, scoped, tag = 'scoped memory for tpu_custom_call.1']
    #allocation6 [shape = 's32[2]{0}', space=sflag, size = 0x8, scoped, tag = 'scoped memory for tpu_custom_call.1']
    #allocation7 [shape = 'u8[8192]{0}', space=vmem, size = 0x2000, scoped, tag = 'input window, operand 2, single buffered']
    #allocation8 [shape = 's32[1]{0}', space=sflag, size = 0x4, scoped, tag = 'scoped memory for tpu_custom_call.1']
    #allocation9 [shape = 'u8[16384]{0}', space=vmem, size = 0x4000, scoped, tag = 'input window, operand 4, single buffered']
    #allocation10 [shape = 'u8[2048]{0}', space=vmem, size = 0x800, scoped, tag = 'input window, operand 5, single buffered']
    #allocation11 [shape = 's32[1]{0}', space=sflag, size = 0x4, scoped, tag = 'scoped memory for tpu_custom_call.1']
    #allocation12 [shape = 'u8[32768]{0}', space=vmem, size = 0x8000, scoped, tag = 'input window, operand 7, single buffered']
    #allocation13 [shape = 'u8[65536]{0}', space=vmem, size = 0x10000, scoped, tag = 'input window, operand 8, single buffered']
    #allocation14 [shape = 's32[1]{0}', space=sflag, size = 0x4, scoped, tag = 'scoped memory for tpu_custom_call.1']
    #allocation15 [shape = 'u8[16384]{0}', space=vmem, size = 0x4000, scoped, tag = 'output window, operand 0']
    %23 = vsyncpa [#allocation5], 0
    %s24 = scalar_lea.sflag [#allocation5], 1
    %25 = vsyncpa %s24, 0
    %26 = vsyncpa [#allocation8], 0
    %27 = vsyncpa [#allocation11], 0
    %28 = vsyncpa [#allocation14], 0
    %29 = vsyncpa [#allocation6], 0
    %s30 = scalar_lea.sflag [#allocation6], 1
    %31 = vsyncpa %s30, 0
    loop: start=0, step=1, limit=4
    $region2: #{tpu_custom_call.1} parent=1 // loop_pre_header
      _
    $region3: #{tpu_custom_call.1} parent=1 // loop_header
      %s33 = sphi 0, %s37
      %p34 = scmp.ge.s32.totalorder %s33, 4
      %s43 = sphi 0, %s45
      %s46 = sphi 0, %s43
      %s47 = sphi 0, %s46
      %s63 = sphi 0, %s47
      %s67 = sphi 0, %s67
      %s69 = sphi 0, %s67
      %s70 = sphi 0, %s69
      %s84 = sphi 0, %s70
      %s88 = sphi 0, %s88
      %s90 = sphi 0, %s88
      %s91 = sphi 0, %s90
      %s105 = sphi 0, %s91
      %s109 = sphi 0, %s109
      %s111 = sphi 0, %s109
      %s112 = sphi 0, %s111
      %s126 = sphi 0, %s112
      %s130 = sphi 0, %s130
      %s132 = sphi 0, %s130
      %s133 = sphi 0, %s132
      %s147 = sphi 0, %s133
      %s151 = sphi 0, %s151
      %s153 = sphi 0, %s151
      %s154 = sphi 0, %s153
      %s168 = sphi 0, %s154
      %s172 = sphi 0, %s172
      %s174 = sphi 0, %s172
      %s175 = sphi 0, %s174
      %s189 = sphi 0, %s175
      %s193 = sphi 0, %s193
      %s195 = sphi 0, %s193
      %s196 = sphi 0, %s195
      %s210 = sphi 0, %s196
      %s214 = sphi 0, %s214
      %s216 = sphi 0, %s214
      %s217 = sphi 0, %s216
      %s231 = sphi 0, %s217
      %s235 = sphi 0, %s235
      %s237 = sphi 0, %s235
      %s238 = sphi 0, %s237
      %s252 = sphi 0, %s238
      %s256 = sphi 0, %s256
      %s258 = sphi 0, %s256
      %s259 = sphi 0, %s258
      %s273 = sphi 0, %s259
      %s279 = sphi 0, %s281
      %s282 = sphi 0, %s279
      %s283 = sphi 0, %s282
      %s299 = sphi 0, %s283
    $region4: #{tpu_custom_call.1} parent=1 // loop_header_branch
      %36 = sbr.rel (%p34) target = $region8
    $region5: #{tpu_custom_call.1} parent=1 // loop_body
      %s38 = ssub.s32 %s33, 1
      %s39 = ssub.s32 %s33, 2
      %s40 = sadd.s32 %s33, 1
      %s41 = ssub.s32 %s33, %s40
      %p42 = scmp.eq.s32.totalorder %s41, 0
      %s44 = sadd.s32 %s43, 1
      %s45 = scalar_select %p42, %s43, %s44
      %p48 = pneg %p42
      %p49 = scmp.eq.s32.totalorder %s33, 1
      %p50 = por %p48, %p49
      %p51 = scmp.ne.s32.totalorder %s43, %s46
      %p52 = scmp.eq.s32.totalorder %s33, 0
      %p53 = por %p51, %p52
      %p54 = scmp.ne.s32.totalorder %s43, %s46
      %p55 = scmp.eq.s32.totalorder %s38, 1
      %p56 = por %p54, %p55
      %p57 = scmp.ne.s32.totalorder %s46, %s47
      %p58 = scmp.eq.s32.totalorder %s38, 0
      %p59 = por %p57, %p58
      %p60 = scmp.ne.s32.totalorder %s46, %s47
      %p61 = scmp.eq.s32.totalorder %s39, 1
      %p62 = por %p60, %p61
      %p64 = scmp.ne.s32.totalorder %s47, %s63
      %p65 = scmp.eq.s32.totalorder %s39, 0
      %p66 = por %p64, %p65
      %s68 = sadd.s32 %s67, 1
      %p71 = scmp.eq.s32.totalorder %s33, 1
      %p72 = scmp.ne.s32.totalorder %s67, %s69
      %p73 = scmp.eq.s32.totalorder %s33, 0
      %p74 = por %p72, %p73
      %p75 = scmp.ne.s32.totalorder %s67, %s69
      %p76 = scmp.eq.s32.totalorder %s38, 1
      %p77 = por %p75, %p76
      %p78 = scmp.ne.s32.totalorder %s69, %s70
      %p79 = scmp.eq.s32.totalorder %s38, 0
      %p80 = por %p78, %p79
      %p81 = scmp.ne.s32.totalorder %s69, %s70
      %p82 = scmp.eq.s32.totalorder %s39, 1
      %p83 = por %p81, %p82
      %p85 = scmp.ne.s32.totalorder %s70, %s84
      %p86 = scmp.eq.s32.totalorder %s39, 0
      %p87 = por %p85, %p86
      %s89 = sadd.s32 %s88, 1
      %p92 = scmp.eq.s32.totalorder %s33, 1
      %p93 = scmp.ne.s32.totalorder %s88, %s90
      %p94 = scmp.eq.s32.totalorder %s33, 0
      %p95 = por %p93, %p94
      %p96 = scmp.ne.s32.totalorder %s88, %s90
      %p97 = scmp.eq.s32.totalorder %s38, 1
      %p98 = por %p96, %p97
      %p99 = scmp.ne.s32.totalorder %s90, %s91
      %p100 = scmp.eq.s32.totalorder %s38, 0
      %p101 = por %p99, %p100
      %p102 = scmp.ne.s32.totalorder %s90, %s91
      %p103 = scmp.eq.s32.totalorder %s39, 1
      %p104 = por %p102, %p103
      %p106 = scmp.ne.s32.totalorder %s91, %s105
      %p107 = scmp.eq.s32.totalorder %s39, 0
      %p108 = por %p106, %p107
      %s110 = sadd.s32 %s109, 1
      %p113 = scmp.eq.s32.totalorder %s33, 1
      %p114 = scmp.ne.s32.totalorder %s109, %s111
      %p115 = scmp.eq.s32.totalorder %s33, 0
      %p116 = por %p114, %p115
      %p117 = scmp.ne.s32.totalorder %s109, %s111
      %p118 = scmp.eq.s32.totalorder %s38, 1
      %p119 = por %p117, %p118
      %p120 = scmp.ne.s32.totalorder %s111, %s112
      %p121 = scmp.eq.s32.totalorder %s38, 0
      %p122 = por %p120, %p121
      %p123 = scmp.ne.s32.totalorder %s111, %s112
      %p124 = scmp.eq.s32.totalorder %s39, 1
      %p125 = por %p123, %p124
      %p127 = scmp.ne.s32.totalorder %s112, %s126
      %p128 = scmp.eq.s32.totalorder %s39, 0
      %p129 = por %p127, %p128
      %s131 = sadd.s32 %s130, 1
      %p134 = scmp.eq.s32.totalorder %s33, 1
      %p135 = scmp.ne.s32.totalorder %s130, %s132
      %p136 = scmp.eq.s32.totalorder %s33, 0
      %p137 = por %p135, %p136
      %p138 = scmp.ne.s32.totalorder %s130, %s132
      %p139 = scmp.eq.s32.totalorder %s38, 1
      %p140 = por %p138, %p139
      %p141 = scmp.ne.s32.totalorder %s132, %s133
      %p142 = scmp.eq.s32.totalorder %s38, 0
      %p143 = por %p141, %p142
      %p144 = scmp.ne.s32.totalorder %s132, %s133
      %p145 = scmp.eq.s32.totalorder %s39, 1
      %p146 = por %p144, %p145
      %p148 = scmp.ne.s32.totalorder %s133, %s147
      %p149 = scmp.eq.s32.totalorder %s39, 0
      %p150 = por %p148, %p149
      %s152 = sadd.s32 %s151, 1
      %p155 = scmp.eq.s32.totalorder %s33, 1
      %p156 = scmp.ne.s32.totalorder %s151, %s153
      %p157 = scmp.eq.s32.totalorder %s33, 0
      %p158 = por %p156, %p157
      %p159 = scmp.ne.s32.totalorder %s151, %s153
      %p160 = scmp.eq.s32.totalorder %s38, 1
      %p161 = por %p159, %p160
      %p162 = scmp.ne.s32.totalorder %s153, %s154
      %p163 = scmp.eq.s32.totalorder %s38, 0
      %p164 = por %p162, %p163
      %p165 = scmp.ne.s32.totalorder %s153, %s154
      %p166 = scmp.eq.s32.totalorder %s39, 1
      %p167 = por %p165, %p166
      %p169 = scmp.ne.s32.totalorder %s154, %s168
      %p170 = scmp.eq.s32.totalorder %s39, 0
      %p171 = por %p169, %p170
      %s173 = sadd.s32 %s172, 1
      %p176 = scmp.eq.s32.totalorder %s33, 1
      %p177 = scmp.ne.s32.totalorder %s172, %s174
      %p178 = scmp.eq.s32.totalorder %s33, 0
      %p179 = por %p177, %p178
      %p180 = scmp.ne.s32.totalorder %s172, %s174
      %p181 = scmp.eq.s32.totalorder %s38, 1
      %p182 = por %p180, %p181
      %p183 = scmp.ne.s32.totalorder %s174, %s175
      %p184 = scmp.eq.s32.totalorder %s38, 0
      %p185 = por %p183, %p184
      %p186 = scmp.ne.s32.totalorder %s174, %s175
      %p187 = scmp.eq.s32.totalorder %s39, 1
      %p188 = por %p186, %p187
      %p190 = scmp.ne.s32.totalorder %s175, %s189
      %p191 = scmp.eq.s32.totalorder %s39, 0
      %p192 = por %p190, %p191
      %s194 = sadd.s32 %s193, 1
      %p197 = scmp.eq.s32.totalorder %s33, 1
      %p198 = scmp.ne.s32.totalorder %s193, %s195
      %p199 = scmp.eq.s32.totalorder %s33, 0
      %p200 = por %p198, %p199
      %p201 = scmp.ne.s32.totalorder %s193, %s195
      %p202 = scmp.eq.s32.totalorder %s38, 1
      %p203 = por %p201, %p202
      %p204 = scmp.ne.s32.totalorder %s195, %s196
      %p205 = scmp.eq.s32.totalorder %s38, 0
      %p206 = por %p204, %p205
      %p207 = scmp.ne.s32.totalorder %s195, %s196
      %p208 = scmp.eq.s32.totalorder %s39, 1
      %p209 = por %p207, %p208
      %p211 = scmp.ne.s32.totalorder %s196, %s210
      %p212 = scmp.eq.s32.totalorder %s39, 0
      %p213 = por %p211, %p212
      %s215 = sadd.s32 %s214, 1
      %p218 = scmp.eq.s32.totalorder %s33, 1
      %p219 = scmp.ne.s32.totalorder %s214, %s216
      %p220 = scmp.eq.s32.totalorder %s33, 0
      %p221 = por %p219, %p220
      %p222 = scmp.ne.s32.totalorder %s214, %s216
      %p223 = scmp.eq.s32.totalorder %s38, 1
      %p224 = por %p222, %p223
      %p225 = scmp.ne.s32.totalorder %s216, %s217
      %p226 = scmp.eq.s32.totalorder %s38, 0
      %p227 = por %p225, %p226
      %p228 = scmp.ne.s32.totalorder %s216, %s217
      %p229 = scmp.eq.s32.totalorder %s39, 1
      %p230 = por %p228, %p229
      %p232 = scmp.ne.s32.totalorder %s217, %s231
      %p233 = scmp.eq.s32.totalorder %s39, 0
      %p234 = por %p232, %p233
      %s236 = sadd.s32 %s235, 1
      %p239 = scmp.eq.s32.totalorder %s33, 1
      %p240 = scmp.ne.s32.totalorder %s235, %s237
      %p241 = scmp.eq.s32.totalorder %s33, 0
      %p242 = por %p240, %p241
      %p243 = scmp.ne.s32.totalorder %s235, %s237
      %p244 = scmp.eq.s32.totalorder %s38, 1
      %p245 = por %p243, %p244
      %p246 = scmp.ne.s32.totalorder %s237, %s238
      %p247 = scmp.eq.s32.totalorder %s38, 0
      %p248 = por %p246, %p247
      %p249 = scmp.ne.s32.totalorder %s237, %s238
      %p250 = scmp.eq.s32.totalorder %s39, 1
      %p251 = por %p249, %p250
      %p253 = scmp.ne.s32.totalorder %s238, %s252
      %p254 = scmp.eq.s32.totalorder %s39, 0
      %p255 = por %p253, %p254
      %s257 = sadd.s32 %s256, 1
      %p260 = scmp.eq.s32.totalorder %s33, 1
      %p261 = scmp.ne.s32.totalorder %s256, %s258
      %p262 = scmp.eq.s32.totalorder %s33, 0
      %p263 = por %p261, %p262
      %p264 = scmp.ne.s32.totalorder %s256, %s258
      %p265 = scmp.eq.s32.totalorder %s38, 1
      %p266 = por %p264, %p265
      %p267 = scmp.ne.s32.totalorder %s258, %s259
      %p268 = scmp.eq.s32.totalorder %s38, 0
      %p269 = por %p267, %p268
      %p270 = scmp.ne.s32.totalorder %s258, %s259
      %p271 = scmp.eq.s32.totalorder %s39, 1
      %p272 = por %p270, %p271
      %p274 = scmp.ne.s32.totalorder %s259, %s273
      %p275 = scmp.eq.s32.totalorder %s39, 0
      %p276 = por %p274, %p275
      %s277 = ssub.s32 %s33, %s40
      %p278 = scmp.eq.s32.totalorder %s277, 0
      %s280 = sadd.s32 %s279, 1
      %s281 = scalar_select %p278, %s279, %s280
      %p284 = pneg %p278
      %p285 = scmp.eq.s32.totalorder %s33, 1
      %p286 = por %p284, %p285
      %p287 = scmp.ne.s32.totalorder %s279, %s282
      %p288 = scmp.eq.s32.totalorder %s33, 0
      %p289 = por %p287, %p288
      %p290 = scmp.ne.s32.totalorder %s279, %s282
      %p291 = scmp.eq.s32.totalorder %s38, 1
      %p292 = por %p290, %p291
      %p293 = scmp.ne.s32.totalorder %s282, %s283
      %p294 = scmp.eq.s32.totalorder %s38, 0
      %p295 = por %p293, %p294
      %p296 = scmp.ne.s32.totalorder %s282, %s283
      %p297 = scmp.eq.s32.totalorder %s39, 1
      %p298 = por %p296, %p297
      %p300 = scmp.ne.s32.totalorder %s283, %s299
      %p301 = scmp.eq.s32.totalorder %s39, 0
      %p302 = por %p300, %p301
      %p303 = scmp.le.s32.totalorder 1, %s33
      %p304 = scmp.lt.s32.totalorder %s33, 3
      %p305 = pnand %p303, %p304
      %p306 = pneg %p305
      // Predicated region
      $region9: #{tpu_custom_call.1} parent=5 // pred_check
        _
      $region10: #{tpu_custom_call.1} parent=5 // pred_check_branch
        %308 = sbr.rel (%p305) target = $region12
      $region11: #{tpu_custom_call.1} parent=5 // pred_region
        %s309 = ssub.s32 %s33, 1
        // Predicated region
        $region13: #{tpu_custom_call.1} parent=11 // pred_check
          %p310 = pneg %p80
        $region14: #{tpu_custom_call.1} parent=11 // pred_check_branch
          %312 = sbr.rel (%p310) target = $region16
        $region15: #{tpu_custom_call.1} parent=11 // pred_region
          %s314 = ssub.s32 256, 256
          %315 = vsyncadd [#allocation8], %s314
          %s316 = sshll.u32 [#allocation7], 4
          %s317 = int_to_ptr.vmem [resolvable:$true] %s316
          %322 = dma.hbm_to_vmem [thread:$0]  %s2, 256, %s317, [#allocation8], 64, 64, 4
        $region16: #{tpu_custom_call.1} parent=11 // pred_fallthru
          _
        // Predicated region
        $region17: #{tpu_custom_call.1} parent=11 // pred_check
          %p323 = pneg %p101
        $region18: #{tpu_custom_call.1} parent=11 // pred_check_branch
          %325 = sbr.rel (%p323) target = $region20
        $region19: #{tpu_custom_call.1} parent=11 // pred_region
          _
        $region20: #{tpu_custom_call.1} parent=11 // pred_fallthru
          _
        // Predicated region
        $region21: #{tpu_custom_call.1} parent=11 // pred_check
          %p326 = pneg %p122
        $region22: #{tpu_custom_call.1} parent=11 // pred_check_branch
          %328 = sbr.rel (%p326) target = $region24
        $region23: #{tpu_custom_call.1} parent=11 // pred_region
          %s330 = ssub.s32 512, 512
          %331 = vsyncadd [#allocation8], %s330
          %s332 = sshll.u32 [#allocation9], 4
          %s333 = int_to_ptr.vmem [resolvable:$true] %s332
          %338 = dma.hbm_to_vmem [thread:$0]  %s4, 512, %s333, [#allocation8], 128, 128, 8
        $region24: #{tpu_custom_call.1} parent=11 // pred_fallthru
          _
        // Predicated region
        $region25: #{tpu_custom_call.1} parent=11 // pred_check
          %p339 = pneg %p143
        $region26: #{tpu_custom_call.1} parent=11 // pred_check_branch
          %341 = sbr.rel (%p339) target = $region28
        $region27: #{tpu_custom_call.1} parent=11 // pred_region
          %s343 = ssub.s32 64, 64
          %344 = vsyncadd [#allocation11], %s343
          %s345 = sshll.u32 [#allocation10], 4
          %s346 = int_to_ptr.vmem [resolvable:$true] %s345
          %351 = dma.hbm_to_vmem [thread:$0]  %s5, 64, %s346, [#allocation11], 32, 32, 2
        $region28: #{tpu_custom_call.1} parent=11 // pred_fallthru
          _
        // Predicated region
        $region29: #{tpu_custom_call.1} parent=11 // pred_check
          %p352 = pneg %p164
        $region30: #{tpu_custom_call.1} parent=11 // pred_check_branch
          %354 = sbr.rel (%p352) target = $region32
        $region31: #{tpu_custom_call.1} parent=11 // pred_region
          _
        $region32: #{tpu_custom_call.1} parent=11 // pred_fallthru
          _
        // Predicated region
        $region33: #{tpu_custom_call.1} parent=11 // pred_check
          %p355 = pneg %p185
        $region34: #{tpu_custom_call.1} parent=11 // pred_check_branch
          %357 = sbr.rel (%p355) target = $region36
        $region35: #{tpu_custom_call.1} parent=11 // pred_region
          %s359 = ssub.s32 1024, 1024
          %360 = vsyncadd [#allocation11], %s359
          %s361 = sshll.u32 [#allocation12], 4
          %s362 = int_to_ptr.vmem [resolvable:$true] %s361
          %367 = dma.hbm_to_vmem [thread:$0]  %s7, 1024, %s362, [#allocation11], 64, 64, 4
        $region36: #{tpu_custom_call.1} parent=11 // pred_fallthru
          _
        // Predicated region
        $region37: #{tpu_custom_call.1} parent=11 // pred_check
          %p368 = pneg %p206
        $region38: #{tpu_custom_call.1} parent=11 // pred_check_branch
          %370 = sbr.rel (%p368) target = $region40
        $region39: #{tpu_custom_call.1} parent=11 // pred_region
          %s372 = ssub.s32 2048, 2048
          %373 = vsyncadd [#allocation14], %s372
          %s374 = sshll.u32 [#allocation13], 4
          %s375 = int_to_ptr.vmem [resolvable:$true] %s374
          %380 = dma.hbm_to_vmem [thread:$0]  %s8, 2048, %s375, [#allocation14], 128, 128, 8
        $region40: #{tpu_custom_call.1} parent=11 // pred_fallthru
          _
        // Predicated region
        $region41: #{tpu_custom_call.1} parent=11 // pred_check
          %p381 = pneg %p227
        $region42: #{tpu_custom_call.1} parent=11 // pred_check_branch
          %383 = sbr.rel (%p381) target = $region44
        $region43: #{tpu_custom_call.1} parent=11 // pred_region
          _
        $region44: #{tpu_custom_call.1} parent=11 // pred_fallthru
          _
        // Predicated region
        $region45: #{tpu_custom_call.1} parent=11 // pred_check
          %p384 = pneg %p248
        $region46: #{tpu_custom_call.1} parent=11 // pred_check_branch
          %386 = sbr.rel (%p384) target = $region48
        $region47: #{tpu_custom_call.1} parent=11 // pred_region
          _
        $region48: #{tpu_custom_call.1} parent=11 // pred_fallthru
          _
        // Predicated region
        $region49: #{tpu_custom_call.1} parent=11 // pred_check
          %p387 = pneg %p269
        $region50: #{tpu_custom_call.1} parent=11 // pred_check_branch
          %389 = sbr.rel (%p387) target = $region52
        $region51: #{tpu_custom_call.1} parent=11 // pred_region
          _
        $region52: #{tpu_custom_call.1} parent=11 // pred_fallthru
          _
      $region12: #{tpu_custom_call.1} parent=5 // pred_fallthru
        _
      %p390 = scmp.lt.s32.totalorder %s33, 2
      // Predicated region
      $region53: #{tpu_custom_call.1} parent=5 // pred_check
        %p391 = pneg %p390
      $region54: #{tpu_custom_call.1} parent=5 // pred_check_branch
        %393 = sbr.rel (%p391) target = $region56
      $region55: #{tpu_custom_call.1} parent=5 // pred_region
        // Predicated region
        $region57: #{tpu_custom_call.1} parent=55 // pred_check
          %p394 = pneg %p53
        $region58: #{tpu_custom_call.1} parent=55 // pred_check_branch
          %396 = sbr.rel (%p394) target = $region60
        $region59: #{tpu_custom_call.1} parent=55 // pred_region
          %s397 = sand.u32 %s43, 1
          %s398 = scalar_lea.sflag [#allocation5], %s397
          %s399 = sand.u32 %s43, 1
          %s400 = smul.addr %s399, 16
          %s401 = scalar_lea.vmem [#allocation4], %s400
          %s403 = ssub.s32 256, 256
          %404 = vsyncadd %s398, %s403
          %s405 = smul.addr %s33, 2
          %s406 = smul.addr %s405, 128
          %s407 = scalar_lea.hbm %s1, %s406
          %s408 = sshll.u32 %s401, 4
          %s409 = int_to_ptr.vmem [resolvable:$true] %s408
          %414 = dma.hbm_to_vmem [thread:$0]  %s407, 256, %s409, %s398, 128, 128, 8
        $region60: #{tpu_custom_call.1} parent=55 // pred_fallthru
          _
      $region56: #{tpu_custom_call.1} parent=5 // pred_fallthru
        _
      %p415 = scmp.le.s32.totalorder 1, %s33
      %p416 = scmp.lt.s32.totalorder %s33, 3
      %p417 = pnand %p415, %p416
      %p418 = pneg %p417
      // Predicated region
      $region61: #{tpu_custom_call.1} parent=5 // pred_check
        _
      $region62: #{tpu_custom_call.1} parent=5 // pred_check_branch
        %420 = sbr.rel (%p417) target = $region64
      $region63: #{tpu_custom_call.1} parent=5 // pred_region
        %s421 = ssub.s32 %s33, 1
        %s422 = sand.u32 %s46, 1
        %s423 = scalar_lea.sflag [#allocation5], %s422
        %s424 = sand.u32 %s46, 1
        %s425 = smul.addr %s424, 16
        %s426 = scalar_lea.vmem [#allocation4], %s425
        // Predicated region
        $region65: #{tpu_custom_call.1} parent=63 // pred_check
          %p427 = pneg %p59
        $region66: #{tpu_custom_call.1} parent=63 // pred_check_branch
          %429 = sbr.rel (%p427) target = $region68
        $region67: #{tpu_custom_call.1} parent=63 // pred_region
          %430 = dma.done %s423, 256
        $region68: #{tpu_custom_call.1} parent=63 // pred_fallthru
          _
        // Predicated region
        $region69: #{tpu_custom_call.1} parent=63 // pred_check
          %p431 = pneg %p80
        $region70: #{tpu_custom_call.1} parent=63 // pred_check_branch
          %433 = sbr.rel (%p431) target = $region72
        $region71: #{tpu_custom_call.1} parent=63 // pred_region
          %434 = dma.done [#allocation8], 256
        $region72: #{tpu_custom_call.1} parent=63 // pred_fallthru
          _
        // Predicated region
        $region73: #{tpu_custom_call.1} parent=63 // pred_check
          %p435 = pneg %p122
        $region74: #{tpu_custom_call.1} parent=63 // pred_check_branch
          %437 = sbr.rel (%p435) target = $region76
        $region75: #{tpu_custom_call.1} parent=63 // pred_region
          %438 = dma.done [#allocation8], 512
        $region76: #{tpu_custom_call.1} parent=63 // pred_fallthru
          _
        // Predicated region
        $region77: #{tpu_custom_call.1} parent=63 // pred_check
          %p439 = pneg %p143
        $region78: #{tpu_custom_call.1} parent=63 // pred_check_branch
          %441 = sbr.rel (%p439) target = $region80
        $region79: #{tpu_custom_call.1} parent=63 // pred_region
          %442 = dma.done [#allocation11], 64
        $region80: #{tpu_custom_call.1} parent=63 // pred_fallthru
          _
        // Predicated region
        $region81: #{tpu_custom_call.1} parent=63 // pred_check
          %p443 = pneg %p185
        $region82: #{tpu_custom_call.1} parent=63 // pred_check_branch
          %445 = sbr.rel (%p443) target = $region84
        $region83: #{tpu_custom_call.1} parent=63 // pred_region
          %446 = dma.done [#allocation11], 1024
        $region84: #{tpu_custom_call.1} parent=63 // pred_fallthru
          _
        // Predicated region
        $region85: #{tpu_custom_call.1} parent=63 // pred_check
          %p447 = pneg %p206
        $region86: #{tpu_custom_call.1} parent=63 // pred_check_branch
          %449 = sbr.rel (%p447) target = $region88
        $region87: #{tpu_custom_call.1} parent=63 // pred_region
          %450 = dma.done [#allocation14], 2048
        $region88: #{tpu_custom_call.1} parent=63 // pred_fallthru
          _
        %s451 = sand.u32 %s46, 1
        %s452 = scalar_lea.sflag [#allocation5], %s451
        %s453 = sand.u32 %s46, 1
        %s454 = smul.addr %s453, 16
        %s455 = scalar_lea.vmem [#allocation4], %s454
        %p456 = pneg %p59
        %p457 = pneg %p56
        %p458 = pneg %p80
        %p459 = pneg %p77
        %p460 = pneg %p101
        %p461 = pneg %p98
        %p462 = pneg %p122
        %p463 = pneg %p119
        %p464 = pneg %p143
        %p465 = pneg %p140
        %p466 = pneg %p164
        %p467 = pneg %p161
        %p468 = pneg %p185
        %p469 = pneg %p182
        %p470 = pneg %p206
        %p471 = pneg %p203
        %p472 = pneg %p227
        %p473 = pneg %p224
        %p474 = pneg %p248
        %p475 = pneg %p245
        %p476 = pneg %p269
        %p477 = pneg %p266
        %p478 = pneg %p295
        %p479 = pneg %p292
        %s480 = sand.u32 %s282, 1
        %s481 = scalar_lea.sflag [#allocation6], %s480
        %s482 = sand.u32 %s282, 1
        %s483 = smul.addr %s482, 16
        %s484 = scalar_lea.vmem [#allocation15], %s483
        %v486 = vld [vmem:[%s426] sm:$0xff]
        %v487 = vld [vmem:[%s426 + $0x8] sm:$0xff]
        %v488 = vpack.c.bf16 %v487, %v486
        %v489 = vld [vmem:[#allocation7] sm:$0xf]
        %v490 = vld [vmem:[#allocation7 + $0x4] sm:$0xf]
        %v491 = vld [vmem:[#allocation7 + $0x8] sm:$0xf]
        %v492 = vld [vmem:[#allocation7 + $0xc] sm:$0xf]
        %v493 = vld [vmem:[%s3] sm:$0x1]
        %v495 = vlaneseq
        %v496 = vshrl.u32 %v495, 7
        %v497 = vsub.s32 0, %v496
        %v498 = vrot.slane %v493, %v497
        %v504 = vunpack.c.l.b16 %v489
        %v505 = vunpack.c.l.b16 %v490
        %v506 = vunpack.c.l.b16 %v491
        %v507 = vunpack.c.l.b16 %v492
        %v508 = vpack.c.b16 %v505, %v504
        %v509 = vpack.c.b16 %v507, %v506
        %vm512 = vcmask 261120
        %v514 = vsel %vm512, %v488, 0
        %516 = vmatprep.subr.bf16.mxu0 0
        %517 = vmatpush1.bf16.msra.mxu0 %v508
        %518 = vmatprep.subr.bf16.mxu0 0
        %519 = vmatpush1.bf16.msra.mxu0 %v509
        %520 = vmatprep.subr.bf16.mxu0 0
        %521 = vmatpush1.bf16.msra.mxu0 0
        %522 = vmatprep.subr.bf16.mxu0 0
        %523 = vmatpush1.bf16.msra.mxu0 0
        %524 = vmatprep.subr.bf16.mxu0 0
        %525 = vmatpush1.bf16.msra.mxu0 0
        %526 = vmatprep.subr.bf16.mxu0 0
        %527 = vmatpush1.bf16.msra.mxu0 0
        %528 = vmatprep.subr.bf16.mxu0 0
        %529 = vmatpush1.bf16.msra.mxu0 0
        %530 = vmatprep.subr.bf16.mxu0 0
        %531 = vmatpush1.bf16.msra.mxu0 0
        %532 = vmatprep.subr.bf16.mxu0 0
        %533 = vmatpush1.bf16.msra.mxu0 0
        %534 = vmatprep.subr.bf16.mxu0 0
        %535 = vmatpush1.bf16.msra.mxu0 0
        %536 = vmatprep.subr.bf16.mxu0 0
        %537 = vmatpush1.bf16.msra.mxu0 0
        %538 = vmatprep.subr.bf16.mxu0 0
        %539 = vmatpush1.bf16.msra.mxu0 0
        %540 = vmatprep.subr.bf16.mxu0 0
        %541 = vmatpush1.bf16.msra.mxu0 0
        %542 = vmatprep.subr.bf16.mxu0 0
        %543 = vmatpush1.bf16.msra.mxu0 0
        %544 = vmatprep.subr.bf16.mxu0 0
        %545 = vmatpush1.bf16.msra.mxu0 0
        %546 = vmatprep.subr.bf16.mxu0 0
        %547 = vmatpush1.bf16.msra.mxu0 0
        %548 = vmatprep.mubr.bf16.mxu0 0
        %549 = vmatmul.mubr.bf16.gmra.mrb[0].mxu0 %v514
        %v550 = vpop.f32.mrb[0].mxu0
        %v551 = vadd.f32 %v498, %v550
        %v552 = vpop.f32.mrb[0].mxu0
        %v553 = vpop.f32.mrb[0].mxu0
        %v554 = vadd.f32 %v498, %v553
        %v555 = vpop.f32.mrb[0].mxu0
        %556 = vdwg.mxu0
        %s557 = sld [smem:[#allocation3 + %s38]]
        %v558 = vlaneseq
        %v559 = vshrl.u32 %v558, 7
        %v560 = vadd.s32 %v559, 8
        %v561 = vlaneseq
        %v562 = vand.u32 %v561, 127
        %vm563 = vcmp.le.s32.totalorder %v562, %v559
        %vm564 = vcmp.le.s32.totalorder %v562, %v560
        %v565 = vstv %s557
        %vm566 = vcmp.lt.s32.totalorder %v562, %v565
        %vm567 = vmand %vm563, %vm566
        %vm568 = vmand %vm564, %vm566
        %v569 = vsel %vm567, 0.0, -1e+30
        %v570 = vsel %vm568, 0.0, -1e+30
        %v571 = vld [vmem:[#allocation9] sm:$0xff]
        %v572 = vld [vmem:[#allocation9 + $0x8] sm:$0xff]
        %s573 = scalar_lea.vmem [#allocation9], 16
        %v574 = vld [vmem:[%s573] sm:$0xff]
        %v575 = vld [vmem:[%s573 + $0x8] sm:$0xff]
        %v576 = vld [vmem:[#allocation10] sm:$0x3]
        %v577 = vmul.f32 %v551, %v551
        %v578 = vmul.f32 %v554, %v554
        %vm579 = vcmask 523264
        %v580 = vsel %vm579, %v577, 0.0
        %581 = vadd.xlane.f32.xlu0 %v580
        %v582 = vpop.xlane.xlu0 %581
        %v583 = vsel %vm579, %v578, 0.0
        %584 = vadd.xlane.f32.xlu0 %v583
        %v585 = vpop.xlane.xlu0 %584
        %v586 = vrcp.pop 64.0
        %v587 = vmul.f32 %v582, %v586
        %v588 = vmul.f32 %v585, %v586
        %v589 = vadd.f32 %v587, 1e-06
        %v590 = vadd.f32 %v588, 1e-06
        %v591 = vrsqrt.pop %v589
        %v592 = vrsqrt.pop %v590
        %v593 = vmul.f32 %v551, %v591
        %v594 = vmul.f32 %v554, %v592
        %v595 = vlaneseq
        %v596 = vshrl.u32 %v595, 7
        %v597 = vsub.s32 0, %v596
        %v598 = vrot.slane %v576, %v597
        %v599 = vmul.f32 %v593, %v598
        %v600 = vmul.f32 %v594, %v598
        %v601 = vpack.c.bf16 %v600, %v599
        %v602 = vld [vmem:[%s6] sm:$0xff]
        %v603 = vld [vmem:[%s6 + $0x8] sm:$0xf]
        %v604 = vld [vmem:[%s6 + $0xc] sm:$0xff]
        %v605 = vld [vmem:[%s6 + $0x14] sm:$0xf]
        %v606 = vld [vmem:[%s6 + $0x18] sm:$0xff]
        %v607 = vld [vmem:[%s6 + $0x20] sm:$0xf]
        %v608 = vld [vmem:[%s6 + $0x24] sm:$0xff]
        %v609 = vld [vmem:[%s6 + $0x2c] sm:$0xf]
        %v610 = vld [vmem:[%s6 + $0x30] sm:$0xff]
        %v611 = vld [vmem:[%s6 + $0x38] sm:$0xf]
        %v612 = vld [vmem:[%s6 + $0x3c] sm:$0xff]
        %v613 = vld [vmem:[%s6 + $0x44] sm:$0xf]
        %v614 = vld [vmem:[%s6 + $0x48] sm:$0xff]
        %v615 = vld [vmem:[%s6 + $0x50] sm:$0xf]
        %v616 = vld [vmem:[%s6 + $0x54] sm:$0xff]
        %v617 = vld [vmem:[%s6 + $0x5c] sm:$0xf]
        %v634 = vunpack.c.l.b16 %v602
        %v635 = vunpack.c.h.b16 %v602
        %v636 = vunpack.c.l.b16 %v603
        %v637 = vunpack.c.l.b16 %v604
        %v638 = vunpack.c.h.b16 %v604
        %v639 = vunpack.c.l.b16 %v605
        %v640 = vunpack.c.l.b16 %v606
        %v641 = vunpack.c.h.b16 %v606
        %v642 = vunpack.c.l.b16 %v607
        %v643 = vunpack.c.l.b16 %v608
        %v644 = vunpack.c.h.b16 %v608
        %v645 = vunpack.c.l.b16 %v609
        %v646 = vunpack.c.l.b16 %v610
        %v647 = vunpack.c.h.b16 %v610
        %v648 = vunpack.c.l.b16 %v611
        %v649 = vunpack.c.l.b16 %v612
        %v650 = vunpack.c.h.b16 %v612
        %v651 = vunpack.c.l.b16 %v613
        %v652 = vunpack.c.l.b16 %v614
        %v653 = vunpack.c.h.b16 %v614
        %v654 = vunpack.c.l.b16 %v615
        %v655 = vunpack.c.l.b16 %v616
        %v656 = vunpack.c.h.b16 %v616
        %v657 = vunpack.c.l.b16 %v617
        %v658 = vpack.c.b16 %v637, %v634
        %v659 = vpack.c.b16 %v638, %v635
        %v660 = vpack.c.b16 %v639, %v636
        %v661 = vpack.c.b16 %v643, %v640
        %v662 = vpack.c.b16 %v644, %v641
        %v663 = vpack.c.b16 %v645, %v642
        %v664 = vpack.c.b16 %v649, %v646
        %v665 = vpack.c.b16 %v650, %v647
        %v666 = vpack.c.b16 %v651, %v648
        %v667 = vpack.c.b16 %v655, %v652
        %v668 = vpack.c.b16 %v656, %v653
        %v669 = vpack.c.b16 %v657, %v654
        %v683 = vsel %vm579, %v601, 0
        %685 = vmatprep.subr.bf16.mxu0 %v659
        %686 = vmatpush1.bf16.msra.mxu0 %v658
        %687 = vmatprep.subr.bf16.mxu0 %v662
        %688 = vmatpush1.bf16.msra.mxu0 %v661
        %689 = vmatprep.subr.bf16.mxu0 %v665
        %690 = vmatpush1.bf16.msra.mxu0 %v664
        %691 = vmatprep.subr.bf16.mxu0 %v668
        %692 = vmatpush1.bf16.msra.mxu0 %v667
        %693 = vmatprep.subr.bf16.mxu0 0
        %694 = vmatpush1.bf16.msra.mxu0 0
        %695 = vmatprep.subr.bf16.mxu0 0
        %696 = vmatpush1.bf16.msra.mxu0 0
        %697 = vmatprep.subr.bf16.mxu0 0
        %698 = vmatpush1.bf16.msra.mxu0 0
        %699 = vmatprep.subr.bf16.mxu0 0
        %700 = vmatpush1.bf16.msra.mxu0 0
        %701 = vmatprep.subr.bf16.mxu0 0
        %702 = vmatpush1.bf16.msra.mxu0 0
        %703 = vmatprep.subr.bf16.mxu0 0
        %704 = vmatpush1.bf16.msra.mxu0 0
        %705 = vmatprep.subr.bf16.mxu0 0
        %706 = vmatpush1.bf16.msra.mxu0 0
        %707 = vmatprep.subr.bf16.mxu0 0
        %708 = vmatpush1.bf16.msra.mxu0 0
        %709 = vmatprep.subr.bf16.mxu0 0
        %710 = vmatpush1.bf16.msra.mxu0 0
        %711 = vmatprep.subr.bf16.mxu0 0
        %712 = vmatpush1.bf16.msra.mxu0 0
        %713 = vmatprep.subr.bf16.mxu0 0
        %714 = vmatpush1.bf16.msra.mxu0 0
        %715 = vmatprep.subr.bf16.mxu0 0
        %716 = vmatpush1.bf16.msra.mxu0 0
        %717 = vmatprep.mubr.bf16.mxu0 0
        %718 = vmatmul.mubr.bf16.gmra.mrb[0].mxu0 %v683
        %v719 = vpop.f32.mrb[0].mxu0
        %v720 = vadd.f32 0.0, %v719
        %v721 = vpop.f32.mrb[0].mxu0
        %v722 = vadd.f32 0.0, %v721
        %v723 = vpop.f32.mrb[0].mxu0
        %v724 = vadd.f32 0.0, %v723
        %v725 = vpop.f32.mrb[0].mxu0
        %v726 = vadd.f32 0.0, %v725
        %727 = vdwg.mxu0
        %728 = vmatprep.subr.bf16.mxu0 0
        %729 = vmatpush1.bf16.msra.mxu0 %v660
        %730 = vmatprep.subr.bf16.mxu0 0
        %731 = vmatpush1.bf16.msra.mxu0 %v663
        %732 = vmatprep.subr.bf16.mxu0 0
        %733 = vmatpush1.bf16.msra.mxu0 %v666
        %734 = vmatprep.subr.bf16.mxu0 0
        %735 = vmatpush1.bf16.msra.mxu0 %v669
        %736 = vmatprep.subr.bf16.mxu0 0
        %737 = vmatpush1.bf16.msra.mxu0 0
        %738 = vmatprep.subr.bf16.mxu0 0
        %739 = vmatpush1.bf16.msra.mxu0 0
        %740 = vmatprep.subr.bf16.mxu0 0
        %741 = vmatpush1.bf16.msra.mxu0 0
        %742 = vmatprep.subr.bf16.mxu0 0
        %743 = vmatpush1.bf16.msra.mxu0 0
        %744 = vmatprep.subr.bf16.mxu0 0
        %745 = vmatpush1.bf16.msra.mxu0 0
        %746 = vmatprep.subr.bf16.mxu0 0
        %747 = vmatpush1.bf16.msra.mxu0 0
        %748 = vmatprep.subr.bf16.mxu0 0
        %749 = vmatpush1.bf16.msra.mxu0 0
        %750 = vmatprep.subr.bf16.mxu0 0
        %751 = vmatpush1.bf16.msra.mxu0 0
        %752 = vmatprep.subr.bf16.mxu0 0
        %753 = vmatpush1.bf16.msra.mxu0 0
        %754 = vmatprep.subr.bf16.mxu0 0
        %755 = vmatpush1.bf16.msra.mxu0 0
        %756 = vmatprep.subr.bf16.mxu0 0
        %757 = vmatpush1.bf16.msra.mxu0 0
        %758 = vmatprep.subr.bf16.mxu0 0
        %759 = vmatpush1.bf16.msra.mxu0 0
        %760 = vmatprep.mubr.bf16.mxu0 0
        %761 = vmatmul.mubr.bf16.gmra.mrb[0].mxu0 %v683
        %v762 = vpop.f32.mrb[0].mxu0
        %v763 = vadd.f32 0.0, %v762
        %v764 = vpop.f32.mrb[0].mxu0
        %v765 = vpop.f32.mrb[0].mxu0
        %v766 = vadd.f32 0.0, %v765
        %v767 = vpop.f32.mrb[0].mxu0
        %768 = vdwg.mxu0
        %v769 = vmul.f32 %v720, %v571
        %v770 = vmul.f32 %v724, %v572
        %773 = vrot.lane.b32.xlu0 %v574, 64
        %v774 = vpop.permute.xlu0 %773
        %775 = vrot.lane.b32.xlu0 %v575, 64
        %v776 = vpop.permute.xlu0 %775
        %v779 = vmul.f32 %v720, %v774
        %v780 = vmul.f32 %v724, %v776
        %783 = vrot.lane.b32.xlu0 %v779, 64
        %v784 = vpop.permute.xlu0 %783
        %785 = vrot.lane.b32.xlu0 %v780, 64
        %v786 = vpop.permute.xlu0 %785
        %v789 = vadd.f32 %v769, %v784
        %v790 = vadd.f32 %v770, %v786
        %v791 = vpack.c.bf16 %v790, %v789
        %v792 = vmul.f32 %v722, %v571
        %v793 = vmul.f32 %v726, %v572
        %v794 = vmul.f32 %v722, %v774
        %v795 = vmul.f32 %v726, %v776
        %798 = vrot.lane.b32.xlu0 %v794, 64
        %v799 = vpop.permute.xlu0 %798
        %800 = vrot.lane.b32.xlu0 %v795, 64
        %v801 = vpop.permute.xlu0 %800
        %v804 = vadd.f32 %v792, %v799
        %v805 = vadd.f32 %v793, %v801
        %v806 = vpack.c.bf16 %v805, %v804
        %v807 = vpack.c.bf16 %v766, %v763
        %vm808 = vcmask 130048
        %v810 = vsel %vm808, %v791, 0
        %v813 = vsel %vm808, %v806, 0
        %815 = vmatprep.subr.bf16.mxu0 0
        %816 = vmatpush1.bf16.xpose.msra.mxu0 %v813
        %817 = vmatprep.subr.bf16.mxu0 0
        %818 = vmatpush1.bf16.xpose.msra.mxu0 0
        %819 = vmatprep.subr.bf16.mxu0 0
        %820 = vmatpush1.bf16.xpose.msra.mxu0 0
        %821 = vmatprep.subr.bf16.mxu0 0
        %822 = vmatpush1.bf16.xpose.msra.mxu0 0
        %823 = vmatprep.subr.bf16.mxu0 0
        %824 = vmatpush1.bf16.xpose.msra.mxu0 0
        %825 = vmatprep.subr.bf16.mxu0 0
        %826 = vmatpush1.bf16.xpose.msra.mxu0 0
        %827 = vmatprep.subr.bf16.mxu0 0
        %828 = vmatpush1.bf16.xpose.msra.mxu0 0
        %829 = vmatprep.subr.bf16.mxu0 0
        %830 = vmatpush1.bf16.xpose.msra.mxu0 0
        %831 = vmatprep.subr.bf16.mxu0 0
        %832 = vmatpush1.bf16.xpose.msra.mxu0 0
        %833 = vmatprep.subr.bf16.mxu0 0
        %834 = vmatpush1.bf16.xpose.msra.mxu0 0
        %835 = vmatprep.subr.bf16.mxu0 0
        %836 = vmatpush1.bf16.xpose.msra.mxu0 0
        %837 = vmatprep.subr.bf16.mxu0 0
        %838 = vmatpush1.bf16.xpose.msra.mxu0 0
        %839 = vmatprep.subr.bf16.mxu0 0
        %840 = vmatpush1.bf16.xpose.msra.mxu0 0
        %841 = vmatprep.subr.bf16.mxu0 0
        %842 = vmatpush1.bf16.xpose.msra.mxu0 0
        %843 = vmatprep.subr.bf16.mxu0 0
        %844 = vmatpush1.bf16.xpose.msra.mxu0 0
        %845 = vmatprep.subr.bf16.mxu0 0
        %846 = vmatpush1.bf16.xpose.msra.mxu0 0
        %847 = vmatprep.mubr.bf16.mxu0 0
        %848 = vmatmul.mubr.bf16.gmra.mrb[0].mxu0 %v810
        %v849 = vpop.f32.mrb[0].mxu0
        %v850 = vadd.f32 0.0, %v849
        %v851 = vpop.f32.mrb[0].mxu0
        %v852 = vpop.f32.mrb[0].mxu0
        %v853 = vadd.f32 0.0, %v852
        %v854 = vpop.f32.mrb[0].mxu0
        %855 = vdwg.mxu0
        %857 = vrot.lane.b32.xlu0 %v791, 112
        %v858 = vpop.permute.xlu0 %857
        %860 = vrot.lane.b32.xlu0 %v806, 112
        %v861 = vpop.permute.xlu0 %860
        %v863 = vsel %vm808, %v858, 0
        %v866 = vsel %vm808, %v861, 0
        %868 = vmatprep.subr.bf16.mxu0 0
        %869 = vmatpush1.bf16.xpose.msra.mxu0 %v866
        %870 = vmatprep.subr.bf16.mxu0 0
        %871 = vmatpush1.bf16.xpose.msra.mxu0 0
        %872 = vmatprep.subr.bf16.mxu0 0
        %873 = vmatpush1.bf16.xpose.msra.mxu0 0
        %874 = vmatprep.subr.bf16.mxu0 0
        %875 = vmatpush1.bf16.xpose.msra.mxu0 0
        %876 = vmatprep.subr.bf16.mxu0 0
        %877 = vmatpush1.bf16.xpose.msra.mxu0 0
        %878 = vmatprep.subr.bf16.mxu0 0
        %879 = vmatpush1.bf16.xpose.msra.mxu0 0
        %880 = vmatprep.subr.bf16.mxu0 0
        %881 = vmatpush1.bf16.xpose.msra.mxu0 0
        %882 = vmatprep.subr.bf16.mxu0 0
        %883 = vmatpush1.bf16.xpose.msra.mxu0 0
        %884 = vmatprep.subr.bf16.mxu0 0
        %885 = vmatpush1.bf16.xpose.msra.mxu0 0
        %886 = vmatprep.subr.bf16.mxu0 0
        %887 = vmatpush1.bf16.xpose.msra.mxu0 0
        %888 = vmatprep.subr.bf16.mxu0 0
        %889 = vmatpush1.bf16.xpose.msra.mxu0 0
        %890 = vmatprep.subr.bf16.mxu0 0
        %891 = vmatpush1.bf16.xpose.msra.mxu0 0
        %892 = vmatprep.subr.bf16.mxu0 0
        %893 = vmatpush1.bf16.xpose.msra.mxu0 0
        %894 = vmatprep.subr.bf16.mxu0 0
        %895 = vmatpush1.bf16.xpose.msra.mxu0 0
        %896 = vmatprep.subr.bf16.mxu0 0
        %897 = vmatpush1.bf16.xpose.msra.mxu0 0
        %898 = vmatprep.subr.bf16.mxu0 0
        %899 = vmatpush1.bf16.xpose.msra.mxu0 0
        %900 = vmatprep.mubr.bf16.mxu0 0
        %901 = vmatmul.mubr.bf16.gmra.mrb[0].mxu0 %v863
        %v902 = vpop.f32.mrb[0].mxu0
        %v903 = vadd.f32 0.0, %v902
        %v904 = vpop.f32.mrb[0].mxu0
        %v905 = vpop.f32.mrb[0].mxu0
        %v906 = vadd.f32 0.0, %v905
        %v907 = vpop.f32.mrb[0].mxu0
        %908 = vdwg.mxu0
        %909 = vrot.lane.b32.xlu0 %v791, 96
        %v910 = vpop.permute.xlu0 %909
        %911 = vrot.lane.b32.xlu0 %v806, 96
        %v912 = vpop.permute.xlu0 %911
        %v914 = vsel %vm808, %v910, 0
        %v917 = vsel %vm808, %v912, 0
        %919 = vmatprep.subr.bf16.mxu0 0
        %920 = vmatpush1.bf16.xpose.msra.mxu0 %v917
        %921 = vmatprep.subr.bf16.mxu0 0
        %922 = vmatpush1.bf16.xpose.msra.mxu0 0
        %923 = vmatprep.subr.bf16.mxu0 0
        %924 = vmatpush1.bf16.xpose.msra.mxu0 0
        %925 = vmatprep.subr.bf16.mxu0 0
        %926 = vmatpush1.bf16.xpose.msra.mxu0 0
        %927 = vmatprep.subr.bf16.mxu0 0
        %928 = vmatpush1.bf16.xpose.msra.mxu0 0
        %929 = vmatprep.subr.bf16.mxu0 0
        %930 = vmatpush1.bf16.xpose.msra.mxu0 0
        %931 = vmatprep.subr.bf16.mxu0 0
        %932 = vmatpush1.bf16.xpose.msra.mxu0 0
        %933 = vmatprep.subr.bf16.mxu0 0
        %934 = vmatpush1.bf16.xpose.msra.mxu0 0
        %935 = vmatprep.subr.bf16.mxu0 0
        %936 = vmatpush1.bf16.xpose.msra.mxu0 0
        %937 = vmatprep.subr.bf16.mxu0 0
        %938 = vmatpush1.bf16.xpose.msra.mxu0 0
        %939 = vmatprep.subr.bf16.mxu0 0
        %940 = vmatpush1.bf16.xpose.msra.mxu0 0
        %941 = vmatprep.subr.bf16.mxu0 0
        %942 = vmatpush1.bf16.xpose.msra.mxu0 0
        %943 = vmatprep.subr.bf16.mxu0 0
        %944 = vmatpush1.bf16.xpose.msra.mxu0 0
        %945 = vmatprep.subr.bf16.mxu0 0
        %946 = vmatpush1.bf16.xpose.msra.mxu0 0
        %947 = vmatprep.subr.bf16.mxu0 0
        %948 = vmatpush1.bf16.xpose.msra.mxu0 0
        %949 = vmatprep.subr.bf16.mxu0 0
        %950 = vmatpush1.bf16.xpose.msra.mxu0 0
        %951 = vmatprep.mubr.bf16.mxu0 0
        %952 = vmatmul.mubr.bf16.gmra.mrb[0].mxu0 %v914
        %v953 = vpop.f32.mrb[0].mxu0
        %v954 = vadd.f32 0.0, %v953
        %v955 = vpop.f32.mrb[0].mxu0
        %v956 = vpop.f32.mrb[0].mxu0
        %v957 = vadd.f32 0.0, %v956
        %v958 = vpop.f32.mrb[0].mxu0
        %959 = vdwg.mxu0
        %960 = vrot.lane.b32.xlu0 %v791, 80
        %v961 = vpop.permute.xlu0 %960
        %962 = vrot.lane.b32.xlu0 %v806, 80
        %v963 = vpop.permute.xlu0 %962
        %v965 = vsel %vm808, %v961, 0
        %v968 = vsel %vm808, %v963, 0
        %970 = vmatprep.subr.bf16.mxu0 0
        %971 = vmatpush1.bf16.xpose.msra.mxu0 %v968
        %972 = vmatprep.subr.bf16.mxu0 0
        %973 = vmatpush1.bf16.xpose.msra.mxu0 0
        %974 = vmatprep.subr.bf16.mxu0 0
        %975 = vmatpush1.bf16.xpose.msra.mxu0 0
        %976 = vmatprep.subr.bf16.mxu0 0
        %977 = vmatpush1.bf16.xpose.msra.mxu0 0
        %978 = vmatprep.subr.bf16.mxu0 0
        %979 = vmatpush1.bf16.xpose.msra.mxu0 0
        %980 = vmatprep.subr.bf16.mxu0 0
        %981 = vmatpush1.bf16.xpose.msra.mxu0 0
        %982 = vmatprep.subr.bf16.mxu0 0
        %983 = vmatpush1.bf16.xpose.msra.mxu0 0
        %984 = vmatprep.subr.bf16.mxu0 0
        %985 = vmatpush1.bf16.xpose.msra.mxu0 0
        %986 = vmatprep.subr.bf16.mxu0 0
        %987 = vmatpush1.bf16.xpose.msra.mxu0 0
        %988 = vmatprep.subr.bf16.mxu0 0
        %989 = vmatpush1.bf16.xpose.msra.mxu0 0
        %990 = vmatprep.subr.bf16.mxu0 0
        %991 = vmatpush1.bf16.xpose.msra.mxu0 0
        %992 = vmatprep.subr.bf16.mxu0 0
        %993 = vmatpush1.bf16.xpose.msra.mxu0 0
        %994 = vmatprep.subr.bf16.mxu0 0
        %995 = vmatpush1.bf16.xpose.msra.mxu0 0
        %996 = vmatprep.subr.bf16.mxu0 0
        %997 = vmatpush1.bf16.xpose.msra.mxu0 0
        %998 = vmatprep.subr.bf16.mxu0 0
        %999 = vmatpush1.bf16.xpose.msra.mxu0 0
        %1000 = vmatprep.subr.bf16.mxu0 0
        %1001 = vmatpush1.bf16.xpose.msra.mxu0 0
        %1002 = vmatprep.mubr.bf16.mxu0 0
        %1003 = vmatmul.mubr.bf16.gmra.mrb[0].mxu0 %v965
        %v1004 = vpop.f32.mrb[0].mxu0
        %v1005 = vadd.f32 0.0, %v1004
        %v1006 = vpop.f32.mrb[0].mxu0
        %v1007 = vpop.f32.mrb[0].mxu0
        %v1008 = vadd.f32 0.0, %v1007
        %v1009 = vpop.f32.mrb[0].mxu0
        %1010 = vdwg.mxu0
        %v1011 = vadd.f32 %v850, %v569
        %v1012 = vadd.f32 %v853, %v570
        %v1013 = vadd.f32 %v903, %v569
        %v1014 = vadd.f32 %v906, %v570
        %v1015 = vadd.f32 %v954, %v569
        %v1016 = vadd.f32 %v957, %v570
        %v1017 = vadd.f32 %v1005, %v569
        %v1018 = vadd.f32 %v1008, %v570
        %v1019 = vsel %vm808, %v1011, -inf
        %1020 = vmax.xlane.f32.xlu0 %v1019
        %v1021 = vpop.xlane.xlu0 %1020
        %v1022 = vsel %vm808, %v1012, -inf
        %1023 = vmax.xlane.f32.xlu0 %v1022
        %v1024 = vpop.xlane.xlu0 %1023
        %v1025 = vsel %vm808, %v1013, -inf
        %1026 = vmax.xlane.f32.xlu0 %v1025
        %v1027 = vpop.xlane.xlu0 %1026
        %v1028 = vsel %vm808, %v1014, -inf
        %1029 = vmax.xlane.f32.xlu0 %v1028
        %v1030 = vpop.xlane.xlu0 %1029
        %v1031 = vsel %vm808, %v1015, -inf
        %1032 = vmax.xlane.f32.xlu0 %v1031
        %v1033 = vpop.xlane.xlu0 %1032
        %v1034 = vsel %vm808, %v1016, -inf
        %1035 = vmax.xlane.f32.xlu0 %v1034
        %v1036 = vpop.xlane.xlu0 %1035
        %v1037 = vsel %vm808, %v1017, -inf
        %1038 = vmax.xlane.f32.xlu0 %v1037
        %v1039 = vpop.xlane.xlu0 %1038
        %v1040 = vsel %vm808, %v1018, -inf
        %1041 = vmax.xlane.f32.xlu0 %v1040
        %v1042 = vpop.xlane.xlu0 %1041
        %v1043 = vsub.f32 %v1011, %v1021
        %v1044 = vsub.f32 %v1012, %v1024
        %v1045 = vsub.f32 %v1013, %v1027
        %v1046 = vsub.f32 %v1014, %v1030
        %v1047 = vsub.f32 %v1015, %v1033
        %v1048 = vsub.f32 %v1016, %v1036
        %v1049 = vsub.f32 %v1017, %v1039
        %v1050 = vsub.f32 %v1018, %v1042
        %v1051 = vmul.f32 %v1043, 1.442695
        %v1052 = vpow.pop %v1051
        %v1053 = vmul.f32 %v1044, 1.442695
        %v1054 = vpow.pop %v1053
        %v1055 = vmul.f32 %v1045, 1.442695
        %v1056 = vpow.pop %v1055
        %v1057 = vmul.f32 %v1046, 1.442695
        %v1058 = vpow.pop %v1057
        %v1059 = vmul.f32 %v1047, 1.442695
        %v1060 = vpow.pop %v1059
        %v1061 = vmul.f32 %v1048, 1.442695
        %v1062 = vpow.pop %v1061
        %v1063 = vmul.f32 %v1049, 1.442695
        %v1064 = vpow.pop %v1063
        %v1065 = vmul.f32 %v1050, 1.442695
        %v1066 = vpow.pop %v1065
        %v1067 = vsel %vm808, %v1052, 0.0
        %1068 = vadd.xlane.f32.xlu0 %v1067
        %v1069 = vpop.xlane.xlu0 %1068
        %v1070 = vsel %vm808, %v1054, 0.0
        %1071 = vadd.xlane.f32.xlu0 %v1070
        %v1072 = vpop.xlane.xlu0 %1071
        %v1073 = vsel %vm808, %v1056, 0.0
        %1074 = vadd.xlane.f32.xlu0 %v1073
        %v1075 = vpop.xlane.xlu0 %1074
        %v1076 = vsel %vm808, %v1058, 0.0
        %1077 = vadd.xlane.f32.xlu0 %v1076
        %v1078 = vpop.xlane.xlu0 %1077
        %v1079 = vsel %vm808, %v1060, 0.0
        %1080 = vadd.xlane.f32.xlu0 %v1079
        %v1081 = vpop.xlane.xlu0 %1080
        %v1082 = vsel %vm808, %v1062, 0.0
        %1083 = vadd.xlane.f32.xlu0 %v1082
        %v1084 = vpop.xlane.xlu0 %1083
        %v1085 = vsel %vm808, %v1064, 0.0
        %1086 = vadd.xlane.f32.xlu0 %v1085
        %v1087 = vpop.xlane.xlu0 %1086
        %v1088 = vsel %vm808, %v1066, 0.0
        %1089 = vadd.xlane.f32.xlu0 %v1088
        %v1090 = vpop.xlane.xlu0 %1089
        %v1091 = vrcp.pop %v1069
        %v1092 = vmul.f32 %v1052, %v1091
        %v1093 = vrcp.pop %v1072
        %v1094 = vmul.f32 %v1054, %v1093
        %v1095 = vrcp.pop %v1075
        %v1096 = vmul.f32 %v1056, %v1095
        %v1097 = vrcp.pop %v1078
        %v1098 = vmul.f32 %v1058, %v1097
        %v1099 = vrcp.pop %v1081
        %v1100 = vmul.f32 %v1060, %v1099
        %v1101 = vrcp.pop %v1084
        %v1102 = vmul.f32 %v1062, %v1101
        %v1103 = vrcp.pop %v1087
        %v1104 = vmul.f32 %v1064, %v1103
        %v1105 = vrcp.pop %v1090
        %v1106 = vmul.f32 %v1066, %v1105
        %v1107 = vpack.c.bf16 %v1094, %v1092
        %v1108 = vpack.c.bf16 %v1098, %v1096
        %v1109 = vpack.c.bf16 %v1102, %v1100
        %v1110 = vpack.c.bf16 %v1106, %v1104
        %v1112 = vsel %vm808, %v1107, 0
        %1114 = vmatprep.subr.bf16.mxu0 0
        %1115 = vmatpush1.bf16.msra.mxu0 %v807
        %1116 = vmatprep.subr.bf16.mxu0 0
        %1117 = vmatpush1.bf16.msra.mxu0 0
        %1118 = vmatprep.subr.bf16.mxu0 0
        %1119 = vmatpush1.bf16.msra.mxu0 0
        %1120 = vmatprep.subr.bf16.mxu0 0
        %1121 = vmatpush1.bf16.msra.mxu0 0
        %1122 = vmatprep.subr.bf16.mxu0 0
        %1123 = vmatpush1.bf16.msra.mxu0 0
        %1124 = vmatprep.subr.bf16.mxu0 0
        %1125 = vmatpush1.bf16.msra.mxu0 0
        %1126 = vmatprep.subr.bf16.mxu0 0
        %1127 = vmatpush1.bf16.msra.mxu0 0
        %1128 = vmatprep.subr.bf16.mxu0 0
        %1129 = vmatpush1.bf16.msra.mxu0 0
        %1130 = vmatprep.subr.bf16.mxu0 0
        %1131 = vmatpush1.bf16.msra.mxu0 0
        %1132 = vmatprep.subr.bf16.mxu0 0
        %1133 = vmatpush1.bf16.msra.mxu0 0
        %1134 = vmatprep.subr.bf16.mxu0 0
        %1135 = vmatpush1.bf16.msra.mxu0 0
        %1136 = vmatprep.subr.bf16.mxu0 0
        %1137 = vmatpush1.bf16.msra.mxu0 0
        %1138 = vmatprep.subr.bf16.mxu0 0
        %1139 = vmatpush1.bf16.msra.mxu0 0
        %1140 = vmatprep.subr.bf16.mxu0 0
        %1141 = vmatpush1.bf16.msra.mxu0 0
        %1142 = vmatprep.subr.bf16.mxu0 0
        %1143 = vmatpush1.bf16.msra.mxu0 0
        %1144 = vmatprep.subr.bf16.mxu0 0
        %1145 = vmatpush1.bf16.msra.mxu0 0
        %1146 = vmatprep.mubr.bf16.mxu0 0
        %1147 = vmatmul.mubr.bf16.gmra.mrb[0].mxu0 %v1112
        %v1148 = vpop.f32.mrb[0].mxu0
        %v1149 = vadd.f32 0.0, %v1148
        %v1150 = vpop.f32.mrb[0].mxu0
        %v1151 = vpop.f32.mrb[0].mxu0
        %v1152 = vadd.f32 0.0, %v1151
        %v1153 = vpop.f32.mrb[0].mxu0
        %1154 = vdwg.mxu0
        %1156 = vrot.lane.b32.xlu0 %v807, 112
        %v1157 = vpop.permute.xlu0 %1156
        %v1160 = vsel %vm808, %v1108, 0
        %1162 = vmatprep.subr.bf16.mxu0 0
        %1163 = vmatpush1.bf16.msra.mxu0 %v1157
        %1164 = vmatprep.subr.bf16.mxu0 0
        %1165 = vmatpush1.bf16.msra.mxu0 0
        %1166 = vmatprep.subr.bf16.mxu0 0
        %1167 = vmatpush1.bf16.msra.mxu0 0
        %1168 = vmatprep.subr.bf16.mxu0 0
        %1169 = vmatpush1.bf16.msra.mxu0 0
        %1170 = vmatprep.subr.bf16.mxu0 0
        %1171 = vmatpush1.bf16.msra.mxu0 0
        %1172 = vmatprep.subr.bf16.mxu0 0
        %1173 = vmatpush1.bf16.msra.mxu0 0
        %1174 = vmatprep.subr.bf16.mxu0 0
        %1175 = vmatpush1.bf16.msra.mxu0 0
        %1176 = vmatprep.subr.bf16.mxu0 0
        %1177 = vmatpush1.bf16.msra.mxu0 0
        %1178 = vmatprep.subr.bf16.mxu0 0
        %1179 = vmatpush1.bf16.msra.mxu0 0
        %1180 = vmatprep.subr.bf16.mxu0 0
        %1181 = vmatpush1.bf16.msra.mxu0 0
        %1182 = vmatprep.subr.bf16.mxu0 0
        %1183 = vmatpush1.bf16.msra.mxu0 0
        %1184 = vmatprep.subr.bf16.mxu0 0
        %1185 = vmatpush1.bf16.msra.mxu0 0
        %1186 = vmatprep.subr.bf16.mxu0 0
        %1187 = vmatpush1.bf16.msra.mxu0 0
        %1188 = vmatprep.subr.bf16.mxu0 0
        %1189 = vmatpush1.bf16.msra.mxu0 0
        %1190 = vmatprep.subr.bf16.mxu0 0
        %1191 = vmatpush1.bf16.msra.mxu0 0
        %1192 = vmatprep.subr.bf16.mxu0 0
        %1193 = vmatpush1.bf16.msra.mxu0 0
        %1194 = vmatprep.mubr.bf16.mxu0 0
        %1195 = vmatmul.mubr.bf16.gmra.mrb[0].mxu0 %v1160
        %v1196 = vpop.f32.mrb[0].mxu0
        %v1197 = vadd.f32 0.0, %v1196
        %v1198 = vpop.f32.mrb[0].mxu0
        %v1199 = vpop.f32.mrb[0].mxu0
        %v1200 = vadd.f32 0.0, %v1199
        %v1201 = vpop.f32.mrb[0].mxu0
        %1202 = vdwg.mxu0
        %1203 = vrot.lane.b32.xlu0 %v807, 96
        %v1204 = vpop.permute.xlu0 %1203
        %v1207 = vsel %vm808, %v1109, 0
        %1209 = vmatprep.subr.bf16.mxu0 0
        %1210 = vmatpush1.bf16.msra.mxu0 %v1204
        %1211 = vmatprep.subr.bf16.mxu0 0
        %1212 = vmatpush1.bf16.msra.mxu0 0
        %1213 = vmatprep.subr.bf16.mxu0 0
        %1214 = vmatpush1.bf16.msra.mxu0 0
        %1215 = vmatprep.subr.bf16.mxu0 0
        %1216 = vmatpush1.bf16.msra.mxu0 0
        %1217 = vmatprep.subr.bf16.mxu0 0
        %1218 = vmatpush1.bf16.msra.mxu0 0
        %1219 = vmatprep.subr.bf16.mxu0 0
        %1220 = vmatpush1.bf16.msra.mxu0 0
        %1221 = vmatprep.subr.bf16.mxu0 0
        %1222 = vmatpush1.bf16.msra.mxu0 0
        %1223 = vmatprep.subr.bf16.mxu0 0
        %1224 = vmatpush1.bf16.msra.mxu0 0
        %1225 = vmatprep.subr.bf16.mxu0 0
        %1226 = vmatpush1.bf16.msra.mxu0 0
        %1227 = vmatprep.subr.bf16.mxu0 0
        %1228 = vmatpush1.bf16.msra.mxu0 0
        %1229 = vmatprep.subr.bf16.mxu0 0
        %1230 = vmatpush1.bf16.msra.mxu0 0
        %1231 = vmatprep.subr.bf16.mxu0 0
        %1232 = vmatpush1.bf16.msra.mxu0 0
        %1233 = vmatprep.subr.bf16.mxu0 0
        %1234 = vmatpush1.bf16.msra.mxu0 0
        %1235 = vmatprep.subr.bf16.mxu0 0
        %1236 = vmatpush1.bf16.msra.mxu0 0
        %1237 = vmatprep.subr.bf16.mxu0 0
        %1238 = vmatpush1.bf16.msra.mxu0 0
        %1239 = vmatprep.subr.bf16.mxu0 0
        %1240 = vmatpush1.bf16.msra.mxu0 0
        %1241 = vmatprep.mubr.bf16.mxu0 0
        %1242 = vmatmul.mubr.bf16.gmra.mrb[0].mxu0 %v1207
        %v1243 = vpop.f32.mrb[0].mxu0
        %v1244 = vadd.f32 0.0, %v1243
        %v1245 = vpop.f32.mrb[0].mxu0
        %v1246 = vpop.f32.mrb[0].mxu0
        %v1247 = vadd.f32 0.0, %v1246
        %v1248 = vpop.f32.mrb[0].mxu0
        %1249 = vdwg.mxu0
        %1250 = vrot.lane.b32.xlu0 %v807, 80
        %v1251 = vpop.permute.xlu0 %1250
        %v1254 = vsel %vm808, %v1110, 0
        %1256 = vmatprep.subr.bf16.mxu0 0
        %1257 = vmatpush1.bf16.msra.mxu0 %v1251
        %1258 = vmatprep.subr.bf16.mxu0 0
        %1259 = vmatpush1.bf16.msra.mxu0 0
        %1260 = vmatprep.subr.bf16.mxu0 0
        %1261 = vmatpush1.bf16.msra.mxu0 0
        %1262 = vmatprep.subr.bf16.mxu0 0
        %1263 = vmatpush1.bf16.msra.mxu0 0
        %1264 = vmatprep.subr.bf16.mxu0 0
        %1265 = vmatpush1.bf16.msra.mxu0 0
        %1266 = vmatprep.subr.bf16.mxu0 0
        %1267 = vmatpush1.bf16.msra.mxu0 0
        %1268 = vmatprep.subr.bf16.mxu0 0
        %1269 = vmatpush1.bf16.msra.mxu0 0
        %1270 = vmatprep.subr.bf16.mxu0 0
        %1271 = vmatpush1.bf16.msra.mxu0 0
        %1272 = vmatprep.subr.bf16.mxu0 0
        %1273 = vmatpush1.bf16.msra.mxu0 0
        %1274 = vmatprep.subr.bf16.mxu0 0
        %1275 = vmatpush1.bf16.msra.mxu0 0
        %1276 = vmatprep.subr.bf16.mxu0 0
        %1277 = vmatpush1.bf16.msra.mxu0 0
        %1278 = vmatprep.subr.bf16.mxu0 0
        %1279 = vmatpush1.bf16.msra.mxu0 0
        %1280 = vmatprep.subr.bf16.mxu0 0
        %1281 = vmatpush1.bf16.msra.mxu0 0
        %1282 = vmatprep.subr.bf16.mxu0 0
        %1283 = vmatpush1.bf16.msra.mxu0 0
        %1284 = vmatprep.subr.bf16.mxu0 0
        %1285 = vmatpush1.bf16.msra.mxu0 0
        %1286 = vmatprep.subr.bf16.mxu0 0
        %1287 = vmatpush1.bf16.msra.mxu0 0
        %1288 = vmatprep.mubr.bf16.mxu0 0
        %1289 = vmatmul.mubr.bf16.gmra.mrb[0].mxu0 %v1254
        %v1290 = vpop.f32.mrb[0].mxu0
        %v1291 = vadd.f32 0.0, %v1290
        %v1292 = vpop.f32.mrb[0].mxu0
        %v1293 = vpop.f32.mrb[0].mxu0
        %v1294 = vadd.f32 0.0, %v1293
        %v1295 = vpop.f32.mrb[0].mxu0
        %1296 = vdwg.mxu0
        %1299 = vrot.lane.b32.xlu0 %v1197, 16
        %v1300 = vpop.permute.xlu0 %1299
        %1301 = vrot.lane.b32.xlu0 %v1200, 16
        %v1302 = vpop.permute.xlu0 %1301
        %1307 = vrot.lane.b32.xlu0 %v1244, 32
        %v1308 = vpop.permute.xlu0 %1307
        %1309 = vrot.lane.b32.xlu0 %v1247, 32
        %v1310 = vpop.permute.xlu0 %1309
        %1315 = vrot.lane.b32.xlu0 %v1291, 48
        %v1316 = vpop.permute.xlu0 %1315
        %1317 = vrot.lane.b32.xlu0 %v1294, 48
        %v1318 = vpop.permute.xlu0 %1317
        %v1321 = vsel %vm808, %v1149, %v1300
        %v1322 = vsel %vm808, %v1152, %v1302
        %v1323 = vsel %vm512, %v1321, %v1308
        %v1324 = vsel %vm512, %v1322, %v1310
        %vm1325 = vcmask 392192
        %v1326 = vsel %vm1325, %v1323, %v1316
        %v1327 = vsel %vm1325, %v1324, %v1318
        %v1328 = vpack.c.bf16 %v1327, %v1326
        %v1329 = vld [vmem:[#allocation12] sm:$0xf]
        %v1330 = vld [vmem:[#allocation12 + $0x4] sm:$0xf]
        %v1331 = vld [vmem:[#allocation12 + $0x8] sm:$0xf]
        %v1332 = vld [vmem:[#allocation12 + $0xc] sm:$0xf]
        %v1333 = vld [vmem:[#allocation12 + $0x10] sm:$0xf]
        %v1334 = vld [vmem:[#allocation12 + $0x14] sm:$0xf]
        %v1335 = vld [vmem:[#allocation12 + $0x18] sm:$0xf]
        %v1336 = vld [vmem:[#allocation12 + $0x1c] sm:$0xf]
        %v1345 = vunpack.c.l.b16 %v1329
        %v1346 = vunpack.c.l.b16 %v1330
        %v1347 = vunpack.c.l.b16 %v1331
        %v1348 = vunpack.c.l.b16 %v1332
        %v1349 = vunpack.c.l.b16 %v1333
        %v1350 = vunpack.c.l.b16 %v1334
        %v1351 = vunpack.c.l.b16 %v1335
        %v1352 = vunpack.c.l.b16 %v1336
        %v1353 = vpack.c.b16 %v1346, %v1345
        %v1354 = vpack.c.b16 %v1348, %v1347
        %v1355 = vpack.c.b16 %v1350, %v1349
        %v1356 = vpack.c.b16 %v1352, %v1351
        %v1362 = vsel %vm579, %v1328, 0
        %1364 = vmatprep.subr.bf16.mxu0 0
        %1365 = vmatpush1.bf16.msra.mxu0 %v1353
        %1366 = vmatprep.subr.bf16.mxu0 0
        %1367 = vmatpush1.bf16.msra.mxu0 %v1354
        %1368 = vmatprep.subr.bf16.mxu0 0
        %1369 = vmatpush1.bf16.msra.mxu0 %v1355
        %1370 = vmatprep.subr.bf16.mxu0 0
        %1371 = vmatpush1.bf16.msra.mxu0 %v1356
        %1372 = vmatprep.subr.bf16.mxu0 0
        %1373 = vmatpush1.bf16.msra.mxu0 0
        %1374 = vmatprep.subr.bf16.mxu0 0
        %1375 = vmatpush1.bf16.msra.mxu0 0
        %1376 = vmatprep.subr.bf16.mxu0 0
        %1377 = vmatpush1.bf16.msra.mxu0 0
        %1378 = vmatprep.subr.bf16.mxu0 0
        %1379 = vmatpush1.bf16.msra.mxu0 0
        %1380 = vmatprep.subr.bf16.mxu0 0
        %1381 = vmatpush1.bf16.msra.mxu0 0
        %1382 = vmatprep.subr.bf16.mxu0 0
        %1383 = vmatpush1.bf16.msra.mxu0 0
        %1384 = vmatprep.subr.bf16.mxu0 0
        %1385 = vmatpush1.bf16.msra.mxu0 0
        %1386 = vmatprep.subr.bf16.mxu0 0
        %1387 = vmatpush1.bf16.msra.mxu0 0
        %1388 = vmatprep.subr.bf16.mxu0 0
        %1389 = vmatpush1.bf16.msra.mxu0 0
        %1390 = vmatprep.subr.bf16.mxu0 0
        %1391 = vmatpush1.bf16.msra.mxu0 0
        %1392 = vmatprep.subr.bf16.mxu0 0
        %1393 = vmatpush1.bf16.msra.mxu0 0
        %1394 = vmatprep.subr.bf16.mxu0 0
        %1395 = vmatpush1.bf16.msra.mxu0 0
        %1396 = vmatprep.mubr.bf16.mxu0 0
        %1397 = vmatmul.mubr.bf16.gmra.mrb[0].mxu0 %v1362
        %v1398 = vpop.f32.mrb[0].mxu0
        %v1399 = vadd.f32 0.0, %v1398
        %v1400 = vpop.f32.mrb[0].mxu0
        %v1401 = vpop.f32.mrb[0].mxu0
        %v1402 = vadd.f32 0.0, %v1401
        %v1403 = vpop.f32.mrb[0].mxu0
        %1404 = vdwg.mxu0
        %v1405 = vadd.f32 %v551, %v1399
        %v1406 = vadd.f32 %v554, %v1402
        %v1407 = vmul.f32 %v1405, %v1405
        %v1408 = vmul.f32 %v1406, %v1406
        %v1409 = vsel %vm579, %v1407, 0.0
        %1410 = vadd.xlane.f32.xlu0 %v1409
        %v1411 = vpop.xlane.xlu0 %1410
        %v1412 = vsel %vm579, %v1408, 0.0
        %1413 = vadd.xlane.f32.xlu0 %v1412
        %v1414 = vpop.xlane.xlu0 %1413
        %v1415 = vmul.f32 %v1411, %v586
        %v1416 = vmul.f32 %v1414, %v586
        %v1417 = vadd.f32 %v1415, 1e-06
        %v1418 = vadd.f32 %v1416, 1e-06
        %v1419 = vrsqrt.pop %v1417
        %v1420 = vrsqrt.pop %v1418
        %v1421 = vmul.f32 %v1405, %v1419
        %v1422 = vmul.f32 %v1406, %v1420
        %v1423 = vlaneseq
        %v1424 = vshrl.u32 %v1423, 7
        %v1425 = vsub.s32 1, %v1424
        %v1426 = vrot.slane %v576, %v1425
        %v1427 = vmul.f32 %v1421, %v1426
        %v1428 = vmul.f32 %v1422, %v1426
        %v1429 = vpack.c.bf16 %v1428, %v1427
        %v1430 = vld [vmem:[#allocation13] sm:$0xff]
        %v1431 = vld [vmem:[#allocation13 + $0x8] sm:$0xff]
        %v1432 = vld [vmem:[#allocation13 + $0x10] sm:$0xff]
        %v1433 = vld [vmem:[#allocation13 + $0x18] sm:$0xff]
        %v1434 = vld [vmem:[#allocation13 + $0x20] sm:$0xff]
        %v1435 = vld [vmem:[#allocation13 + $0x28] sm:$0xff]
        %v1436 = vld [vmem:[#allocation13 + $0x30] sm:$0xff]
        %v1437 = vld [vmem:[#allocation13 + $0x38] sm:$0xff]
        %v1446 = vunpack.c.l.b16 %v1430
        %v1447 = vunpack.c.h.b16 %v1430
        %v1448 = vunpack.c.l.b16 %v1431
        %v1449 = vunpack.c.h.b16 %v1431
        %v1450 = vunpack.c.l.b16 %v1432
        %v1451 = vunpack.c.h.b16 %v1432
        %v1452 = vunpack.c.l.b16 %v1433
        %v1453 = vunpack.c.h.b16 %v1433
        %v1454 = vunpack.c.l.b16 %v1434
        %v1455 = vunpack.c.h.b16 %v1434
        %v1456 = vunpack.c.l.b16 %v1435
        %v1457 = vunpack.c.h.b16 %v1435
        %v1458 = vunpack.c.l.b16 %v1436
        %v1459 = vunpack.c.h.b16 %v1436
        %v1460 = vunpack.c.l.b16 %v1437
        %v1461 = vunpack.c.h.b16 %v1437
        %v1462 = vpack.c.b16 %v1448, %v1446
        %v1463 = vpack.c.b16 %v1449, %v1447
        %v1464 = vpack.c.b16 %v1452, %v1450
        %v1465 = vpack.c.b16 %v1453, %v1451
        %v1466 = vpack.c.b16 %v1456, %v1454
        %v1467 = vpack.c.b16 %v1457, %v1455
        %v1468 = vpack.c.b16 %v1460, %v1458
        %v1469 = vpack.c.b16 %v1461, %v1459
        %v1479 = vsel %vm579, %v1429, 0
        %1481 = vmatprep.subr.bf16.mxu0 %v1463
        %1482 = vmatpush1.bf16.msra.mxu0 %v1462
        %1483 = vmatprep.subr.bf16.mxu0 %v1465
        %1484 = vmatpush1.bf16.msra.mxu0 %v1464
        %1485 = vmatprep.subr.bf16.mxu0 %v1467
        %1486 = vmatpush1.bf16.msra.mxu0 %v1466
        %1487 = vmatprep.subr.bf16.mxu0 %v1469
        %1488 = vmatpush1.bf16.msra.mxu0 %v1468
        %1489 = vmatprep.subr.bf16.mxu0 0
        %1490 = vmatpush1.bf16.msra.mxu0 0
        %1491 = vmatprep.subr.bf16.mxu0 0
        %1492 = vmatpush1.bf16.msra.mxu0 0
        %1493 = vmatprep.subr.bf16.mxu0 0
        %1494 = vmatpush1.bf16.msra.mxu0 0
        %1495 = vmatprep.subr.bf16.mxu0 0
        %1496 = vmatpush1.bf16.msra.mxu0 0
        %1497 = vmatprep.subr.bf16.mxu0 0
        %1498 = vmatpush1.bf16.msra.mxu0 0
        %1499 = vmatprep.subr.bf16.mxu0 0
        %1500 = vmatpush1.bf16.msra.mxu0 0
        %1501 = vmatprep.subr.bf16.mxu0 0
        %1502 = vmatpush1.bf16.msra.mxu0 0
        %1503 = vmatprep.subr.bf16.mxu0 0
        %1504 = vmatpush1.bf16.msra.mxu0 0
        %1505 = vmatprep.subr.bf16.mxu0 0
        %1506 = vmatpush1.bf16.msra.mxu0 0
        %1507 = vmatprep.subr.bf16.mxu0 0
        %1508 = vmatpush1.bf16.msra.mxu0 0
        %1509 = vmatprep.subr.bf16.mxu0 0
        %1510 = vmatpush1.bf16.msra.mxu0 0
        %1511 = vmatprep.subr.bf16.mxu0 0
        %1512 = vmatpush1.bf16.msra.mxu0 0
        %1513 = vmatprep.mubr.bf16.mxu0 0
        %1514 = vmatmul.mubr.bf16.gmra.mrb[0].mxu0 %v1479
        %v1515 = vpop.f32.mrb[0].mxu0
        %v1516 = vadd.f32 0.0, %v1515
        %v1517 = vpop.f32.mrb[0].mxu0
        %v1518 = vadd.f32 0.0, %v1517
        %v1519 = vpop.f32.mrb[0].mxu0
        %v1520 = vadd.f32 0.0, %v1519
        %v1521 = vpop.f32.mrb[0].mxu0
        %v1522 = vadd.f32 0.0, %v1521
        %1523 = vdwg.mxu0
        %v1524 = vxor.u32 %v1516, 2147483648
        %v1525 = vxor.u32 %v1520, 2147483648
        %v1526 = vmul.f32 %v1524, 1.442695
        %v1527 = vpow.pop %v1526
        %v1528 = vmul.f32 %v1525, 1.442695
        %v1529 = vpow.pop %v1528
        %v1530 = vadd.f32 %v1527, 1.0
        %v1531 = vadd.f32 %v1529, 1.0
        %v1532 = vrcp.pop %v1530
        %v1533 = vmul.f32 1.0, %v1532
        %v1534 = vrcp.pop %v1531
        %v1535 = vmul.f32 1.0, %v1534
        %v1536 = vmul.f32 %v1516, %v1533
        %v1537 = vmul.f32 %v1520, %v1535
        %v1538 = vmul.f32 %v1536, %v1518
        %v1539 = vmul.f32 %v1537, %v1522
        %v1540 = vpack.c.bf16 %v1539, %v1538
        %v1541 = vld [vmem:[%s9] sm:$0xf]
        %v1542 = vld [vmem:[%s9 + $0x4] sm:$0xf]
        %v1543 = vld [vmem:[%s9 + $0x8] sm:$0xf]
        %v1544 = vld [vmem:[%s9 + $0xc] sm:$0xf]
        %v1545 = vld [vmem:[%s9 + $0x10] sm:$0xf]
        %v1546 = vld [vmem:[%s9 + $0x14] sm:$0xf]
        %v1547 = vld [vmem:[%s9 + $0x18] sm:$0xf]
        %v1548 = vld [vmem:[%s9 + $0x1c] sm:$0xf]
        %v1549 = vld [vmem:[%s9 + $0x20] sm:$0xf]
        %v1550 = vld [vmem:[%s9 + $0x24] sm:$0xf]
        %v1551 = vld [vmem:[%s9 + $0x28] sm:$0xf]
        %v1552 = vld [vmem:[%s9 + $0x2c] sm:$0xf]
        %v1553 = vld [vmem:[%s9 + $0x30] sm:$0xf]
        %v1554 = vld [vmem:[%s9 + $0x34] sm:$0xf]
        %v1555 = vld [vmem:[%s9 + $0x38] sm:$0xf]
        %v1556 = vld [vmem:[%s9 + $0x3c] sm:$0xf]
        %v1573 = vunpack.c.l.b16 %v1541
        %v1574 = vunpack.c.l.b16 %v1542
        %v1575 = vunpack.c.l.b16 %v1543
        %v1576 = vunpack.c.l.b16 %v1544
        %v1577 = vunpack.c.l.b16 %v1545
        %v1578 = vunpack.c.l.b16 %v1546
        %v1579 = vunpack.c.l.b16 %v1547
        %v1580 = vunpack.c.l.b16 %v1548
        %v1581 = vunpack.c.l.b16 %v1549
        %v1582 = vunpack.c.l.b16 %v1550
        %v1583 = vunpack.c.l.b16 %v1551
        %v1584 = vunpack.c.l.b16 %v1552
        %v1585 = vunpack.c.l.b16 %v1553
        %v1586 = vunpack.c.l.b16 %v1554
        %v1587 = vunpack.c.l.b16 %v1555
        %v1588 = vunpack.c.l.b16 %v1556
        %v1589 = vpack.c.b16 %v1574, %v1573
        %v1590 = vpack.c.b16 %v1576, %v1575
        %v1591 = vpack.c.b16 %v1578, %v1577
        %v1592 = vpack.c.b16 %v1580, %v1579
        %v1593 = vpack.c.b16 %v1582, %v1581
        %v1594 = vpack.c.b16 %v1584, %v1583
        %v1595 = vpack.c.b16 %v1586, %v1585
        %v1596 = vpack.c.b16 %v1588, %v1587
        %1605 = vmatprep.subr.bf16.mxu0 0
        %1606 = vmatpush1.bf16.msra.mxu0 %v1589
        %1607 = vmatprep.subr.bf16.mxu0 0
        %1608 = vmatpush1.bf16.msra.mxu0 %v1590
        %1609 = vmatprep.subr.bf16.mxu0 0
        %1610 = vmatpush1.bf16.msra.mxu0 %v1591
        %1611 = vmatprep.subr.bf16.mxu0 0
        %1612 = vmatpush1.bf16.msra.mxu0 %v1592
        %1613 = vmatprep.subr.bf16.mxu0 0
        %1614 = vmatpush1.bf16.msra.mxu0 %v1593
        %1615 = vmatprep.subr.bf16.mxu0 0
        %1616 = vmatpush1.bf16.msra.mxu0 %v1594
        %1617 = vmatprep.subr.bf16.mxu0 0
        %1618 = vmatpush1.bf16.msra.mxu0 %v1595
        %1619 = vmatprep.subr.bf16.mxu0 0
        %1620 = vmatpush1.bf16.msra.mxu0 %v1596
        %1621 = vmatprep.subr.bf16.mxu0 0
        %1622 = vmatpush1.bf16.msra.mxu0 0
        %1623 = vmatprep.subr.bf16.mxu0 0
        %1624 = vmatpush1.bf16.msra.mxu0 0
        %1625 = vmatprep.subr.bf16.mxu0 0
        %1626 = vmatpush1.bf16.msra.mxu0 0
        %1627 = vmatprep.subr.bf16.mxu0 0
        %1628 = vmatpush1.bf16.msra.mxu0 0
        %1629 = vmatprep.subr.bf16.mxu0 0
        %1630 = vmatpush1.bf16.msra.mxu0 0
        %1631 = vmatprep.subr.bf16.mxu0 0
        %1632 = vmatpush1.bf16.msra.mxu0 0
        %1633 = vmatprep.subr.bf16.mxu0 0
        %1634 = vmatpush1.bf16.msra.mxu0 0
        %1635 = vmatprep.subr.bf16.mxu0 0
        %1636 = vmatpush1.bf16.msra.mxu0 0
        %1637 = vmatprep.mubr.bf16.mxu0 0
        %1638 = vmatmul.mubr.bf16.gmra.mrb[0].mxu0 %v1540
        %v1639 = vpop.f32.mrb[0].mxu0
        %v1640 = vadd.f32 0.0, %v1639
        %v1641 = vpop.f32.mrb[0].mxu0
        %v1642 = vpop.f32.mrb[0].mxu0
        %v1643 = vadd.f32 0.0, %v1642
        %v1644 = vpop.f32.mrb[0].mxu0
        %1645 = vdwg.mxu0
        %v1646 = vadd.f32 %v1405, %v1640
        %v1647 = vadd.f32 %v1406, %v1643
        %s1648 = scalar_lea.vmem [#allocation10], 2
        %v1649 = vld [vmem:[%s1648] sm:$0x3]
        %v1650 = vmul.f32 %v1646, %v1646
        %v1651 = vmul.f32 %v1647, %v1647
        %v1652 = vsel %vm579, %v1650, 0.0
        %1653 = vadd.xlane.f32.xlu0 %v1652
        %v1654 = vpop.xlane.xlu0 %1653
        %v1655 = vsel %vm579, %v1651, 0.0
        %1656 = vadd.xlane.f32.xlu0 %v1655
        %v1657 = vpop.xlane.xlu0 %1656
        %v1658 = vmul.f32 %v1654, %v586
        %v1659 = vmul.f32 %v1657, %v586
        %v1660 = vadd.f32 %v1658, 1e-06
        %v1661 = vadd.f32 %v1659, 1e-06
        %v1662 = vrsqrt.pop %v1660
        %v1663 = vrsqrt.pop %v1661
        %v1664 = vmul.f32 %v1646, %v1662
        %v1665 = vmul.f32 %v1647, %v1663
        %v1666 = vlaneseq
        %v1667 = vshrl.u32 %v1666, 7
        %v1668 = vsub.s32 0, %v1667
        %v1669 = vrot.slane %v1649, %v1668
        %v1670 = vmul.f32 %v1664, %v1669
        %v1671 = vmul.f32 %v1665, %v1669
        %v1672 = vpack.c.bf16 %v1671, %v1670
        %s1673 = scalar_lea.vmem %s6, 96
        %v1674 = vld [vmem:[%s1673] sm:$0xff]
        %v1675 = vld [vmem:[%s1673 + $0x8] sm:$0xf]
        %v1676 = vld [vmem:[%s1673 + $0xc] sm:$0xff]
        %v1677 = vld [vmem:[%s1673 + $0x14] sm:$0xf]
        %v1678 = vld [vmem:[%s1673 + $0x18] sm:$0xff]
        %v1679 = vld [vmem:[%s1673 + $0x20] sm:$0xf]
        %v1680 = vld [vmem:[%s1673 + $0x24] sm:$0xff]
        %v1681 = vld [vmem:[%s1673 + $0x2c] sm:$0xf]
        %v1682 = vld [vmem:[%s1673 + $0x30] sm:$0xff]
        %v1683 = vld [vmem:[%s1673 + $0x38] sm:$0xf]
        %v1684 = vld [vmem:[%s1673 + $0x3c] sm:$0xff]
        %v1685 = vld [vmem:[%s1673 + $0x44] sm:$0xf]
        %v1686 = vld [vmem:[%s1673 + $0x48] sm:$0xff]
        %v1687 = vld [vmem:[%s1673 + $0x50] sm:$0xf]
        %v1688 = vld [vmem:[%s1673 + $0x54] sm:$0xff]
        %v1689 = vld [vmem:[%s1673 + $0x5c] sm:$0xf]
        %v1706 = vunpack.c.l.b16 %v1674
        %v1707 = vunpack.c.h.b16 %v1674
        %v1708 = vunpack.c.l.b16 %v1675
        %v1709 = vunpack.c.l.b16 %v1676
        %v1710 = vunpack.c.h.b16 %v1676
        %v1711 = vunpack.c.l.b16 %v1677
        %v1712 = vunpack.c.l.b16 %v1678
        %v1713 = vunpack.c.h.b16 %v1678
        %v1714 = vunpack.c.l.b16 %v1679
        %v1715 = vunpack.c.l.b16 %v1680
        %v1716 = vunpack.c.h.b16 %v1680
        %v1717 = vunpack.c.l.b16 %v1681
        %v1718 = vunpack.c.l.b16 %v1682
        %v1719 = vunpack.c.h.b16 %v1682
        %v1720 = vunpack.c.l.b16 %v1683
        %v1721 = vunpack.c.l.b16 %v1684
        %v1722 = vunpack.c.h.b16 %v1684
        %v1723 = vunpack.c.l.b16 %v1685
        %v1724 = vunpack.c.l.b16 %v1686
        %v1725 = vunpack.c.h.b16 %v1686
        %v1726 = vunpack.c.l.b16 %v1687
        %v1727 = vunpack.c.l.b16 %v1688
        %v1728 = vunpack.c.h.b16 %v1688
        %v1729 = vunpack.c.l.b16 %v1689
        %v1730 = vpack.c.b16 %v1709, %v1706
        %v1731 = vpack.c.b16 %v1710, %v1707
        %v1732 = vpack.c.b16 %v1711, %v1708
        %v1733 = vpack.c.b16 %v1715, %v1712
        %v1734 = vpack.c.b16 %v1716, %v1713
        %v1735 = vpack.c.b16 %v1717, %v1714
        %v1736 = vpack.c.b16 %v1721, %v1718
        %v1737 = vpack.c.b16 %v1722, %v1719
        %v1738 = vpack.c.b16 %v1723, %v1720
        %v1739 = vpack.c.b16 %v1727, %v1724
        %v1740 = vpack.c.b16 %v1728, %v1725
        %v1741 = vpack.c.b16 %v1729, %v1726
        %v1755 = vsel %vm579, %v1672, 0
        %1757 = vmatprep.subr.bf16.mxu0 %v1731
        %1758 = vmatpush1.bf16.msra.mxu0 %v1730
        %1759 = vmatprep.subr.bf16.mxu0 %v1734
        %1760 = vmatpush1.bf16.msra.mxu0 %v1733
        %1761 = vmatprep.subr.bf16.mxu0 %v1737
        %1762 = vmatpush1.bf16.msra.mxu0 %v1736
        %1763 = vmatprep.subr.bf16.mxu0 %v1740
        %1764 = vmatpush1.bf16.msra.mxu0 %v1739
        %1765 = vmatprep.subr.bf16.mxu0 0
        %1766 = vmatpush1.bf16.msra.mxu0 0
        %1767 = vmatprep.subr.bf16.mxu0 0
        %1768 = vmatpush1.bf16.msra.mxu0 0
        %1769 = vmatprep.subr.bf16.mxu0 0
        %1770 = vmatpush1.bf16.msra.mxu0 0
        %1771 = vmatprep.subr.bf16.mxu0 0
        %1772 = vmatpush1.bf16.msra.mxu0 0
        %1773 = vmatprep.subr.bf16.mxu0 0
        %1774 = vmatpush1.bf16.msra.mxu0 0
        %1775 = vmatprep.subr.bf16.mxu0 0
        %1776 = vmatpush1.bf16.msra.mxu0 0
        %1777 = vmatprep.subr.bf16.mxu0 0
        %1778 = vmatpush1.bf16.msra.mxu0 0
        %1779 = vmatprep.subr.bf16.mxu0 0
        %1780 = vmatpush1.bf16.msra.mxu0 0
        %1781 = vmatprep.subr.bf16.mxu0 0
        %1782 = vmatpush1.bf16.msra.mxu0 0
        %1783 = vmatprep.subr.bf16.mxu0 0
        %1784 = vmatpush1.bf16.msra.mxu0 0
        %1785 = vmatprep.subr.bf16.mxu0 0
        %1786 = vmatpush1.bf16.msra.mxu0 0
        %1787 = vmatprep.subr.bf16.mxu0 0
        %1788 = vmatpush1.bf16.msra.mxu0 0
        %1789 = vmatprep.mubr.bf16.mxu0 0
        %1790 = vmatmul.mubr.bf16.gmra.mrb[0].mxu0 %v1755
        %v1791 = vpop.f32.mrb[0].mxu0
        %v1792 = vadd.f32 0.0, %v1791
        %v1793 = vpop.f32.mrb[0].mxu0
        %v1794 = vadd.f32 0.0, %v1793
        %v1795 = vpop.f32.mrb[0].mxu0
        %v1796 = vadd.f32 0.0, %v1795
        %v1797 = vpop.f32.mrb[0].mxu0
        %v1798 = vadd.f32 0.0, %v1797
        %1799 = vdwg.mxu0
        %1800 = vmatprep.subr.bf16.mxu0 0
        %1801 = vmatpush1.bf16.msra.mxu0 %v1732
        %1802 = vmatprep.subr.bf16.mxu0 0
        %1803 = vmatpush1.bf16.msra.mxu0 %v1735
        %1804 = vmatprep.subr.bf16.mxu0 0
        %1805 = vmatpush1.bf16.msra.mxu0 %v1738
        %1806 = vmatprep.subr.bf16.mxu0 0
        %1807 = vmatpush1.bf16.msra.mxu0 %v1741
        %1808 = vmatprep.subr.bf16.mxu0 0
        %1809 = vmatpush1.bf16.msra.mxu0 0
        %1810 = vmatprep.subr.bf16.mxu0 0
        %1811 = vmatpush1.bf16.msra.mxu0 0
        %1812 = vmatprep.subr.bf16.mxu0 0
        %1813 = vmatpush1.bf16.msra.mxu0 0
        %1814 = vmatprep.subr.bf16.mxu0 0
        %1815 = vmatpush1.bf16.msra.mxu0 0
        %1816 = vmatprep.subr.bf16.mxu0 0
        %1817 = vmatpush1.bf16.msra.mxu0 0
        %1818 = vmatprep.subr.bf16.mxu0 0
        %1819 = vmatpush1.bf16.msra.mxu0 0
        %1820 = vmatprep.subr.bf16.mxu0 0
        %1821 = vmatpush1.bf16.msra.mxu0 0
        %1822 = vmatprep.subr.bf16.mxu0 0
        %1823 = vmatpush1.bf16.msra.mxu0 0
        %1824 = vmatprep.subr.bf16.mxu0 0
        %1825 = vmatpush1.bf16.msra.mxu0 0
        %1826 = vmatprep.subr.bf16.mxu0 0
        %1827 = vmatpush1.bf16.msra.mxu0 0
        %1828 = vmatprep.subr.bf16.mxu0 0
        %1829 = vmatpush1.bf16.msra.mxu0 0
        %1830 = vmatprep.subr.bf16.mxu0 0
        %1831 = vmatpush1.bf16.msra.mxu0 0
        %1832 = vmatprep.mubr.bf16.mxu0 0
        %1833 = vmatmul.mubr.bf16.gmra.mrb[0].mxu0 %v1755
        %v1834 = vpop.f32.mrb[0].mxu0
        %v1835 = vadd.f32 0.0, %v1834
        %v1836 = vpop.f32.mrb[0].mxu0
        %v1837 = vpop.f32.mrb[0].mxu0
        %v1838 = vadd.f32 0.0, %v1837
        %v1839 = vpop.f32.mrb[0].mxu0
        %1840 = vdwg.mxu0
        %v1841 = vmul.f32 %v1792, %v571
        %v1842 = vmul.f32 %v1796, %v572
        %v1843 = vmul.f32 %v1792, %v774
        %v1844 = vmul.f32 %v1796, %v776
        %1847 = vrot.lane.b32.xlu0 %v1843, 64
        %v1848 = vpop.permute.xlu0 %1847
        %1849 = vrot.lane.b32.xlu0 %v1844, 64
        %v1850 = vpop.permute.xlu0 %1849
        %v1853 = vadd.f32 %v1841, %v1848
        %v1854 = vadd.f32 %v1842, %v1850
        %v1855 = vpack.c.bf16 %v1854, %v1853
        %v1856 = vmul.f32 %v1794, %v571
        %v1857 = vmul.f32 %v1798, %v572
        %v1858 = vmul.f32 %v1794, %v774
        %v1859 = vmul.f32 %v1798, %v776
        %1862 = vrot.lane.b32.xlu0 %v1858, 64
        %v1863 = vpop.permute.xlu0 %1862
        %1864 = vrot.lane.b32.xlu0 %v1859, 64
        %v1865 = vpop.permute.xlu0 %1864
        %v1868 = vadd.f32 %v1856, %v1863
        %v1869 = vadd.f32 %v1857, %v1865
        %v1870 = vpack.c.bf16 %v1869, %v1868
        %v1871 = vpack.c.bf16 %v1838, %v1835
        %v1873 = vsel %vm808, %v1855, 0
        %v1876 = vsel %vm808, %v1870, 0
        %1878 = vmatprep.subr.bf16.mxu0 0
        %1879 = vmatpush1.bf16.xpose.msra.mxu0 %v1876
        %1880 = vmatprep.subr.bf16.mxu0 0
        %1881 = vmatpush1.bf16.xpose.msra.mxu0 0
        %1882 = vmatprep.subr.bf16.mxu0 0
        %1883 = vmatpush1.bf16.xpose.msra.mxu0 0
        %1884 = vmatprep.subr.bf16.mxu0 0
        %1885 = vmatpush1.bf16.xpose.msra.mxu0 0
        %1886 = vmatprep.subr.bf16.mxu0 0
        %1887 = vmatpush1.bf16.xpose.msra.mxu0 0
        %1888 = vmatprep.subr.bf16.mxu0 0
        %1889 = vmatpush1.bf16.xpose.msra.mxu0 0
        %1890 = vmatprep.subr.bf16.mxu0 0
        %1891 = vmatpush1.bf16.xpose.msra.mxu0 0
        %1892 = vmatprep.subr.bf16.mxu0 0
        %1893 = vmatpush1.bf16.xpose.msra.mxu0 0
        %1894 = vmatprep.subr.bf16.mxu0 0
        %1895 = vmatpush1.bf16.xpose.msra.mxu0 0
        %1896 = vmatprep.subr.bf16.mxu0 0
        %1897 = vmatpush1.bf16.xpose.msra.mxu0 0
        %1898 = vmatprep.subr.bf16.mxu0 0
        %1899 = vmatpush1.bf16.xpose.msra.mxu0 0
        %1900 = vmatprep.subr.bf16.mxu0 0
        %1901 = vmatpush1.bf16.xpose.msra.mxu0 0
        %1902 = vmatprep.subr.bf16.mxu0 0
        %1903 = vmatpush1.bf16.xpose.msra.mxu0 0
        %1904 = vmatprep.subr.bf16.mxu0 0
        %1905 = vmatpush1.bf16.xpose.msra.mxu0 0
        %1906 = vmatprep.subr.bf16.mxu0 0
        %1907 = vmatpush1.bf16.xpose.msra.mxu0 0
        %1908 = vmatprep.subr.bf16.mxu0 0
        %1909 = vmatpush1.bf16.xpose.msra.mxu0 0
        %1910 = vmatprep.mubr.bf16.mxu0 0
        %1911 = vmatmul.mubr.bf16.gmra.mrb[0].mxu0 %v1873
        %v1912 = vpop.f32.mrb[0].mxu0
        %v1913 = vadd.f32 0.0, %v1912
        %v1914 = vpop.f32.mrb[0].mxu0
        %v1915 = vpop.f32.mrb[0].mxu0
        %v1916 = vadd.f32 0.0, %v1915
        %v1917 = vpop.f32.mrb[0].mxu0
        %1918 = vdwg.mxu0
        %1920 = vrot.lane.b32.xlu0 %v1855, 112
        %v1921 = vpop.permute.xlu0 %1920
        %1923 = vrot.lane.b32.xlu0 %v1870, 112
        %v1924 = vpop.permute.xlu0 %1923
        %v1926 = vsel %vm808, %v1921, 0
        %v1929 = vsel %vm808, %v1924, 0
        %1931 = vmatprep.subr.bf16.mxu0 0
        %1932 = vmatpush1.bf16.xpose.msra.mxu0 %v1929
        %1933 = vmatprep.subr.bf16.mxu0 0
        %1934 = vmatpush1.bf16.xpose.msra.mxu0 0
        %1935 = vmatprep.subr.bf16.mxu0 0
        %1936 = vmatpush1.bf16.xpose.msra.mxu0 0
        %1937 = vmatprep.subr.bf16.mxu0 0
        %1938 = vmatpush1.bf16.xpose.msra.mxu0 0
        %1939 = vmatprep.subr.bf16.mxu0 0
        %1940 = vmatpush1.bf16.xpose.msra.mxu0 0
        %1941 = vmatprep.subr.bf16.mxu0 0
        %1942 = vmatpush1.bf16.xpose.msra.mxu0 0
        %1943 = vmatprep.subr.bf16.mxu0 0
        %1944 = vmatpush1.bf16.xpose.msra.mxu0 0
        %1945 = vmatprep.subr.bf16.mxu0 0
        %1946 = vmatpush1.bf16.xpose.msra.mxu0 0
        %1947 = vmatprep.subr.bf16.mxu0 0
        %1948 = vmatpush1.bf16.xpose.msra.mxu0 0
        %1949 = vmatprep.subr.bf16.mxu0 0
        %1950 = vmatpush1.bf16.xpose.msra.mxu0 0
        %1951 = vmatprep.subr.bf16.mxu0 0
        %1952 = vmatpush1.bf16.xpose.msra.mxu0 0
        %1953 = vmatprep.subr.bf16.mxu0 0
        %1954 = vmatpush1.bf16.xpose.msra.mxu0 0
        %1955 = vmatprep.subr.bf16.mxu0 0
        %1956 = vmatpush1.bf16.xpose.msra.mxu0 0
        %1957 = vmatprep.subr.bf16.mxu0 0
        %1958 = vmatpush1.bf16.xpose.msra.mxu0 0
        %1959 = vmatprep.subr.bf16.mxu0 0
        %1960 = vmatpush1.bf16.xpose.msra.mxu0 0
        %1961 = vmatprep.subr.bf16.mxu0 0
        %1962 = vmatpush1.bf16.xpose.msra.mxu0 0
        %1963 = vmatprep.mubr.bf16.mxu0 0
        %1964 = vmatmul.mubr.bf16.gmra.mrb[0].mxu0 %v1926
        %v1965 = vpop.f32.mrb[0].mxu0
        %v1966 = vadd.f32 0.0, %v1965
        %v1967 = vpop.f32.mrb[0].mxu0
        %v1968 = vpop.f32.mrb[0].mxu0
        %v1969 = vadd.f32 0.0, %v1968
        %v1970 = vpop.f32.mrb[0].mxu0
        %1971 = vdwg.mxu0
        %1972 = vrot.lane.b32.xlu0 %v1855, 96
        %v1973 = vpop.permute.xlu0 %1972
        %1974 = vrot.lane.b32.xlu0 %v1870, 96
        %v1975 = vpop.permute.xlu0 %1974
        %v1977 = vsel %vm808, %v1973, 0
        %v1980 = vsel %vm808, %v1975, 0
        %1982 = vmatprep.subr.bf16.mxu0 0
        %1983 = vmatpush1.bf16.xpose.msra.mxu0 %v1980
        %1984 = vmatprep.subr.bf16.mxu0 0
        %1985 = vmatpush1.bf16.xpose.msra.mxu0 0
        %1986 = vmatprep.subr.bf16.mxu0 0
        %1987 = vmatpush1.bf16.xpose.msra.mxu0 0
        %1988 = vmatprep.subr.bf16.mxu0 0
        %1989 = vmatpush1.bf16.xpose.msra.mxu0 0
        %1990 = vmatprep.subr.bf16.mxu0 0
        %1991 = vmatpush1.bf16.xpose.msra.mxu0 0
        %1992 = vmatprep.subr.bf16.mxu0 0
        %1993 = vmatpush1.bf16.xpose.msra.mxu0 0
        %1994 = vmatprep.subr.bf16.mxu0 0
        %1995 = vmatpush1.bf16.xpose.msra.mxu0 0
        %1996 = vmatprep.subr.bf16.mxu0 0
        %1997 = vmatpush1.bf16.xpose.msra.mxu0 0
        %1998 = vmatprep.subr.bf16.mxu0 0
        %1999 = vmatpush1.bf16.xpose.msra.mxu0 0
        %2000 = vmatprep.subr.bf16.mxu0 0
        %2001 = vmatpush1.bf16.xpose.msra.mxu0 0
        %2002 = vmatprep.subr.bf16.mxu0 0
        %2003 = vmatpush1.bf16.xpose.msra.mxu0 0
        %2004 = vmatprep.subr.bf16.mxu0 0
        %2005 = vmatpush1.bf16.xpose.msra.mxu0 0
        %2006 = vmatprep.subr.bf16.mxu0 0
        %2007 = vmatpush1.bf16.xpose.msra.mxu0 0
        %2008 = vmatprep.subr.bf16.mxu0 0
        %2009 = vmatpush1.bf16.xpose.msra.mxu0 0
        %2010 = vmatprep.subr.bf16.mxu0 0
        %2011 = vmatpush1.bf16.xpose.msra.mxu0 0
        %2012 = vmatprep.subr.bf16.mxu0 0
        %2013 = vmatpush1.bf16.xpose.msra.mxu0 0
        %2014 = vmatprep.mubr.bf16.mxu0 0
        %2015 = vmatmul.mubr.bf16.gmra.mrb[0].mxu0 %v1977
        %v2016 = vpop.f32.mrb[0].mxu0
        %v2017 = vadd.f32 0.0, %v2016
        %v2018 = vpop.f32.mrb[0].mxu0
        %v2019 = vpop.f32.mrb[0].mxu0
        %v2020 = vadd.f32 0.0, %v2019
        %v2021 = vpop.f32.mrb[0].mxu0
        %2022 = vdwg.mxu0
        %2023 = vrot.lane.b32.xlu0 %v1855, 80
        %v2024 = vpop.permute.xlu0 %2023
        %2025 = vrot.lane.b32.xlu0 %v1870, 80
        %v2026 = vpop.permute.xlu0 %2025
        %v2028 = vsel %vm808, %v2024, 0
        %v2031 = vsel %vm808, %v2026, 0
        %2033 = vmatprep.subr.bf16.mxu0 0
        %2034 = vmatpush1.bf16.xpose.msra.mxu0 %v2031
        %2035 = vmatprep.subr.bf16.mxu0 0
        %2036 = vmatpush1.bf16.xpose.msra.mxu0 0
        %2037 = vmatprep.subr.bf16.mxu0 0
        %2038 = vmatpush1.bf16.xpose.msra.mxu0 0
        %2039 = vmatprep.subr.bf16.mxu0 0
        %2040 = vmatpush1.bf16.xpose.msra.mxu0 0
        %2041 = vmatprep.subr.bf16.mxu0 0
        %2042 = vmatpush1.bf16.xpose.msra.mxu0 0
        %2043 = vmatprep.subr.bf16.mxu0 0
        %2044 = vmatpush1.bf16.xpose.msra.mxu0 0
        %2045 = vmatprep.subr.bf16.mxu0 0
        %2046 = vmatpush1.bf16.xpose.msra.mxu0 0
        %2047 = vmatprep.subr.bf16.mxu0 0
        %2048 = vmatpush1.bf16.xpose.msra.mxu0 0
        %2049 = vmatprep.subr.bf16.mxu0 0
        %2050 = vmatpush1.bf16.xpose.msra.mxu0 0
        %2051 = vmatprep.subr.bf16.mxu0 0
        %2052 = vmatpush1.bf16.xpose.msra.mxu0 0
        %2053 = vmatprep.subr.bf16.mxu0 0
        %2054 = vmatpush1.bf16.xpose.msra.mxu0 0
        %2055 = vmatprep.subr.bf16.mxu0 0
        %2056 = vmatpush1.bf16.xpose.msra.mxu0 0
        %2057 = vmatprep.subr.bf16.mxu0 0
        %2058 = vmatpush1.bf16.xpose.msra.mxu0 0
        %2059 = vmatprep.subr.bf16.mxu0 0
        %2060 = vmatpush1.bf16.xpose.msra.mxu0 0
        %2061 = vmatprep.subr.bf16.mxu0 0
        %2062 = vmatpush1.bf16.xpose.msra.mxu0 0
        %2063 = vmatprep.subr.bf16.mxu0 0
        %2064 = vmatpush1.bf16.xpose.msra.mxu0 0
        %2065 = vmatprep.mubr.bf16.mxu0 0
        %2066 = vmatmul.mubr.bf16.gmra.mrb[0].mxu0 %v2028
        %v2067 = vpop.f32.mrb[0].mxu0
        %v2068 = vadd.f32 0.0, %v2067
        %v2069 = vpop.f32.mrb[0].mxu0
        %v2070 = vpop.f32.mrb[0].mxu0
        %v2071 = vadd.f32 0.0, %v2070
        %v2072 = vpop.f32.mrb[0].mxu0
        %2073 = vdwg.mxu0
        %v2074 = vadd.f32 %v1913, %v569
        %v2075 = vadd.f32 %v1916, %v570
        %v2076 = vadd.f32 %v1966, %v569
        %v2077 = vadd.f32 %v1969, %v570
        %v2078 = vadd.f32 %v2017, %v569
        %v2079 = vadd.f32 %v2020, %v570
        %v2080 = vadd.f32 %v2068, %v569
        %v2081 = vadd.f32 %v2071, %v570
        %v2082 = vsel %vm808, %v2074, -inf
        %2083 = vmax.xlane.f32.xlu0 %v2082
        %v2084 = vpop.xlane.xlu0 %2083
        %v2085 = vsel %vm808, %v2075, -inf
        %2086 = vmax.xlane.f32.xlu0 %v2085
        %v2087 = vpop.xlane.xlu0 %2086
        %v2088 = vsel %vm808, %v2076, -inf
        %2089 = vmax.xlane.f32.xlu0 %v2088
        %v2090 = vpop.xlane.xlu0 %2089
        %v2091 = vsel %vm808, %v2077, -inf
        %2092 = vmax.xlane.f32.xlu0 %v2091
        %v2093 = vpop.xlane.xlu0 %2092
        %v2094 = vsel %vm808, %v2078, -inf
        %2095 = vmax.xlane.f32.xlu0 %v2094
        %v2096 = vpop.xlane.xlu0 %2095
        %v2097 = vsel %vm808, %v2079, -inf
        %2098 = vmax.xlane.f32.xlu0 %v2097
        %v2099 = vpop.xlane.xlu0 %2098
        %v2100 = vsel %vm808, %v2080, -inf
        %2101 = vmax.xlane.f32.xlu0 %v2100
        %v2102 = vpop.xlane.xlu0 %2101
        %v2103 = vsel %vm808, %v2081, -inf
        %2104 = vmax.xlane.f32.xlu0 %v2103
        %v2105 = vpop.xlane.xlu0 %2104
        %v2106 = vsub.f32 %v2074, %v2084
        %v2107 = vsub.f32 %v2075, %v2087
        %v2108 = vsub.f32 %v2076, %v2090
        %v2109 = vsub.f32 %v2077, %v2093
        %v2110 = vsub.f32 %v2078, %v2096
        %v2111 = vsub.f32 %v2079, %v2099
        %v2112 = vsub.f32 %v2080, %v2102
        %v2113 = vsub.f32 %v2081, %v2105
        %v2114 = vmul.f32 %v2106, 1.442695
        %v2115 = vpow.pop %v2114
        %v2116 = vmul.f32 %v2107, 1.442695
        %v2117 = vpow.pop %v2116
        %v2118 = vmul.f32 %v2108, 1.442695
        %v2119 = vpow.pop %v2118
        %v2120 = vmul.f32 %v2109, 1.442695
        %v2121 = vpow.pop %v2120
        %v2122 = vmul.f32 %v2110, 1.442695
        %v2123 = vpow.pop %v2122
        %v2124 = vmul.f32 %v2111, 1.442695
        %v2125 = vpow.pop %v2124
        %v2126 = vmul.f32 %v2112, 1.442695
        %v2127 = vpow.pop %v2126
        %v2128 = vmul.f32 %v2113, 1.442695
        %v2129 = vpow.pop %v2128
        %v2130 = vsel %vm808, %v2115, 0.0
        %2131 = vadd.xlane.f32.xlu0 %v2130
        %v2132 = vpop.xlane.xlu0 %2131
        %v2133 = vsel %vm808, %v2117, 0.0
        %2134 = vadd.xlane.f32.xlu0 %v2133
        %v2135 = vpop.xlane.xlu0 %2134
        %v2136 = vsel %vm808, %v2119, 0.0
        %2137 = vadd.xlane.f32.xlu0 %v2136
        %v2138 = vpop.xlane.xlu0 %2137
        %v2139 = vsel %vm808, %v2121, 0.0
        %2140 = vadd.xlane.f32.xlu0 %v2139
        %v2141 = vpop.xlane.xlu0 %2140
        %v2142 = vsel %vm808, %v2123, 0.0
        %2143 = vadd.xlane.f32.xlu0 %v2142
        %v2144 = vpop.xlane.xlu0 %2143
        %v2145 = vsel %vm808, %v2125, 0.0
        %2146 = vadd.xlane.f32.xlu0 %v2145
        %v2147 = vpop.xlane.xlu0 %2146
        %v2148 = vsel %vm808, %v2127, 0.0
        %2149 = vadd.xlane.f32.xlu0 %v2148
        %v2150 = vpop.xlane.xlu0 %2149
        %v2151 = vsel %vm808, %v2129, 0.0
        %2152 = vadd.xlane.f32.xlu0 %v2151
        %v2153 = vpop.xlane.xlu0 %2152
        %v2154 = vrcp.pop %v2132
        %v2155 = vmul.f32 %v2115, %v2154
        %v2156 = vrcp.pop %v2135
        %v2157 = vmul.f32 %v2117, %v2156
        %v2158 = vrcp.pop %v2138
        %v2159 = vmul.f32 %v2119, %v2158
        %v2160 = vrcp.pop %v2141
        %v2161 = vmul.f32 %v2121, %v2160
        %v2162 = vrcp.pop %v2144
        %v2163 = vmul.f32 %v2123, %v2162
        %v2164 = vrcp.pop %v2147
        %v2165 = vmul.f32 %v2125, %v2164
        %v2166 = vrcp.pop %v2150
        %v2167 = vmul.f32 %v2127, %v2166
        %v2168 = vrcp.pop %v2153
        %v2169 = vmul.f32 %v2129, %v2168
        %v2170 = vpack.c.bf16 %v2157, %v2155
        %v2171 = vpack.c.bf16 %v2161, %v2159
        %v2172 = vpack.c.bf16 %v2165, %v2163
        %v2173 = vpack.c.bf16 %v2169, %v2167
        %v2175 = vsel %vm808, %v2170, 0
        %2177 = vmatprep.subr.bf16.mxu0 0
        %2178 = vmatpush1.bf16.msra.mxu0 %v1871
        %2179 = vmatprep.subr.bf16.mxu0 0
        %2180 = vmatpush1.bf16.msra.mxu0 0
        %2181 = vmatprep.subr.bf16.mxu0 0
        %2182 = vmatpush1.bf16.msra.mxu0 0
        %2183 = vmatprep.subr.bf16.mxu0 0
        %2184 = vmatpush1.bf16.msra.mxu0 0
        %2185 = vmatprep.subr.bf16.mxu0 0
        %2186 = vmatpush1.bf16.msra.mxu0 0
        %2187 = vmatprep.subr.bf16.mxu0 0
        %2188 = vmatpush1.bf16.msra.mxu0 0
        %2189 = vmatprep.subr.bf16.mxu0 0
        %2190 = vmatpush1.bf16.msra.mxu0 0
        %2191 = vmatprep.subr.bf16.mxu0 0
        %2192 = vmatpush1.bf16.msra.mxu0 0
        %2193 = vmatprep.subr.bf16.mxu0 0
        %2194 = vmatpush1.bf16.msra.mxu0 0
        %2195 = vmatprep.subr.bf16.mxu0 0
        %2196 = vmatpush1.bf16.msra.mxu0 0
        %2197 = vmatprep.subr.bf16.mxu0 0
        %2198 = vmatpush1.bf16.msra.mxu0 0
        %2199 = vmatprep.subr.bf16.mxu0 0
        %2200 = vmatpush1.bf16.msra.mxu0 0
        %2201 = vmatprep.subr.bf16.mxu0 0
        %2202 = vmatpush1.bf16.msra.mxu0 0
        %2203 = vmatprep.subr.bf16.mxu0 0
        %2204 = vmatpush1.bf16.msra.mxu0 0
        %2205 = vmatprep.subr.bf16.mxu0 0
        %2206 = vmatpush1.bf16.msra.mxu0 0
        %2207 = vmatprep.subr.bf16.mxu0 0
        %2208 = vmatpush1.bf16.msra.mxu0 0
        %2209 = vmatprep.mubr.bf16.mxu0 0
        %2210 = vmatmul.mubr.bf16.gmra.mrb[0].mxu0 %v2175
        %v2211 = vpop.f32.mrb[0].mxu0
        %v2212 = vadd.f32 0.0, %v2211
        %v2213 = vpop.f32.mrb[0].mxu0
        %v2214 = vpop.f32.mrb[0].mxu0
        %v2215 = vadd.f32 0.0, %v2214
        %v2216 = vpop.f32.mrb[0].mxu0
        %2217 = vdwg.mxu0
        %2219 = vrot.lane.b32.xlu0 %v1871, 112
        %v2220 = vpop.permute.xlu0 %2219
        %v2223 = vsel %vm808, %v2171, 0
        %2225 = vmatprep.subr.bf16.mxu0 0
        %2226 = vmatpush1.bf16.msra.mxu0 %v2220
        %2227 = vmatprep.subr.bf16.mxu0 0
        %2228 = vmatpush1.bf16.msra.mxu0 0
        %2229 = vmatprep.subr.bf16.mxu0 0
        %2230 = vmatpush1.bf16.msra.mxu0 0
        %2231 = vmatprep.subr.bf16.mxu0 0
        %2232 = vmatpush1.bf16.msra.mxu0 0
        %2233 = vmatprep.subr.bf16.mxu0 0
        %2234 = vmatpush1.bf16.msra.mxu0 0
        %2235 = vmatprep.subr.bf16.mxu0 0
        %2236 = vmatpush1.bf16.msra.mxu0 0
        %2237 = vmatprep.subr.bf16.mxu0 0
        %2238 = vmatpush1.bf16.msra.mxu0 0
        %2239 = vmatprep.subr.bf16.mxu0 0
        %2240 = vmatpush1.bf16.msra.mxu0 0
        %2241 = vmatprep.subr.bf16.mxu0 0
        %2242 = vmatpush1.bf16.msra.mxu0 0
        %2243 = vmatprep.subr.bf16.mxu0 0
        %2244 = vmatpush1.bf16.msra.mxu0 0
        %2245 = vmatprep.subr.bf16.mxu0 0
        %2246 = vmatpush1.bf16.msra.mxu0 0
        %2247 = vmatprep.subr.bf16.mxu0 0
        %2248 = vmatpush1.bf16.msra.mxu0 0
        %2249 = vmatprep.subr.bf16.mxu0 0
        %2250 = vmatpush1.bf16.msra.mxu0 0
        %2251 = vmatprep.subr.bf16.mxu0 0
        %2252 = vmatpush1.bf16.msra.mxu0 0
        %2253 = vmatprep.subr.bf16.mxu0 0
        %2254 = vmatpush1.bf16.msra.mxu0 0
        %2255 = vmatprep.subr.bf16.mxu0 0
        %2256 = vmatpush1.bf16.msra.mxu0 0
        %2257 = vmatprep.mubr.bf16.mxu0 0
        %2258 = vmatmul.mubr.bf16.gmra.mrb[0].mxu0 %v2223
        %v2259 = vpop.f32.mrb[0].mxu0
        %v2260 = vadd.f32 0.0, %v2259
        %v2261 = vpop.f32.mrb[0].mxu0
        %v2262 = vpop.f32.mrb[0].mxu0
        %v2263 = vadd.f32 0.0, %v2262
        %v2264 = vpop.f32.mrb[0].mxu0
        %2265 = vdwg.mxu0
        %2266 = vrot.lane.b32.xlu0 %v1871, 96
        %v2267 = vpop.permute.xlu0 %2266
        %v2270 = vsel %vm808, %v2172, 0
        %2272 = vmatprep.subr.bf16.mxu0 0
        %2273 = vmatpush1.bf16.msra.mxu0 %v2267
        %2274 = vmatprep.subr.bf16.mxu0 0
        %2275 = vmatpush1.bf16.msra.mxu0 0
        %2276 = vmatprep.subr.bf16.mxu0 0
        %2277 = vmatpush1.bf16.msra.mxu0 0
        %2278 = vmatprep.subr.bf16.mxu0 0
        %2279 = vmatpush1.bf16.msra.mxu0 0
        %2280 = vmatprep.subr.bf16.mxu0 0
        %2281 = vmatpush1.bf16.msra.mxu0 0
        %2282 = vmatprep.subr.bf16.mxu0 0
        %2283 = vmatpush1.bf16.msra.mxu0 0
        %2284 = vmatprep.subr.bf16.mxu0 0
        %2285 = vmatpush1.bf16.msra.mxu0 0
        %2286 = vmatprep.subr.bf16.mxu0 0
        %2287 = vmatpush1.bf16.msra.mxu0 0
        %2288 = vmatprep.subr.bf16.mxu0 0
        %2289 = vmatpush1.bf16.msra.mxu0 0
        %2290 = vmatprep.subr.bf16.mxu0 0
        %2291 = vmatpush1.bf16.msra.mxu0 0
        %2292 = vmatprep.subr.bf16.mxu0 0
        %2293 = vmatpush1.bf16.msra.mxu0 0
        %2294 = vmatprep.subr.bf16.mxu0 0
        %2295 = vmatpush1.bf16.msra.mxu0 0
        %2296 = vmatprep.subr.bf16.mxu0 0
        %2297 = vmatpush1.bf16.msra.mxu0 0
        %2298 = vmatprep.subr.bf16.mxu0 0
        %2299 = vmatpush1.bf16.msra.mxu0 0
        %2300 = vmatprep.subr.bf16.mxu0 0
        %2301 = vmatpush1.bf16.msra.mxu0 0
        %2302 = vmatprep.subr.bf16.mxu0 0
        %2303 = vmatpush1.bf16.msra.mxu0 0
        %2304 = vmatprep.mubr.bf16.mxu0 0
        %2305 = vmatmul.mubr.bf16.gmra.mrb[0].mxu0 %v2270
        %v2306 = vpop.f32.mrb[0].mxu0
        %v2307 = vadd.f32 0.0, %v2306
        %v2308 = vpop.f32.mrb[0].mxu0
        %v2309 = vpop.f32.mrb[0].mxu0
        %v2310 = vadd.f32 0.0, %v2309
        %v2311 = vpop.f32.mrb[0].mxu0
        %2312 = vdwg.mxu0
        %2313 = vrot.lane.b32.xlu0 %v1871, 80
        %v2314 = vpop.permute.xlu0 %2313
        %v2317 = vsel %vm808, %v2173, 0
        %2319 = vmatprep.subr.bf16.mxu0 0
        %2320 = vmatpush1.bf16.msra.mxu0 %v2314
        %2321 = vmatprep.subr.bf16.mxu0 0
        %2322 = vmatpush1.bf16.msra.mxu0 0
        %2323 = vmatprep.subr.bf16.mxu0 0
        %2324 = vmatpush1.bf16.msra.mxu0 0
        %2325 = vmatprep.subr.bf16.mxu0 0
        %2326 = vmatpush1.bf16.msra.mxu0 0
        %2327 = vmatprep.subr.bf16.mxu0 0
        %2328 = vmatpush1.bf16.msra.mxu0 0
        %2329 = vmatprep.subr.bf16.mxu0 0
        %2330 = vmatpush1.bf16.msra.mxu0 0
        %2331 = vmatprep.subr.bf16.mxu0 0
        %2332 = vmatpush1.bf16.msra.mxu0 0
        %2333 = vmatprep.subr.bf16.mxu0 0
        %2334 = vmatpush1.bf16.msra.mxu0 0
        %2335 = vmatprep.subr.bf16.mxu0 0
        %2336 = vmatpush1.bf16.msra.mxu0 0
        %2337 = vmatprep.subr.bf16.mxu0 0
        %2338 = vmatpush1.bf16.msra.mxu0 0
        %2339 = vmatprep.subr.bf16.mxu0 0
        %2340 = vmatpush1.bf16.msra.mxu0 0
        %2341 = vmatprep.subr.bf16.mxu0 0
        %2342 = vmatpush1.bf16.msra.mxu0 0
        %2343 = vmatprep.subr.bf16.mxu0 0
        %2344 = vmatpush1.bf16.msra.mxu0 0
        %2345 = vmatprep.subr.bf16.mxu0 0
        %2346 = vmatpush1.bf16.msra.mxu0 0
        %2347 = vmatprep.subr.bf16.mxu0 0
        %2348 = vmatpush1.bf16.msra.mxu0 0
        %2349 = vmatprep.subr.bf16.mxu0 0
        %2350 = vmatpush1.bf16.msra.mxu0 0
        %2351 = vmatprep.mubr.bf16.mxu0 0
        %2352 = vmatmul.mubr.bf16.gmra.mrb[0].mxu0 %v2317
        %v2353 = vpop.f32.mrb[0].mxu0
        %v2354 = vadd.f32 0.0, %v2353
        %v2355 = vpop.f32.mrb[0].mxu0
        %v2356 = vpop.f32.mrb[0].mxu0
        %v2357 = vadd.f32 0.0, %v2356
        %v2358 = vpop.f32.mrb[0].mxu0
        %2359 = vdwg.mxu0
        %2362 = vrot.lane.b32.xlu0 %v2260, 16
        %v2363 = vpop.permute.xlu0 %2362
        %2364 = vrot.lane.b32.xlu0 %v2263, 16
        %v2365 = vpop.permute.xlu0 %2364
        %2370 = vrot.lane.b32.xlu0 %v2307, 32
        %v2371 = vpop.permute.xlu0 %2370
        %2372 = vrot.lane.b32.xlu0 %v2310, 32
        %v2373 = vpop.permute.xlu0 %2372
        %2378 = vrot.lane.b32.xlu0 %v2354, 48
        %v2379 = vpop.permute.xlu0 %2378
        %2380 = vrot.lane.b32.xlu0 %v2357, 48
        %v2381 = vpop.permute.xlu0 %2380
        %v2384 = vsel %vm808, %v2212, %v2363
        %v2385 = vsel %vm808, %v2215, %v2365
        %v2386 = vsel %vm512, %v2384, %v2371
        %v2387 = vsel %vm512, %v2385, %v2373
        %v2388 = vsel %vm1325, %v2386, %v2379
        %v2389 = vsel %vm1325, %v2387, %v2381
        %v2390 = vpack.c.bf16 %v2389, %v2388
        %s2391 = scalar_lea.vmem [#allocation12], 32
        %v2392 = vld [vmem:[%s2391] sm:$0xf]
        %v2393 = vld [vmem:[%s2391 + $0x4] sm:$0xf]
        %v2394 = vld [vmem:[%s2391 + $0x8] sm:$0xf]
        %v2395 = vld [vmem:[%s2391 + $0xc] sm:$0xf]
        %v2396 = vld [vmem:[%s2391 + $0x10] sm:$0xf]
        %v2397 = vld [vmem:[%s2391 + $0x14] sm:$0xf]
        %v2398 = vld [vmem:[%s2391 + $0x18] sm:$0xf]
        %v2399 = vld [vmem:[%s2391 + $0x1c] sm:$0xf]
        %v2408 = vunpack.c.l.b16 %v2392
        %v2409 = vunpack.c.l.b16 %v2393
        %v2410 = vunpack.c.l.b16 %v2394
        %v2411 = vunpack.c.l.b16 %v2395
        %v2412 = vunpack.c.l.b16 %v2396
        %v2413 = vunpack.c.l.b16 %v2397
        %v2414 = vunpack.c.l.b16 %v2398
        %v2415 = vunpack.c.l.b16 %v2399
        %v2416 = vpack.c.b16 %v2409, %v2408
        %v2417 = vpack.c.b16 %v2411, %v2410
        %v2418 = vpack.c.b16 %v2413, %v2412
        %v2419 = vpack.c.b16 %v2415, %v2414
        %v2425 = vsel %vm579, %v2390, 0
        %2427 = vmatprep.subr.bf16.mxu0 0
        %2428 = vmatpush1.bf16.msra.mxu0 %v2416
        %2429 = vmatprep.subr.bf16.mxu0 0
        %2430 = vmatpush1.bf16.msra.mxu0 %v2417
        %2431 = vmatprep.subr.bf16.mxu0 0
        %2432 = vmatpush1.bf16.msra.mxu0 %v2418
        %2433 = vmatprep.subr.bf16.mxu0 0
        %2434 = vmatpush1.bf16.msra.mxu0 %v2419
        %2435 = vmatprep.subr.bf16.mxu0 0
        %2436 = vmatpush1.bf16.msra.mxu0 0
        %2437 = vmatprep.subr.bf16.mxu0 0
        %2438 = vmatpush1.bf16.msra.mxu0 0
        %2439 = vmatprep.subr.bf16.mxu0 0
        %2440 = vmatpush1.bf16.msra.mxu0 0
        %2441 = vmatprep.subr.bf16.mxu0 0
        %2442 = vmatpush1.bf16.msra.mxu0 0
        %2443 = vmatprep.subr.bf16.mxu0 0
        %2444 = vmatpush1.bf16.msra.mxu0 0
        %2445 = vmatprep.subr.bf16.mxu0 0
        %2446 = vmatpush1.bf16.msra.mxu0 0
        %2447 = vmatprep.subr.bf16.mxu0 0
        %2448 = vmatpush1.bf16.msra.mxu0 0
        %2449 = vmatprep.subr.bf16.mxu0 0
        %2450 = vmatpush1.bf16.msra.mxu0 0
        %2451 = vmatprep.subr.bf16.mxu0 0
        %2452 = vmatpush1.bf16.msra.mxu0 0
        %2453 = vmatprep.subr.bf16.mxu0 0
        %2454 = vmatpush1.bf16.msra.mxu0 0
        %2455 = vmatprep.subr.bf16.mxu0 0
        %2456 = vmatpush1.bf16.msra.mxu0 0
        %2457 = vmatprep.subr.bf16.mxu0 0
        %2458 = vmatpush1.bf16.msra.mxu0 0
        %2459 = vmatprep.mubr.bf16.mxu0 0
        %2460 = vmatmul.mubr.bf16.gmra.mrb[0].mxu0 %v2425
        %v2461 = vpop.f32.mrb[0].mxu0
        %v2462 = vadd.f32 0.0, %v2461
        %v2463 = vpop.f32.mrb[0].mxu0
        %v2464 = vpop.f32.mrb[0].mxu0
        %v2465 = vadd.f32 0.0, %v2464
        %v2466 = vpop.f32.mrb[0].mxu0
        %2467 = vdwg.mxu0
        %v2468 = vadd.f32 %v1646, %v2462
        %v2469 = vadd.f32 %v1647, %v2465
        %v2470 = vmul.f32 %v2468, %v2468
        %v2471 = vmul.f32 %v2469, %v2469
        %v2472 = vsel %vm579, %v2470, 0.0
        %2473 = vadd.xlane.f32.xlu0 %v2472
        %v2474 = vpop.xlane.xlu0 %2473
        %v2475 = vsel %vm579, %v2471, 0.0
        %2476 = vadd.xlane.f32.xlu0 %v2475
        %v2477 = vpop.xlane.xlu0 %2476
        %v2478 = vmul.f32 %v2474, %v586
        %v2479 = vmul.f32 %v2477, %v586
        %v2480 = vadd.f32 %v2478, 1e-06
        %v2481 = vadd.f32 %v2479, 1e-06
        %v2482 = vrsqrt.pop %v2480
        %v2483 = vrsqrt.pop %v2481
        %v2484 = vmul.f32 %v2468, %v2482
        %v2485 = vmul.f32 %v2469, %v2483
        %v2486 = vlaneseq
        %v2487 = vshrl.u32 %v2486, 7
        %v2488 = vsub.s32 1, %v2487
        %v2489 = vrot.slane %v1649, %v2488
        %v2490 = vmul.f32 %v2484, %v2489
        %v2491 = vmul.f32 %v2485, %v2489
        %v2492 = vpack.c.bf16 %v2491, %v2490
        %s2493 = scalar_lea.vmem [#allocation13], 64
        %v2494 = vld [vmem:[%s2493] sm:$0xff]
        %v2495 = vld [vmem:[%s2493 + $0x8] sm:$0xff]
        %v2496 = vld [vmem:[%s2493 + $0x10] sm:$0xff]
        %v2497 = vld [vmem:[%s2493 + $0x18] sm:$0xff]
        %v2498 = vld [vmem:[%s2493 + $0x20] sm:$0xff]
        %v2499 = vld [vmem:[%s2493 + $0x28] sm:$0xff]
        %v2500 = vld [vmem:[%s2493 + $0x30] sm:$0xff]
        %v2501 = vld [vmem:[%s2493 + $0x38] sm:$0xff]
        %v2510 = vunpack.c.l.b16 %v2494
        %v2511 = vunpack.c.h.b16 %v2494
        %v2512 = vunpack.c.l.b16 %v2495
        %v2513 = vunpack.c.h.b16 %v2495
        %v2514 = vunpack.c.l.b16 %v2496
        %v2515 = vunpack.c.h.b16 %v2496
        %v2516 = vunpack.c.l.b16 %v2497
        %v2517 = vunpack.c.h.b16 %v2497
        %v2518 = vunpack.c.l.b16 %v2498
        %v2519 = vunpack.c.h.b16 %v2498
        %v2520 = vunpack.c.l.b16 %v2499
        %v2521 = vunpack.c.h.b16 %v2499
        %v2522 = vunpack.c.l.b16 %v2500
        %v2523 = vunpack.c.h.b16 %v2500
        %v2524 = vunpack.c.l.b16 %v2501
        %v2525 = vunpack.c.h.b16 %v2501
        %v2526 = vpack.c.b16 %v2512, %v2510
        %v2527 = vpack.c.b16 %v2513, %v2511
        %v2528 = vpack.c.b16 %v2516, %v2514
        %v2529 = vpack.c.b16 %v2517, %v2515
        %v2530 = vpack.c.b16 %v2520, %v2518
        %v2531 = vpack.c.b16 %v2521, %v2519
        %v2532 = vpack.c.b16 %v2524, %v2522
        %v2533 = vpack.c.b16 %v2525, %v2523
        %v2543 = vsel %vm579, %v2492, 0
        %2545 = vmatprep.subr.bf16.mxu0 %v2527
        %2546 = vmatpush1.bf16.msra.mxu0 %v2526
        %2547 = vmatprep.subr.bf16.mxu0 %v2529
        %2548 = vmatpush1.bf16.msra.mxu0 %v2528
        %2549 = vmatprep.subr.bf16.mxu0 %v2531
        %2550 = vmatpush1.bf16.msra.mxu0 %v2530
        %2551 = vmatprep.subr.bf16.mxu0 %v2533
        %2552 = vmatpush1.bf16.msra.mxu0 %v2532
        %2553 = vmatprep.subr.bf16.mxu0 0
        %2554 = vmatpush1.bf16.msra.mxu0 0
        %2555 = vmatprep.subr.bf16.mxu0 0
        %2556 = vmatpush1.bf16.msra.mxu0 0
        %2557 = vmatprep.subr.bf16.mxu0 0
        %2558 = vmatpush1.bf16.msra.mxu0 0
        %2559 = vmatprep.subr.bf16.mxu0 0
        %2560 = vmatpush1.bf16.msra.mxu0 0
        %2561 = vmatprep.subr.bf16.mxu0 0
        %2562 = vmatpush1.bf16.msra.mxu0 0
        %2563 = vmatprep.subr.bf16.mxu0 0
        %2564 = vmatpush1.bf16.msra.mxu0 0
        %2565 = vmatprep.subr.bf16.mxu0 0
        %2566 = vmatpush1.bf16.msra.mxu0 0
        %2567 = vmatprep.subr.bf16.mxu0 0
        %2568 = vmatpush1.bf16.msra.mxu0 0
        %2569 = vmatprep.subr.bf16.mxu0 0
        %2570 = vmatpush1.bf16.msra.mxu0 0
        %2571 = vmatprep.subr.bf16.mxu0 0
        %2572 = vmatpush1.bf16.msra.mxu0 0
        %2573 = vmatprep.subr.bf16.mxu0 0
        %2574 = vmatpush1.bf16.msra.mxu0 0
        %2575 = vmatprep.subr.bf16.mxu0 0
        %2576 = vmatpush1.bf16.msra.mxu0 0
        %2577 = vmatprep.mubr.bf16.mxu0 0
        %2578 = vmatmul.mubr.bf16.gmra.mrb[0].mxu0 %v2543
        %v2579 = vpop.f32.mrb[0].mxu0
        %v2580 = vadd.f32 0.0, %v2579
        %v2581 = vpop.f32.mrb[0].mxu0
        %v2582 = vadd.f32 0.0, %v2581
        %v2583 = vpop.f32.mrb[0].mxu0
        %v2584 = vadd.f32 0.0, %v2583
        %v2585 = vpop.f32.mrb[0].mxu0
        %v2586 = vadd.f32 0.0, %v2585
        %2587 = vdwg.mxu0
        %v2588 = vxor.u32 %v2580, 2147483648
        %v2589 = vxor.u32 %v2584, 2147483648
        %v2590 = vmul.f32 %v2588, 1.442695
        %v2591 = vpow.pop %v2590
        %v2592 = vmul.f32 %v2589, 1.442695
        %v2593 = vpow.pop %v2592
        %v2594 = vadd.f32 %v2591, 1.0
        %v2595 = vadd.f32 %v2593, 1.0
        %v2596 = vrcp.pop %v2594
        %v2597 = vmul.f32 1.0, %v2596
        %v2598 = vrcp.pop %v2595
        %v2599 = vmul.f32 1.0, %v2598
        %v2600 = vmul.f32 %v2580, %v2597
        %v2601 = vmul.f32 %v2584, %v2599
        %v2602 = vmul.f32 %v2600, %v2582
        %v2603 = vmul.f32 %v2601, %v2586
        %v2604 = vpack.c.bf16 %v2603, %v2602
        %s2605 = scalar_lea.vmem %s9, 64
        %v2606 = vld [vmem:[%s2605] sm:$0xf]
        %v2607 = vld [vmem:[%s2605 + $0x4] sm:$0xf]
        %v2608 = vld [vmem:[%s2605 + $0x8] sm:$0xf]
        %v2609 = vld [vmem:[%s2605 + $0xc] sm:$0xf]
        %v2610 = vld [vmem:[%s2605 + $0x10] sm:$0xf]
        %v2611 = vld [vmem:[%s2605 + $0x14] sm:$0xf]
        %v2612 = vld [vmem:[%s2605 + $0x18] sm:$0xf]
        %v2613 = vld [vmem:[%s2605 + $0x1c] sm:$0xf]
        %v2614 = vld [vmem:[%s2605 + $0x20] sm:$0xf]
        %v2615 = vld [vmem:[%s2605 + $0x24] sm:$0xf]
        %v2616 = vld [vmem:[%s2605 + $0x28] sm:$0xf]
        %v2617 = vld [vmem:[%s2605 + $0x2c] sm:$0xf]
        %v2618 = vld [vmem:[%s2605 + $0x30] sm:$0xf]
        %v2619 = vld [vmem:[%s2605 + $0x34] sm:$0xf]
        %v2620 = vld [vmem:[%s2605 + $0x38] sm:$0xf]
        %v2621 = vld [vmem:[%s2605 + $0x3c] sm:$0xf]
        %v2638 = vunpack.c.l.b16 %v2606
        %v2639 = vunpack.c.l.b16 %v2607
        %v2640 = vunpack.c.l.b16 %v2608
        %v2641 = vunpack.c.l.b16 %v2609
        %v2642 = vunpack.c.l.b16 %v2610
        %v2643 = vunpack.c.l.b16 %v2611
        %v2644 = vunpack.c.l.b16 %v2612
        %v2645 = vunpack.c.l.b16 %v2613
        %v2646 = vunpack.c.l.b16 %v2614
        %v2647 = vunpack.c.l.b16 %v2615
        %v2648 = vunpack.c.l.b16 %v2616
        %v2649 = vunpack.c.l.b16 %v2617
        %v2650 = vunpack.c.l.b16 %v2618
        %v2651 = vunpack.c.l.b16 %v2619
        %v2652 = vunpack.c.l.b16 %v2620
        %v2653 = vunpack.c.l.b16 %v2621
        %v2654 = vpack.c.b16 %v2639, %v2638
        %v2655 = vpack.c.b16 %v2641, %v2640
        %v2656 = vpack.c.b16 %v2643, %v2642
        %v2657 = vpack.c.b16 %v2645, %v2644
        %v2658 = vpack.c.b16 %v2647, %v2646
        %v2659 = vpack.c.b16 %v2649, %v2648
        %v2660 = vpack.c.b16 %v2651, %v2650
        %v2661 = vpack.c.b16 %v2653, %v2652
        %2670 = vmatprep.subr.bf16.mxu0 0
        %2671 = vmatpush1.bf16.msra.mxu0 %v2654
        %2672 = vmatprep.subr.bf16.mxu0 0
        %2673 = vmatpush1.bf16.msra.mxu0 %v2655
        %2674 = vmatprep.subr.bf16.mxu0 0
        %2675 = vmatpush1.bf16.msra.mxu0 %v2656
        %2676 = vmatprep.subr.bf16.mxu0 0
        %2677 = vmatpush1.bf16.msra.mxu0 %v2657
        %2678 = vmatprep.subr.bf16.mxu0 0
        %2679 = vmatpush1.bf16.msra.mxu0 %v2658
        %2680 = vmatprep.subr.bf16.mxu0 0
        %2681 = vmatpush1.bf16.msra.mxu0 %v2659
        %2682 = vmatprep.subr.bf16.mxu0 0
        %2683 = vmatpush1.bf16.msra.mxu0 %v2660
        %2684 = vmatprep.subr.bf16.mxu0 0
        %2685 = vmatpush1.bf16.msra.mxu0 %v2661
        %2686 = vmatprep.subr.bf16.mxu0 0
        %2687 = vmatpush1.bf16.msra.mxu0 0
        %2688 = vmatprep.subr.bf16.mxu0 0
        %2689 = vmatpush1.bf16.msra.mxu0 0
        %2690 = vmatprep.subr.bf16.mxu0 0
        %2691 = vmatpush1.bf16.msra.mxu0 0
        %2692 = vmatprep.subr.bf16.mxu0 0
        %2693 = vmatpush1.bf16.msra.mxu0 0
        %2694 = vmatprep.subr.bf16.mxu0 0
        %2695 = vmatpush1.bf16.msra.mxu0 0
        %2696 = vmatprep.subr.bf16.mxu0 0
        %2697 = vmatpush1.bf16.msra.mxu0 0
        %2698 = vmatprep.subr.bf16.mxu0 0
        %2699 = vmatpush1.bf16.msra.mxu0 0
        %2700 = vmatprep.subr.bf16.mxu0 0
        %2701 = vmatpush1.bf16.msra.mxu0 0
        %2702 = vmatprep.mubr.bf16.mxu0 0
        %2703 = vmatmul.mubr.bf16.gmra.mrb[0].mxu0 %v2604
        %v2704 = vpop.f32.mrb[0].mxu0
        %v2705 = vadd.f32 0.0, %v2704
        %v2706 = vpop.f32.mrb[0].mxu0
        %v2707 = vpop.f32.mrb[0].mxu0
        %v2708 = vadd.f32 0.0, %v2707
        %v2709 = vpop.f32.mrb[0].mxu0
        %2710 = vdwg.mxu0
        %v2711 = vadd.f32 %v2468, %v2705
        %v2712 = vadd.f32 %v2469, %v2708
        %v2713 = vpack.c.bf16 %v2712, %v2711
        %v2714 = vld [vmem:[%s10] sm:$0xf]
        %v2715 = vld [vmem:[%s10 + $0x4] sm:$0xf]
        %v2716 = vld [vmem:[%s10 + $0x8] sm:$0xf]
        %v2717 = vld [vmem:[%s10 + $0xc] sm:$0xf]
        %v2718 = vld [vmem:[%s10 + $0x10] sm:$0xf]
        %v2719 = vld [vmem:[%s10 + $0x14] sm:$0xf]
        %v2720 = vld [vmem:[%s10 + $0x18] sm:$0xf]
        %v2721 = vld [vmem:[%s10 + $0x1c] sm:$0xf]
        %v2722 = vld [vmem:[%s11] sm:$0x1]
        %v2724 = vlaneseq
        %v2725 = vshrl.u32 %v2724, 7
        %v2726 = vsub.s32 0, %v2725
        %v2727 = vrot.slane %v2722, %v2726
        %v2737 = vunpack.c.l.b16 %v2714
        %v2738 = vunpack.c.l.b16 %v2715
        %v2739 = vunpack.c.l.b16 %v2716
        %v2740 = vunpack.c.l.b16 %v2717
        %v2741 = vunpack.c.l.b16 %v2718
        %v2742 = vunpack.c.l.b16 %v2719
        %v2743 = vunpack.c.l.b16 %v2720
        %v2744 = vunpack.c.l.b16 %v2721
        %v2745 = vpack.c.b16 %v2738, %v2737
        %v2746 = vpack.c.b16 %v2740, %v2739
        %v2747 = vpack.c.b16 %v2742, %v2741
        %v2748 = vpack.c.b16 %v2744, %v2743
        %v2754 = vsel %vm579, %v2713, 0
        %2756 = vmatprep.subr.bf16.mxu0 0
        %2757 = vmatpush1.bf16.msra.mxu0 %v2745
        %2758 = vmatprep.subr.bf16.mxu0 0
        %2759 = vmatpush1.bf16.msra.mxu0 %v2746
        %2760 = vmatprep.subr.bf16.mxu0 0
        %2761 = vmatpush1.bf16.msra.mxu0 %v2747
        %2762 = vmatprep.subr.bf16.mxu0 0
        %2763 = vmatpush1.bf16.msra.mxu0 %v2748
        %2764 = vmatprep.subr.bf16.mxu0 0
        %2765 = vmatpush1.bf16.msra.mxu0 0
        %2766 = vmatprep.subr.bf16.mxu0 0
        %2767 = vmatpush1.bf16.msra.mxu0 0
        %2768 = vmatprep.subr.bf16.mxu0 0
        %2769 = vmatpush1.bf16.msra.mxu0 0
        %2770 = vmatprep.subr.bf16.mxu0 0
        %2771 = vmatpush1.bf16.msra.mxu0 0
        %2772 = vmatprep.subr.bf16.mxu0 0
        %2773 = vmatpush1.bf16.msra.mxu0 0
        %2774 = vmatprep.subr.bf16.mxu0 0
        %2775 = vmatpush1.bf16.msra.mxu0 0
        %2776 = vmatprep.subr.bf16.mxu0 0
        %2777 = vmatpush1.bf16.msra.mxu0 0
        %2778 = vmatprep.subr.bf16.mxu0 0
        %2779 = vmatpush1.bf16.msra.mxu0 0
        %2780 = vmatprep.subr.bf16.mxu0 0
        %2781 = vmatpush1.bf16.msra.mxu0 0
        %2782 = vmatprep.subr.bf16.mxu0 0
        %2783 = vmatpush1.bf16.msra.mxu0 0
        %2784 = vmatprep.subr.bf16.mxu0 0
        %2785 = vmatpush1.bf16.msra.mxu0 0
        %2786 = vmatprep.subr.bf16.mxu0 0
        %2787 = vmatpush1.bf16.msra.mxu0 0
        %2788 = vmatprep.mubr.bf16.mxu0 0
        %2789 = vmatmul.mubr.bf16.gmra.mrb[0].mxu0 %v2754
        %v2790 = vpop.f32.mrb[0].mxu0
        %v2791 = vadd.f32 %v2727, %v2790
        %v2792 = vpop.f32.mrb[0].mxu0
        %v2793 = vpop.f32.mrb[0].mxu0
        %v2794 = vadd.f32 %v2727, %v2793
        %v2795 = vpop.f32.mrb[0].mxu0
        %2796 = vdwg.mxu0
        %2797 = vmax.xlane.f32.xlu0 %v2791
        %v2798 = vpop.xlane.xlu0 %2797
        %2799 = vmax.xlane.f32.xlu0 %v2794
        %v2800 = vpop.xlane.xlu0 %2799
        %v2801 = vsub.f32 %v2791, %v2798
        %v2802 = vsub.f32 %v2794, %v2800
        %v2803 = vmul.f32 %v2801, 1.442695
        %v2804 = vpow.pop %v2803
        %v2805 = vmul.f32 %v2802, 1.442695
        %v2806 = vpow.pop %v2805
        %2807 = vadd.xlane.f32.xlu0 %v2804
        %v2808 = vpop.xlane.xlu0 %2807
        %2809 = vadd.xlane.f32.xlu0 %v2806
        %v2810 = vpop.xlane.xlu0 %2809
        %v2811 = vlog2.pop %v2808
        %v2812 = vmul.f32 %v2811, 0.6931472
        %v2813 = vlog2.pop %v2810
        %v2814 = vmul.f32 %v2813, 0.6931472
        %v2815 = vadd.f32 %v2812, %v2798
        %v2816 = vadd.f32 %v2814, %v2800
        %v2817 = vsub.f32 %v2791, %v2815
        %v2818 = vsub.f32 %v2794, %v2816
        %2819 = vst [vmem:[%s484] sm:$0xff] %v2817
        %2820 = vst [vmem:[%s484 + $0x8] sm:$0xff] %v2818
        %s2821 = sand.u32 %s282, 1
        %s2822 = scalar_lea.sflag [#allocation6], %s2821
        %s2823 = sand.u32 %s282, 1
        %s2824 = smul.addr %s2823, 16
        %s2825 = scalar_lea.vmem [#allocation15], %s2824
        // Predicated region
        $region89: #{tpu_custom_call.1} parent=63 // pred_check
          %p2826 = pneg %p292
        $region90: #{tpu_custom_call.1} parent=63 // pred_check_branch
          %2828 = sbr.rel (%p2826) target = $region92
        $region91: #{tpu_custom_call.1} parent=63 // pred_region
          %s2830 = ssub.s32 256, 256
          %2831 = vsyncadd %s2822, %s2830
          %s2832 = smul.addr %s38, 2
          %s2833 = smul.addr %s2832, 128
          %s2834 = scalar_lea.hbm %s12, %s2833
          %s2835 = sshll.u32 %s2825, 4
          %s2836 = int_to_ptr.vmem [resolvable:$true] %s2835
          %2841 = dma.vmem_to_hbm [thread:$0]  %s2836, 256, %s2834, %s2822, 128, 128, 8
        $region92: #{tpu_custom_call.1} parent=63 // pred_fallthru
          _
      $region64: #{tpu_custom_call.1} parent=5 // pred_fallthru
        _
      %p2842 = scmp.le.s32.totalorder 2, %s33
      // Predicated region
      $region93: #{tpu_custom_call.1} parent=5 // pred_check
        %p2843 = pneg %p2842
      $region94: #{tpu_custom_call.1} parent=5 // pred_check_branch
        %2845 = sbr.rel (%p2843) target = $region96
      $region95: #{tpu_custom_call.1} parent=5 // pred_region
        %s2846 = ssub.s32 %s33, 2
        // Predicated region
        $region97: #{tpu_custom_call.1} parent=95 // pred_check
          %p2847 = pneg %p298
        $region98: #{tpu_custom_call.1} parent=95 // pred_check_branch
          %2849 = sbr.rel (%p2847) target = $region100
        $region99: #{tpu_custom_call.1} parent=95 // pred_region
          %s2850 = sand.u32 %s283, 1
          %s2851 = scalar_lea.sflag [#allocation6], %s2850
          %s2852 = sand.u32 %s283, 1
          %s2853 = smul.addr %s2852, 16
          %s2854 = scalar_lea.vmem [#allocation15], %s2853
          %2855 = dma.done %s2851, 256
        $region100: #{tpu_custom_call.1} parent=95 // pred_fallthru
          _
      $region96: #{tpu_custom_call.1} parent=5 // pred_fallthru
        _
    $region6: #{tpu_custom_call.1} parent=1 // loop_footer
      %s37 = sadd.s32 1, %s33
    $region7: #{tpu_custom_call.1} parent=1 // loop_footer_branch
      %32 = sbr.rel target = $region3
    $region8: #{tpu_custom_call.1} parent=1 // loop_exit
      _
    %2856 = vsyncpa [#allocation5], 1
    %s2857 = scalar_lea.sflag [#allocation5], 1
    %2858 = vsyncpa %s2857, 1
    %2859 = vsyncpa [#allocation8], 1
    %2860 = vsyncpa [#allocation11], 1
    %2861 = vsyncpa [#allocation14], 1
    %2862 = vsyncpa [#allocation6], 1
    %s2863 = scalar_lea.sflag [#allocation6], 1
    %2864 = vsyncpa %s2863, 1

</llo_original>
